<compile_context>
chip_gen: v7x
topology: tpu7x:2x2x1
jax: 0.10.0
libtpu: 0.0.40
codegen_flags: <defaults>
</compile_context>

<pallas_src>
import jax
import jax.numpy as jnp
from jax import lax
from jax.experimental import pallas as pl
from jax.experimental.pallas import tpu as pltpu


def _round_up(x, m):
    return -(-x // m) * m


_VMEM = pl.BlockSpec(memory_space=pltpu.MemorySpace.VMEM)


# ----------------------------- Pallas kernels -----------------------------

def _conv_pool_relu_kernel(x_ref, w_ref, b_ref, o_ref):
    """Fused conv-GEMM + 2x2 maxpool + bias + ReLU for one pooled-column block.

    x_ref: [4, K, bp] bf16  (4 = pool-window positions, bp pooled columns)
    w_ref: [OC, K]    bf16
    b_ref: [OC, 1]    f32
    o_ref: [OC, bp]   bf16  (lane-dense)
    """
    w = w_ref[...]
    # 4 independent MXU dots + tree max (no serialized acc->max->dot chain).
    d0 = jnp.dot(w, x_ref[0], preferred_element_type=jnp.float32)
    d1 = jnp.dot(w, x_ref[1], preferred_element_type=jnp.float32)
    d2 = jnp.dot(w, x_ref[2], preferred_element_type=jnp.float32)
    d3 = jnp.dot(w, x_ref[3], preferred_element_type=jnp.float32)
    m = jnp.maximum(jnp.maximum(d0, d1), jnp.maximum(d2, d3))
    # Keep the epilogue in f32 (v5e VPU has no bf16 ALU), cast once at store.
    o_ref[...] = jnp.maximum(m + b_ref[...], 0.0).astype(o_ref.dtype)


def _dueling_head(h_bf16, wh_ref, bh_ref):
    """[value; advantage] as one matmul; returns q^T = [A, N] f32."""
    heads = jnp.dot(wh_ref[...], h_bf16,
                    preferred_element_type=jnp.float32) + bh_ref[...]
    value, adv = heads[0:1], heads[1:]
    return value + adv - jnp.mean(adv, axis=0, keepdims=True)


def _make_tail_kernel(n, p2w):
    """conv2+pool2 + conv3+pool3 + flatten + fc1 + dueling head, fused.

    Requires pool3's output to be 1x1 per sample (post-pool2 spatial in {4,5}).
    n = batch, p2w = post-pool2 width.
    """

    def kernel(p2_ref, w2_ref, b2_ref, w3s_ref, b3_ref, wf_ref, bf_ref,
               wh_ref, bh_ref, o_ref):
        m2 = p2_ref.shape[1] // 4          # pooled conv2 columns, order (pi,pj,n)

        # conv2: one wide dot over the 4 lane-concatenated pool quarters,
        # then tree-max over the quarter groups (pool2), + bias, ReLU.
        d = jnp.dot(w2_ref[...], p2_ref[...],
                    preferred_element_type=jnp.float32)              # [64, 4*m2]
        z2 = jnp.maximum(jnp.maximum(d[:, :m2], d[:, m2:2 * m2]),
                         jnp.maximum(d[:, 2 * m2:3 * m2], d[:, 3 * m2:]))
        z2 = jnp.maximum(z2 + b2_ref[...], 0.0).astype(jnp.bfloat16)  # [64, m2]

        # conv3 (3x3, stride 1) + 2x2 pool -> 1x1: matmul-first against the full
        # post-pool2 map, then shift-and-add the 9 kernel-tap slabs in-register.
        t = jnp.dot(w3s_ref[...], z2,
                    preferred_element_type=jnp.float32)               # [576, m2]
        acc = None
        for ki in range(3):
            for kj in range(3):
                tk = t[(ki * 3 + kj) * 64:(ki * 3 + kj + 1) * 64, :]
                g = jnp.concatenate(
                    [tk[:, ((oi + ki) * p2w + kj) * n:
                         ((oi + ki) * p2w + kj) * n + 2 * n]
                     for oi in range(2)], axis=1)                     # [64, 4n]
                acc = g if acc is None else acc + g
        z3 = jnp.maximum(jnp.maximum(acc[:, :n], acc[:, n:2 * n]),
                         jnp.maximum(acc[:, 2 * n:3 * n], acc[:, 3 * n:]))
        z3 = jnp.maximum(z3 + b3_ref[...], 0.0).astype(jnp.bfloat16)  # [64, n]

        # fc1 + ReLU (transposed GEMM: features on sublanes, batch on lanes).
        h = jnp.dot(wf_ref[...], z3,
                    preferred_element_type=jnp.float32) + bf_ref[...]
        h = jnp.maximum(h, 0.0).astype(jnp.bfloat16)                  # [512, n]

        o_ref[...] = _dueling_head(h, wh_ref, bh_ref)                 # [A, n]

    return kernel


def _fc_dueling_kernel(xt_ref, wf_ref, bf_ref, wh_ref, bh_ref, o_ref):
    """Fallback (non-fused) fc1 + ReLU + dueling head.  xt: [F, N] bf16."""
    h = jnp.dot(wf_ref[...], xt_ref[...],
                preferred_element_type=jnp.float32) + bf_ref[...]
    h = jnp.maximum(h, 0.0).astype(jnp.bfloat16)
    o_ref[...] = _dueling_head(h, wh_ref, bh_ref)


# ------------------------------ Pallas wrappers -----------------------------

def conv_pool_relu(patches, w, b, *, bp_cap=1024):
    """patches: [4, K, M] bf16; w: [OC, K] bf16; b: [OC, 1] f32 -> [OC, M] bf16.

    Ragged grid along pooled columns: no padding, Pallas masks the tail block's
    stores. Garbage from out-of-bounds input columns only ever reaches
    out-of-bounds output columns because GEMM/max/bias/ReLU are column-wise.
    """
    _, K, M = patches.shape
    OC = w.shape[0]
    if M <= 128:
        bp = M                                       # single full-extent block
    else:
        # >= 2 near-equal lane-dense blocks (keeps both v7x cores fed); bp_cap
        # keeps double-buffered inputs inside v5e's 16 MiB / v7x's 32 MiB VMEM.
        bp = min(bp_cap, _round_up(pl.cdiv(M, 2), 128))
    return pl.pallas_call(
        _conv_pool_relu_kernel,
        out_shape=jax.ShapeDtypeStruct((OC, M), jnp.bfloat16),
        grid=(pl.cdiv(M, bp),),
        in_specs=[
            pl.BlockSpec((4, K, bp), lambda i: (0, 0, i)),
            pl.BlockSpec((OC, K), lambda i: (0, 0)),   # resident across grid
            pl.BlockSpec((OC, 1), lambda i: (0, 0)),
        ],
        out_specs=pl.BlockSpec((OC, bp), lambda i: (0, i)),
        compiler_params=pltpu.CompilerParams(
            dimension_semantics=("parallel",)),
    )(patches, w, b)


def tail_fused(p2, kp, *, n, p2w):
    """p2: [512, 4*M2] bf16 (conv2 im2col, quarters on lanes) -> q^T [A, n]."""
    A = kp["wh"].shape[0] - 1
    return pl.pallas_call(
        _make_tail_kernel(n, p2w),
        out_shape=jax.ShapeDtypeStruct((A, n), jnp.float32),
        in_specs=[_VMEM] * 9,
        out_specs=_VMEM,
    )(p2, kp["w2"], kp["b2"], kp["w3s"], kp["b3"],
      kp["wfc1"], kp["bfc1"], kp["wh"], kp["bh"])


def fc_dueling(feat_t, kp):
    """feat_t: [F, N] bf16 (PyTorch flatten order, transposed) -> q^T [A, N]."""
    n = feat_t.shape[1]
    A = kp["wh"].shape[0] - 1
    return pl.pallas_call(
        _fc_dueling_kernel,
        out_shape=jax.ShapeDtypeStruct((A, n), jnp.float32),
        in_specs=[_VMEM] * 5,
        out_specs=_VMEM,
    )(feat_t, kp["wfc1"], kp["bfc1"], kp["wh"], kp["bh"])


# -------------------------------- XLA glue ----------------------------------
# TODO(synk): patch extraction stays as XLA reshape/slice glue (window gathers
# are not a rectangular BlockSpec); conv1's patch tensor therefore still makes
# one HBM round trip — pulling it into the kernel with strided ref reads is the
# remaining win at large batch sizes.

def pool_quarters_s2d(y, k, stride):
    """Space-to-depth im2col for a conv with kernel == 2*stride (conv1, conv2).

    y: [C, N, H, W] -> list of 4 arrays [C, k, k, N, PH, PW] (one per 2x2
    pool-window position, row-major) plus pooled spatial dims (PH, PW).
    Only 4 slices + reshapes; conv outputs the floor-mode pool discards are
    never generated.
    """
    C, n, H, W = y.shape
    ph = ((H - k) // stride + 1) // 2
    pw = ((W - k) // stride + 1) // 2
    out = []
    for di in range(2):
        for dj in range(2):
            blk = y[:, :, stride * di:stride * di + k * ph,
                    stride * dj:stride * dj + k * pw]
            blk = blk.reshape(C, n, ph, k, pw, k).transpose(0, 3, 5, 1, 2, 4)
            out.append(blk)                      # [C, ki, kj, N, PH, PW]
    return out, ph, pw


def im2col_pool_generic(y, kh, kw, stride):
    """Generic pool-grouped im2col (fallback conv3 only): rows (c, ki, kj),
    columns (n, ph, pw), leading axis = pool-window position."""
    C, n, H, W = y.shape
    oh = (H - kh) // stride + 1
    ow = (W - kw) // stride + 1
    ph, pw = oh // 2, ow // 2
    quarters = []
    for di in range(2):
        for dj in range(2):
            cols = []
            for ki in range(kh):
                for kj in range(kw):
                    si = stride * di + ki
                    sj = stride * dj + kj
                    cols.append(
                        y[:, :,
                          si: si + 2 * stride * (ph - 1) + 1: 2 * stride,
                          sj: sj + 2 * stride * (pw - 1) + 1: 2 * stride])
            q = jnp.stack(cols, axis=1)          # [C, kh*kw, N, PH, PW]
            quarters.append(q.reshape(C * kh * kw, n * ph * pw))
    return jnp.stack(quarters, axis=0), ph, pw


def conv_output_sizes(h, w):
    """Replicates DuelingDDQN._get_conv_output for the spatial dims."""
    def conv(s, k, st):
        return (s - k) // st + 1
    h = conv(h, 8, 4) // 2
    w = conv(w, 8, 4) // 2
    h = conv(h, 4, 2) // 2
    w = conv(w, 4, 2) // 2
    h = conv(h, 3, 1) // 2
    w = conv(w, 3, 1) // 2
    return 64 * h * w


# ------------------------------ model forward ------------------------------

def dueling_ddqn_forward(kp, state_u8):
    """state_u8: [N, 3, H, W] uint8 (NCHW). Returns q_values [N, action_dim]."""
    n = state_u8.shape[0]
    # uint8 -> bf16 is exact for 0..255; the /255 scale lives in kp["w1"].
    x = state_u8.astype(jnp.bfloat16).transpose(1, 0, 2, 3)       # [3, N, H, W]

    # ---- conv1 + pool1 + ReLU (gridded lane-dense Pallas GEMM) ----
    q1, ph1, pw1 = pool_quarters_s2d(x, 8, 4)
    p1 = jnp.stack([b.reshape(3 * 64, n * ph1 * pw1) for b in q1], axis=0)
    y1 = conv_pool_relu(p1, kp["w1"], kp["b1"]).reshape(32, n, ph1, pw1)

    # ---- conv2 .. q-values ----
    q2, ph2, pw2 = pool_quarters_s2d(y1, 4, 2)
    if (ph2 - 2) // 2 == 1 and (pw2 - 2) // 2 == 1:
        # pool3 output is 1x1 per sample -> single fused tail kernel.
        # conv2 patch columns ordered (pi, pj, n); quarters concatenated on lanes.
        p2 = jnp.concatenate(
            [b.transpose(0, 1, 2, 4, 5, 3).reshape(32 * 16, ph2 * pw2 * n)
             for b in q2], axis=1)
        return tail_fused(p2, kp, n=n, p2w=pw2).T

    # General image sizes: per-layer kernels (same math, more launches).
    p2 = jnp.stack([b.reshape(32 * 16, n * ph2 * pw2) for b in q2], axis=0)
    y2 = conv_pool_relu(p2, kp["w2"], kp["b2"]).reshape(64, n, ph2, pw2)
    p3, ph3, pw3 = im2col_pool_generic(y2, 3, 3, 1)
    y3 = conv_pool_relu(p3, kp["w3"], kp["b3"]).reshape(64, n, ph3, pw3)
    feat_t = y3.transpose(0, 2, 3, 1).reshape(-1, n)   # PyTorch flatten order
    return fc_dueling(feat_t, kp).T


# ------------------------------ parameters ----------------------------------

def init_params(key, flatten_size, action_dim):
    """PyTorch-layout f32 parameters (conv: OIHW, linear: [out, in])."""
    ks = jax.random.split(key, 12)

    def lin(k, fan_in, shape):
        return jax.random.normal(k, shape, jnp.float32) / jnp.sqrt(
            jnp.float32(fan_in))

    return dict(
        w1=lin(ks[0], 3 * 8 * 8, (32, 3, 8, 8)),
        b1=lin(ks[1], 3 * 8 * 8, (32,)),
        w2=lin(ks[2], 32 * 4 * 4, (64, 32, 4, 4)),
        b2=lin(ks[3], 32 * 4 * 4, (64,)),
        w3=lin(ks[4], 64 * 3 * 3, (64, 64, 3, 3)),
        b3=lin(ks[5], 64 * 3 * 3, (64,)),
        wfc1=lin(ks[6], flatten_size, (512, flatten_size)),
        bfc1=lin(ks[7], flatten_size, (512,)),
        wv=lin(ks[8], 512, (1, 512)),
        bv=lin(ks[9], 512, (1,)),
        wa=lin(ks[10], 512, (action_dim, 512)),
        ba=lin(ks[11], 512, (action_dim,)),
    )


def prepare_kernel_params(p):
    """Host-side prep: bf16 weights, /255 folded into w1, GEMM layouts, and the
    value|advantage head concatenated into a single matmul."""
    bf = jnp.bfloat16
    f32 = jnp.float32
    return dict(
        w1=(p["w1"].reshape(32, -1) / 255.0).astype(bf),            # [32, 192]
        b1=p["b1"].reshape(32, 1).astype(f32),
        w2=p["w2"].reshape(64, -1).astype(bf),                      # [64, 512]
        b2=p["b2"].reshape(64, 1).astype(f32),
        w3=p["w3"].reshape(64, -1).astype(bf),                      # [64, 576]
        w3s=p["w3"].transpose(2, 3, 0, 1).reshape(9 * 64, 64).astype(bf),
        b3=p["b3"].reshape(64, 1).astype(f32),
        wfc1=p["wfc1"].astype(bf),                                  # [512, F]
        bfc1=p["bfc1"].reshape(-1, 1).astype(f32),                  # [512, 1]
        wh=jnp.concatenate([p["wv"], p["wa"]], axis=0).astype(bf),  # [1+A, 512]
        bh=jnp.concatenate([p["bv"], p["ba"]],
                           axis=0).reshape(-1, 1).astype(f32),      # [1+A, 1]
    )


# --------------------------- pure-JAX reference ----------------------------

def reference_forward(params, state_u8):
    """Faithful f32 reference of the PyTorch forward."""
    x = state_u8.astype(jnp.float32) / 255.0

    def conv(x, w, b, stride):
        y = lax.conv_general_dilated(
            x, w, (stride, stride), "VALID",
            dimension_numbers=("NCHW", "OIHW", "NCHW"),
            precision=lax.Precision.HIGHEST)
        return y + b.reshape(1, -1, 1, 1)

    def pool(x):
        return lax.reduce_window(x, -jnp.inf, lax.max,
                                 (1, 1, 2, 2), (1, 1, 2, 2), "VALID")

    x = jax.nn.relu(pool(conv(x, params["w1"], params["b1"], 4)))
    x = jax.nn.relu(pool(conv(x, params["w2"], params["b2"], 2)))
    x = jax.nn.relu(pool(conv(x, params["w3"], params["b3"], 1)))
    x = x.reshape(x.shape[0], -1)
    x = jax.nn.relu(jnp.dot(x, params["wfc1"].T,
                            precision=lax.Precision.HIGHEST) + params["bfc1"])
    value = jnp.dot(x, params["wv"].T,
                    precision=lax.Precision.HIGHEST) + params["bv"]
    adv = jnp.dot(x, params["wa"].T,
                  precision=lax.Precision.HIGHEST) + params["ba"]
    return value + adv - adv.mean(axis=1, keepdims=True)


# ----------------------------------- main -----------------------------------

if __name__ == "__main__":
    # Smallest spatial size that survives the conv/pool stack is ~148; use 160.
    N, C, H, W = 2, 3, 160, 160
    action_dim = 5

    key = jax.random.PRNGKey(0)
    k_state, k_params = jax.random.split(key)

    state = jax.random.randint(k_state, (N, C, H, W), 0, 256,
                               dtype=jnp.int32).astype(jnp.uint8)

    flatten_size = conv_output_sizes(H, W)      # == 64 for 160x160
    params = init_params(k_params, flatten_size, action_dim)
    kparams = prepare_kernel_params(params)

    q = jax.jit(dueling_ddqn_forward)(kparams, state)
    q = jax.block_until_ready(q)

    assert q.shape == (N, action_dim), q.shape
    assert bool(jnp.all(jnp.isfinite(q)))

    # bf16 MXU path vs f32 reference: loosened tolerance.
    q_ref = jax.block_until_ready(reference_forward(params, state))
    max_err = float(jnp.max(jnp.abs(q - q_ref)))
    assert jnp.allclose(q, q_ref, atol=5e-2, rtol=5e-2), max_err

    print("KERNEL_OK")
</pallas_src>

<mosaic_0001>
module attributes {stable_mosaic.version = 11 : i64} {
  func.func @_conv_pool_relu_kernel(%arg0: i32, %arg1: memref<4x192x384xbf16, #tpu.memory_space<vmem>>, %arg2: memref<32x192xbf16, #tpu.memory_space<vmem>>, %arg3: memref<32x1xf32, #tpu.memory_space<vmem>>, %arg4: memref<32x384xbf16, #tpu.memory_space<vmem>>) attributes {dimension_semantics = [#tpu.dimension_semantics<parallel>], iteration_bounds = array<i64: 2>, scalar_prefetch = 0 : i64, scratch_operands = 0 : i64, tpu.core_type = #tpu.core_type<tc>, window_params = [{transform_indices = @transform_0, window_bounds = array<i64: 4, 192, 384>}, {pipeline_mode = #tpu.pipeline_mode<synchronous>, transform_indices = @transform_1, window_bounds = array<i64: 32, 192>}, {pipeline_mode = #tpu.pipeline_mode<synchronous>, transform_indices = @transform_2, window_bounds = array<i64: 32, 1>}, {transform_indices = @transform_3, window_bounds = array<i64: 32, 384>}]} {
    %c0 = arith.constant 0 : index
    %c0_0 = arith.constant 0 : index
    %0 = vector.load %arg2[%c0, %c0_0] : memref<32x192xbf16, #tpu.memory_space<vmem>>, vector<32x192xbf16>
    %c0_1 = arith.constant 0 : index
    %c0_2 = arith.constant 0 : index
    %c0_3 = arith.constant 0 : index
    %1 = vector.load %arg1[%c0_1, %c0_2, %c0_3] : memref<4x192x384xbf16, #tpu.memory_space<vmem>>, vector<1x192x384xbf16>
    %2 = vector.shape_cast %1 : vector<1x192x384xbf16> to vector<192x384xbf16>
    %cst = arith.constant dense<0.000000e+00> : vector<32x384xf32>
    %3 = tpu.matmul %0, %2, %cst {dimension_numbers = #tpu.dot_dimension_numbers<[1], [0], [0], [1], [0, 0, 1, 1], [], []>} : vector<32x192xbf16>, vector<192x384xbf16>, vector<32x384xf32> -> vector<32x384xf32>
    %c1 = arith.constant 1 : index
    %c0_4 = arith.constant 0 : index
    %c0_5 = arith.constant 0 : index
    %4 = vector.load %arg1[%c1, %c0_4, %c0_5] : memref<4x192x384xbf16, #tpu.memory_space<vmem>>, vector<1x192x384xbf16>
    %5 = vector.shape_cast %4 : vector<1x192x384xbf16> to vector<192x384xbf16>
    %cst_6 = arith.constant dense<0.000000e+00> : vector<32x384xf32>
    %6 = tpu.matmul %0, %5, %cst_6 {dimension_numbers = #tpu.dot_dimension_numbers<[1], [0], [0], [1], [0, 0, 1, 1], [], []>} : vector<32x192xbf16>, vector<192x384xbf16>, vector<32x384xf32> -> vector<32x384xf32>
    %c2 = arith.constant 2 : index
    %c0_7 = arith.constant 0 : index
    %c0_8 = arith.constant 0 : index
    %7 = vector.load %arg1[%c2, %c0_7, %c0_8] : memref<4x192x384xbf16, #tpu.memory_space<vmem>>, vector<1x192x384xbf16>
    %8 = vector.shape_cast %7 : vector<1x192x384xbf16> to vector<192x384xbf16>
    %cst_9 = arith.constant dense<0.000000e+00> : vector<32x384xf32>
    %9 = tpu.matmul %0, %8, %cst_9 {dimension_numbers = #tpu.dot_dimension_numbers<[1], [0], [0], [1], [0, 0, 1, 1], [], []>} : vector<32x192xbf16>, vector<192x384xbf16>, vector<32x384xf32> -> vector<32x384xf32>
    %c3 = arith.constant 3 : index
    %c0_10 = arith.constant 0 : index
    %c0_11 = arith.constant 0 : index
    %10 = vector.load %arg1[%c3, %c0_10, %c0_11] : memref<4x192x384xbf16, #tpu.memory_space<vmem>>, vector<1x192x384xbf16>
    %11 = vector.shape_cast %10 : vector<1x192x384xbf16> to vector<192x384xbf16>
    %cst_12 = arith.constant dense<0.000000e+00> : vector<32x384xf32>
    %12 = tpu.matmul %0, %11, %cst_12 {dimension_numbers = #tpu.dot_dimension_numbers<[1], [0], [0], [1], [0, 0, 1, 1], [], []>} : vector<32x192xbf16>, vector<192x384xbf16>, vector<32x384xf32> -> vector<32x384xf32>
    %13 = arith.maximumf %3, %6 : vector<32x384xf32>
    %14 = arith.maximumf %9, %12 : vector<32x384xf32>
    %15 = arith.maximumf %13, %14 : vector<32x384xf32>
    %c0_13 = arith.constant 0 : index
    %c0_14 = arith.constant 0 : index
    %16 = vector.load %arg3[%c0_13, %c0_14] : memref<32x1xf32, #tpu.memory_space<vmem>>, vector<32x1xf32>
    %17 = vector.broadcast %16 : vector<32x1xf32> to vector<32x384xf32>
    %18 = arith.addf %15, %17 : vector<32x384xf32>
    %cst_15 = arith.constant 0.000000e+00 : f32
    %19 = vector.broadcast %cst_15 : f32 to vector<32x384xf32>
    %20 = arith.maximumf %18, %19 : vector<32x384xf32>
    %21 = arith.truncf %20 : vector<32x384xf32> to vector<32x384xbf16>
    %c0_16 = arith.constant 0 : index
    %c0_17 = arith.constant 0 : index
    %22 = vector.load %arg4[%c0_16, %c0_17] : memref<32x384xbf16, #tpu.memory_space<vmem>>, vector<32x384xbf16>
    tpu.vector_store %arg4[%c0_16, %c0_17], %21 {strides = array<i32>} : memref<32x384xbf16, #tpu.memory_space<vmem>>, vector<32x384xbf16>,
    return
  }
  func.func @transform_0(%arg0: i32) -> (i32, i32, i32) {
    %c0_i32 = arith.constant 0 : i32
    %c0_i32_0 = arith.constant 0 : i32
    %c0_i32_1 = arith.constant 0 : i32
    return %c0_i32, %c0_i32_0, %arg0 : i32, i32, i32
  }
  func.func @transform_1(%arg0: i32) -> (i32, i32) {
    %c0_i32 = arith.constant 0 : i32
    %c0_i32_0 = arith.constant 0 : i32
    %c0_i32_1 = arith.constant 0 : i32
    return %c0_i32, %c0_i32_0 : i32, i32
  }
  func.func @transform_2(%arg0: i32) -> (i32, i32) {
    %c0_i32 = arith.constant 0 : i32
    %c0_i32_0 = arith.constant 0 : i32
    %c0_i32_1 = arith.constant 0 : i32
    return %c0_i32, %c0_i32_0 : i32, i32
  }
  func.func @transform_3(%arg0: i32) -> (i32, i32) {
    %c0_i32 = arith.constant 0 : i32
    %c0_i32_0 = arith.constant 0 : i32
    return %c0_i32, %arg0 : i32, i32
  }
}

module attributes {stable_mosaic.version = 11 : i64} {
  func.func @kernel(%arg0: memref<512x128xbf16, #tpu.memory_space<vmem>>, %arg1: memref<64x512xbf16, #tpu.memory_space<vmem>>, %arg2: memref<64x1xf32, #tpu.memory_space<vmem>>, %arg3: memref<576x64xbf16, #tpu.memory_space<vmem>>, %arg4: memref<64x1xf32, #tpu.memory_space<vmem>>, %arg5: memref<512x64xbf16, #tpu.memory_space<vmem>>, %arg6: memref<512x1xf32, #tpu.memory_space<vmem>>, %arg7: memref<6x512xbf16, #tpu.memory_space<vmem>>, %arg8: memref<6x1xf32, #tpu.memory_space<vmem>>, %arg9: memref<5x2xf32, #tpu.memory_space<vmem>>) attributes {dimension_semantics = [], scalar_prefetch = 0 : i64, scratch_operands = 0 : i64, tpu.core_type = #tpu.core_type<tc>} {
    %c0 = arith.constant 0 : index
    %c0_0 = arith.constant 0 : index
    %0 = vector.load %arg1[%c0, %c0_0] : memref<64x512xbf16, #tpu.memory_space<vmem>>, vector<64x512xbf16>
    %c0_1 = arith.constant 0 : index
    %c0_2 = arith.constant 0 : index
    %1 = vector.load %arg0[%c0_1, %c0_2] : memref<512x128xbf16, #tpu.memory_space<vmem>>, vector<512x128xbf16>
    %cst = arith.constant dense<0.000000e+00> : vector<64x128xf32>
    %2 = tpu.matmul %0, %1, %cst {dimension_numbers = #tpu.dot_dimension_numbers<[1], [0], [0], [1], [0, 0, 1, 1], [], []>} : vector<64x512xbf16>, vector<512x128xbf16>, vector<64x128xf32> -> vector<64x128xf32>
    %3 = vector.extract_strided_slice %2 {offsets = [0, 0], sizes = [64, 32], strides = [1, 1]} : vector<64x128xf32> to vector<64x32xf32>
    %4 = vector.extract_strided_slice %2 {offsets = [0, 32], sizes = [64, 32], strides = [1, 1]} : vector<64x128xf32> to vector<64x32xf32>
    %5 = arith.maximumf %3, %4 : vector<64x32xf32>
    %6 = vector.extract_strided_slice %2 {offsets = [0, 64], sizes = [64, 32], strides = [1, 1]} : vector<64x128xf32> to vector<64x32xf32>
    %7 = vector.extract_strided_slice %2 {offsets = [0, 96], sizes = [64, 32], strides = [1, 1]} : vector<64x128xf32> to vector<64x32xf32>
    %8 = arith.maximumf %6, %7 : vector<64x32xf32>
    %9 = arith.maximumf %5, %8 : vector<64x32xf32>
    %c0_3 = arith.constant 0 : index
    %c0_4 = arith.constant 0 : index
    %10 = vector.load %arg2[%c0_3, %c0_4] : memref<64x1xf32, #tpu.memory_space<vmem>>, vector<64x1xf32>
    %11 = vector.broadcast %10 : vector<64x1xf32> to vector<64x32xf32>
    %12 = arith.addf %9, %11 : vector<64x32xf32>
    %cst_5 = arith.constant 0.000000e+00 : f32
    %13 = vector.broadcast %cst_5 : f32 to vector<64x32xf32>
    %14 = arith.maximumf %12, %13 : vector<64x32xf32>
    %15 = arith.truncf %14 : vector<64x32xf32> to vector<64x32xbf16>
    %c0_6 = arith.constant 0 : index
    %c0_7 = arith.constant 0 : index
    %16 = vector.load %arg3[%c0_6, %c0_7] : memref<576x64xbf16, #tpu.memory_space<vmem>>, vector<576x64xbf16>
    %cst_8 = arith.constant dense<0.000000e+00> : vector<576x32xf32>
    %17 = tpu.matmul %16, %15, %cst_8 {dimension_numbers = #tpu.dot_dimension_numbers<[1], [0], [0], [1], [0, 0, 1, 1], [], []>} : vector<576x64xbf16>, vector<64x32xbf16>, vector<576x32xf32> -> vector<576x32xf32>
    %18 = vector.extract_strided_slice %17 {offsets = [0, 0], sizes = [64, 32], strides = [1, 1]} : vector<576x32xf32> to vector<64x32xf32>
    %19 = vector.extract_strided_slice %18 {offsets = [0, 0], sizes = [64, 4], strides = [1, 1]} : vector<64x32xf32> to vector<64x4xf32>
    %20 = vector.extract_strided_slice %18 {offsets = [0, 8], sizes = [64, 4], strides = [1, 1]} : vector<64x32xf32> to vector<64x4xf32>
    %21 = tpu.concatenate %19, %20 in 1 : vector<64x4xf32>, vector<64x4xf32> -> vector<64x8xf32>
    %22 = vector.extract_strided_slice %17 {offsets = [64, 0], sizes = [64, 32], strides = [1, 1]} : vector<576x32xf32> to vector<64x32xf32>
    %23 = vector.extract_strided_slice %22 {offsets = [0, 2], sizes = [64, 4], strides = [1, 1]} : vector<64x32xf32> to vector<64x4xf32>
    %24 = vector.extract_strided_slice %22 {offsets = [0, 10], sizes = [64, 4], strides = [1, 1]} : vector<64x32xf32> to vector<64x4xf32>
    %25 = tpu.concatenate %23, %24 in 1 : vector<64x4xf32>, vector<64x4xf32> -> vector<64x8xf32>
    %26 = arith.addf %21, %25 : vector<64x8xf32>
    %27 = vector.extract_strided_slice %17 {offsets = [128, 0], sizes = [64, 32], strides = [1, 1]} : vector<576x32xf32> to vector<64x32xf32>
    %28 = vector.extract_strided_slice %27 {offsets = [0, 4], sizes = [64, 4], strides = [1, 1]} : vector<64x32xf32> to vector<64x4xf32>
    %29 = vector.extract_strided_slice %27 {offsets = [0, 12], sizes = [64, 4], strides = [1, 1]} : vector<64x32xf32> to vector<64x4xf32>
    %30 = tpu.concatenate %28, %29 in 1 : vector<64x4xf32>, vector<64x4xf32> -> vector<64x8xf32>
    %31 = arith.addf %26, %30 : vector<64x8xf32>
    %32 = vector.extract_strided_slice %17 {offsets = [192, 0], sizes = [64, 32], strides = [1, 1]} : vector<576x32xf32> to vector<64x32xf32>
    %33 = vector.extract_strided_slice %32 {offsets = [0, 8], sizes = [64, 4], strides = [1, 1]} : vector<64x32xf32> to vector<64x4xf32>
    %34 = vector.extract_strided_slice %32 {offsets = [0, 16], sizes = [64, 4], strides = [1, 1]} : vector<64x32xf32> to vector<64x4xf32>
    %35 = tpu.concatenate %33, %34 in 1 : vector<64x4xf32>, vector<64x4xf32> -> vector<64x8xf32>
    %36 = arith.addf %31, %35 : vector<64x8xf32>
    %37 = vector.extract_strided_slice %17 {offsets = [256, 0], sizes = [64, 32], strides = [1, 1]} : vector<576x32xf32> to vector<64x32xf32>
    %38 = vector.extract_strided_slice %37 {offsets = [0, 10], sizes = [64, 4], strides = [1, 1]} : vector<64x32xf32> to vector<64x4xf32>
    %39 = vector.extract_strided_slice %37 {offsets = [0, 18], sizes = [64, 4], strides = [1, 1]} : vector<64x32xf32> to vector<64x4xf32>
    %40 = tpu.concatenate %38, %39 in 1 : vector<64x4xf32>, vector<64x4xf32> -> vector<64x8xf32>
    %41 = arith.addf %36, %40 : vector<64x8xf32>
    %42 = vector.extract_strided_slice %17 {offsets = [320, 0], sizes = [64, 32], strides = [1, 1]} : vector<576x32xf32> to vector<64x32xf32>
    %43 = vector.extract_strided_slice %42 {offsets = [0, 12], sizes = [64, 4], strides = [1, 1]} : vector<64x32xf32> to vector<64x4xf32>
    %44 = vector.extract_strided_slice %42 {offsets = [0, 20], sizes = [64, 4], strides = [1, 1]} : vector<64x32xf32> to vector<64x4xf32>
    %45 = tpu.concatenate %43, %44 in 1 : vector<64x4xf32>, vector<64x4xf32> -> vector<64x8xf32>
    %46 = arith.addf %41, %45 : vector<64x8xf32>
    %47 = vector.extract_strided_slice %17 {offsets = [384, 0], sizes = [64, 32], strides = [1, 1]} : vector<576x32xf32> to vector<64x32xf32>
    %48 = vector.extract_strided_slice %47 {offsets = [0, 16], sizes = [64, 4], strides = [1, 1]} : vector<64x32xf32> to vector<64x4xf32>
    %49 = vector.extract_strided_slice %47 {offsets = [0, 24], sizes = [64, 4], strides = [1, 1]} : vector<64x32xf32> to vector<64x4xf32>
    %50 = tpu.concatenate %48, %49 in 1 : vector<64x4xf32>, vector<64x4xf32> -> vector<64x8xf32>
    %51 = arith.addf %46, %50 : vector<64x8xf32>
    %52 = vector.extract_strided_slice %17 {offsets = [448, 0], sizes = [64, 32], strides = [1, 1]} : vector<576x32xf32> to vector<64x32xf32>
    %53 = vector.extract_strided_slice %52 {offsets = [0, 18], sizes = [64, 4], strides = [1, 1]} : vector<64x32xf32> to vector<64x4xf32>
    %54 = vector.extract_strided_slice %52 {offsets = [0, 26], sizes = [64, 4], strides = [1, 1]} : vector<64x32xf32> to vector<64x4xf32>
    %55 = tpu.concatenate %53, %54 in 1 : vector<64x4xf32>, vector<64x4xf32> -> vector<64x8xf32>
    %56 = arith.addf %51, %55 : vector<64x8xf32>
    %57 = vector.extract_strided_slice %17 {offsets = [512, 0], sizes = [64, 32], strides = [1, 1]} : vector<576x32xf32> to vector<64x32xf32>
    %58 = vector.extract_strided_slice %57 {offsets = [0, 20], sizes = [64, 4], strides = [1, 1]} : vector<64x32xf32> to vector<64x4xf32>
    %59 = vector.extract_strided_slice %57 {offsets = [0, 28], sizes = [64, 4], strides = [1, 1]} : vector<64x32xf32> to vector<64x4xf32>
    %60 = tpu.concatenate %58, %59 in 1 : vector<64x4xf32>, vector<64x4xf32> -> vector<64x8xf32>
    %61 = arith.addf %56, %60 : vector<64x8xf32>
    %62 = vector.extract_strided_slice %61 {offsets = [0, 0], sizes = [64, 2], strides = [1, 1]} : vector<64x8xf32> to vector<64x2xf32>
    %63 = vector.extract_strided_slice %61 {offsets = [0, 2], sizes = [64, 2], strides = [1, 1]} : vector<64x8xf32> to vector<64x2xf32>
    %64 = arith.maximumf %62, %63 : vector<64x2xf32>
    %65 = vector.extract_strided_slice %61 {offsets = [0, 4], sizes = [64, 2], strides = [1, 1]} : vector<64x8xf32> to vector<64x2xf32>
    %66 = vector.extract_strided_slice %61 {offsets = [0, 6], sizes = [64, 2], strides = [1, 1]} : vector<64x8xf32> to vector<64x2xf32>
    %67 = arith.maximumf %65, %66 : vector<64x2xf32>
    %68 = arith.maximumf %64, %67 : vector<64x2xf32>
    %c0_9 = arith.constant 0 : index
    %c0_10 = arith.constant 0 : index
    %69 = vector.load %arg4[%c0_9, %c0_10] : memref<64x1xf32, #tpu.memory_space<vmem>>, vector<64x1xf32>
    %70 = vector.broadcast %69 : vector<64x1xf32> to vector<64x2xf32>
    %71 = arith.addf %68, %70 : vector<64x2xf32>
    %cst_11 = arith.constant 0.000000e+00 : f32
    %72 = vector.broadcast %cst_11 : f32 to vector<64x2xf32>
    %73 = arith.maximumf %71, %72 : vector<64x2xf32>
    %74 = arith.truncf %73 : vector<64x2xf32> to vector<64x2xbf16>
    %c0_12 = arith.constant 0 : index
    %c0_13 = arith.constant 0 : index
    %75 = vector.load %arg5[%c0_12, %c0_13] : memref<512x64xbf16, #tpu.memory_space<vmem>>, vector<512x64xbf16>
    %cst_14 = arith.constant dense<0.000000e+00> : vector<512x2xf32>
    %76 = tpu.matmul %75, %74, %cst_14 {dimension_numbers = #tpu.dot_dimension_numbers<[1], [0], [0], [1], [0, 0, 1, 1], [], []>} : vector<512x64xbf16>, vector<64x2xbf16>, vector<512x2xf32> -> vector<512x2xf32>
    %c0_15 = arith.constant 0 : index
    %c0_16 = arith.constant 0 : index
    %77 = vector.load %arg6[%c0_15, %c0_16] : memref<512x1xf32, #tpu.memory_space<vmem>>, vector<512x1xf32>
    %78 = vector.broadcast %77 : vector<512x1xf32> to vector<512x2xf32>
    %79 = arith.addf %76, %78 : vector<512x2xf32>
    %cst_17 = arith.constant 0.000000e+00 : f32
    %80 = vector.broadcast %cst_17 : f32 to vector<512x2xf32>
    %81 = arith.maximumf %79, %80 : vector<512x2xf32>
    %82 = arith.truncf %81 : vector<512x2xf32> to vector<512x2xbf16>
    %c0_18 = arith.constant 0 : index
    %c0_19 = arith.constant 0 : index
    %83 = vector.load %arg7[%c0_18, %c0_19] : memref<6x512xbf16, #tpu.memory_space<vmem>>, vector<6x512xbf16>
    %cst_20 = arith.constant dense<0.000000e+00> : vector<6x2xf32>
    %84 = tpu.matmul %83, %82, %cst_20 {dimension_numbers = #tpu.dot_dimension_numbers<[1], [0], [0], [1], [0, 0, 1, 1], [], []>} : vector<6x512xbf16>, vector<512x2xbf16>, vector<6x2xf32> -> vector<6x2xf32>
    %c0_21 = arith.constant 0 : index
    %c0_22 = arith.constant 0 : index
    %85 = vector.load %arg8[%c0_21, %c0_22] : memref<6x1xf32, #tpu.memory_space<vmem>>, vector<6x1xf32>
    %86 = vector.broadcast %85 : vector<6x1xf32> to vector<6x2xf32>
    %87 = arith.addf %84, %86 : vector<6x2xf32>
    %88 = vector.extract_strided_slice %87 {offsets = [0, 0], sizes = [1, 2], strides = [1, 1]} : vector<6x2xf32> to vector<1x2xf32>
    %89 = vector.extract_strided_slice %87 {offsets = [1, 0], sizes = [5, 2], strides = [1, 1]} : vector<6x2xf32> to vector<5x2xf32>
    %90 = vector.broadcast %88 : vector<1x2xf32> to vector<5x2xf32>
    %91 = arith.addf %90, %89 : vector<5x2xf32>
    %cst_23 = arith.constant dense<0.000000e+00> : vector<2xf32>
    %92 = vector.multi_reduction <add>, %89, %cst_23 [0] : vector<5x2xf32> to vector<2xf32>
    %93 = vector.shape_cast %92 : vector<2xf32> to vector<1x2xf32>
    %cst_24 = arith.constant 5.000000e+00 : f32
    %94 = vector.broadcast %cst_24 : f32 to vector<1x2xf32>
    %95 = arith.divf %93, %94 : vector<1x2xf32>
    %96 = vector.broadcast %95 : vector<1x2xf32> to vector<5x2xf32>
    %97 = arith.subf %91, %96 : vector<5x2xf32>
    %c0_25 = arith.constant 0 : index
    %c0_26 = arith.constant 0 : index
    %98 = vector.load %arg9[%c0_25, %c0_26] : memref<5x2xf32, #tpu.memory_space<vmem>>, vector<5x2xf32>
    tpu.vector_store %arg9[%c0_25, %c0_26], %97 {strides = array<i32>} : memref<5x2xf32, #tpu.memory_space<vmem>>, vector<5x2xf32>,
    return
  }
}

</mosaic_0001>

<llo_original>
// kernel: dueling_ddqn_forward.2
$region0: #{dueling_ddqn_forward.2}
  #allocation0 [shape = 'u32[]', space=smem, size = 0x4, offset = 0x4, fixed_abs, tag = 'smem constant byte address 0x4 - core index']
  #allocation1 [shape = 'u32[144,128]{1,0:T(1,128)}', space=vmem, size = 0x12000, scoped, tag = 'internal scratch']
  %s0 = inlined_call_operand.vmem [shape: bf16[4,192,722], index: 0, kind: input, shape index: {}]
  %s1 = inlined_call_operand.vmem [shape: bf16[32,192], index: 1, kind: input, shape index: {}]
  %s2 = inlined_call_operand.vmem [shape: f32[32,1], index: 2, kind: input, shape index: {}]
  %s3 = inlined_call_operand.vmem [shape: bf16[32,722], index: 3, kind: output, shape index: {}]
  %s4 = sld [smem:[#allocation0]]
  $region93: #{dueling_ddqn_forward.2} parent=0
    _
  %s6 = ssub.s32 1, %s4
  %s7 = scalar_select 0, %s6, %s4
  $region1: #{dueling_ddqn_forward.2} parent=0
    #allocation2 [shape = 'u8[1179648]{0}', space=vmem, size = 0x120000, scoped, tag = 'input window, operand 0']
    #allocation3 [shape = 'u8[49152]{0}', space=vmem, size = 0xc000, scoped, tag = 'output window, operand 0']
    loop: start=0, step=1, limit=4
    $region2: #{dueling_ddqn_forward.2} parent=1 // loop_pre_header
      _
    $region3: #{dueling_ddqn_forward.2} parent=1 // loop_header
      %s9 = sphi 0, %s13
      %p10 = scmp.ge.s32.totalorder %s9, 4
      %s19 = sphi 0, %s21
      %s22 = sphi 0, %s19
      %s23 = sphi 0, %s22
      %s39 = sphi 0, %s23
      %s43 = sphi 0, %s43
      %s45 = sphi 0, %s43
      %s46 = sphi 0, %s45
      %s60 = sphi 0, %s46
      %s64 = sphi 0, %s64
      %s66 = sphi 0, %s64
      %s67 = sphi 0, %s66
      %s81 = sphi 0, %s67
      %s87 = sphi 0, %s89
      %s90 = sphi 0, %s87
      %s91 = sphi 0, %s90
      %s107 = sphi 0, %s91
    $region4: #{dueling_ddqn_forward.2} parent=1 // loop_header_branch
      %12 = sbr.rel (%p10) target = $region8
    $region5: #{dueling_ddqn_forward.2} parent=1 // loop_body
      %s14 = ssub.s32 %s9, 1
      %s15 = ssub.s32 %s9, 2
      %s16 = sadd.s32 %s9, 1
      %s17 = ssub.s32 %s9, %s16
      %p18 = scmp.eq.s32.totalorder %s17, 0
      %s20 = sadd.s32 %s19, 1
      %s21 = scalar_select %p18, %s19, %s20
      %p24 = pneg %p18
      %p25 = scmp.eq.s32.totalorder %s9, 1
      %p26 = por %p24, %p25
      %p27 = scmp.ne.s32.totalorder %s19, %s22
      %p28 = scmp.eq.s32.totalorder %s9, 0
      %p29 = por %p27, %p28
      %p30 = scmp.ne.s32.totalorder %s19, %s22
      %p31 = scmp.eq.s32.totalorder %s14, 1
      %p32 = por %p30, %p31
      %p33 = scmp.ne.s32.totalorder %s22, %s23
      %p34 = scmp.eq.s32.totalorder %s14, 0
      %p35 = por %p33, %p34
      %p36 = scmp.ne.s32.totalorder %s22, %s23
      %p37 = scmp.eq.s32.totalorder %s15, 1
      %p38 = por %p36, %p37
      %p40 = scmp.ne.s32.totalorder %s23, %s39
      %p41 = scmp.eq.s32.totalorder %s15, 0
      %p42 = por %p40, %p41
      %s44 = sadd.s32 %s43, 1
      %p47 = scmp.eq.s32.totalorder %s9, 1
      %p48 = scmp.ne.s32.totalorder %s43, %s45
      %p49 = scmp.eq.s32.totalorder %s9, 0
      %p50 = por %p48, %p49
      %p51 = scmp.ne.s32.totalorder %s43, %s45
      %p52 = scmp.eq.s32.totalorder %s14, 1
      %p53 = por %p51, %p52
      %p54 = scmp.ne.s32.totalorder %s45, %s46
      %p55 = scmp.eq.s32.totalorder %s14, 0
      %p56 = por %p54, %p55
      %p57 = scmp.ne.s32.totalorder %s45, %s46
      %p58 = scmp.eq.s32.totalorder %s15, 1
      %p59 = por %p57, %p58
      %p61 = scmp.ne.s32.totalorder %s46, %s60
      %p62 = scmp.eq.s32.totalorder %s15, 0
      %p63 = por %p61, %p62
      %s65 = sadd.s32 %s64, 1
      %p68 = scmp.eq.s32.totalorder %s9, 1
      %p69 = scmp.ne.s32.totalorder %s64, %s66
      %p70 = scmp.eq.s32.totalorder %s9, 0
      %p71 = por %p69, %p70
      %p72 = scmp.ne.s32.totalorder %s64, %s66
      %p73 = scmp.eq.s32.totalorder %s14, 1
      %p74 = por %p72, %p73
      %p75 = scmp.ne.s32.totalorder %s66, %s67
      %p76 = scmp.eq.s32.totalorder %s14, 0
      %p77 = por %p75, %p76
      %p78 = scmp.ne.s32.totalorder %s66, %s67
      %p79 = scmp.eq.s32.totalorder %s15, 1
      %p80 = por %p78, %p79
      %p82 = scmp.ne.s32.totalorder %s67, %s81
      %p83 = scmp.eq.s32.totalorder %s15, 0
      %p84 = por %p82, %p83
      %s85 = ssub.s32 %s9, %s16
      %p86 = scmp.eq.s32.totalorder %s85, 0
      %s88 = sadd.s32 %s87, 1
      %s89 = scalar_select %p86, %s87, %s88
      %p92 = pneg %p86
      %p93 = scmp.eq.s32.totalorder %s9, 1
      %p94 = por %p92, %p93
      %p95 = scmp.ne.s32.totalorder %s87, %s90
      %p96 = scmp.eq.s32.totalorder %s9, 0
      %p97 = por %p95, %p96
      %p98 = scmp.ne.s32.totalorder %s87, %s90
      %p99 = scmp.eq.s32.totalorder %s14, 1
      %p100 = por %p98, %p99
      %p101 = scmp.ne.s32.totalorder %s90, %s91
      %p102 = scmp.eq.s32.totalorder %s14, 0
      %p103 = por %p101, %p102
      %p104 = scmp.ne.s32.totalorder %s90, %s91
      %p105 = scmp.eq.s32.totalorder %s15, 1
      %p106 = por %p104, %p105
      %p108 = scmp.ne.s32.totalorder %s91, %s107
      %p109 = scmp.eq.s32.totalorder %s15, 0
      %p110 = por %p108, %p109
      %p111 = scmp.le.s32.totalorder 1, %s9
      %p112 = scmp.lt.s32.totalorder %s9, 3
      %p113 = pnand %p111, %p112
      %p114 = pneg %p113
      // Predicated region
      $region9: #{dueling_ddqn_forward.2} parent=5 // pred_check
        _
      $region10: #{dueling_ddqn_forward.2} parent=5 // pred_check_branch
        %116 = sbr.rel (%p113) target = $region12
      $region11: #{dueling_ddqn_forward.2} parent=5 // pred_region
        %s117 = ssub.s32 %s9, 1
        // Predicated region
        $region13: #{dueling_ddqn_forward.2} parent=11 // pred_check
          %p118 = pneg %p56
        $region14: #{dueling_ddqn_forward.2} parent=11 // pred_check_branch
          %120 = sbr.rel (%p118) target = $region16
        $region15: #{dueling_ddqn_forward.2} parent=11 // pred_region
          _
        $region16: #{dueling_ddqn_forward.2} parent=11 // pred_fallthru
          _
        // Predicated region
        $region17: #{dueling_ddqn_forward.2} parent=11 // pred_check
          %p121 = pneg %p77
        $region18: #{dueling_ddqn_forward.2} parent=11 // pred_check_branch
          %123 = sbr.rel (%p121) target = $region20
        $region19: #{dueling_ddqn_forward.2} parent=11 // pred_region
          _
        $region20: #{dueling_ddqn_forward.2} parent=11 // pred_fallthru
          _
      $region12: #{dueling_ddqn_forward.2} parent=5 // pred_fallthru
        _
      %p124 = scmp.lt.s32.totalorder %s9, 2
      // Predicated region
      $region21: #{dueling_ddqn_forward.2} parent=5 // pred_check
        %p125 = pneg %p124
      $region22: #{dueling_ddqn_forward.2} parent=5 // pred_check_branch
        %127 = sbr.rel (%p125) target = $region24
      $region23: #{dueling_ddqn_forward.2} parent=5 // pred_region
        // Predicated region
        $region25: #{dueling_ddqn_forward.2} parent=23 // pred_check
          %p128 = pneg %p29
        $region26: #{dueling_ddqn_forward.2} parent=23 // pred_check_branch
          %130 = sbr.rel (%p128) target = $region28
        $region27: #{dueling_ddqn_forward.2} parent=23 // pred_region
          %s131 = sand.u32 %s19, 1
          %s132 = sand.u32 %s19, 1
          %s133 = smul.addr %s132, 1152
          %s134 = scalar_lea.vmem [#allocation2], %s133
          %s135 = smul.u32 3, %s9
          %s136 = smul.addr %s135, 4
          %s137 = scalar_lea.vmem %s0, %s136
          // Predicated region
          $region29: #{dueling_ddqn_forward.2} parent=27 // pred_check
            _
          $region30: #{dueling_ddqn_forward.2} parent=27 // pred_check_branch
            %139 = sbr.rel (0) target = $region32
          $region31: #{dueling_ddqn_forward.2} parent=27 // pred_region
            // Predicated region
            $region33: #{dueling_ddqn_forward.2} parent=31 // pred_check
              _
            $region34: #{dueling_ddqn_forward.2} parent=31 // pred_check_branch
              %141 = sbr.rel (0) target = $region36
            $region35: #{dueling_ddqn_forward.2} parent=31 // pred_region
              %s142 = scalar_lea.vmem %s137, 8
              %s143 = scalar_lea.vmem %s134, 8 [#allocation2]
              loop: start=0, step=1, limit=1
              $region37: #{dueling_ddqn_forward.2} parent=35 // loop_pre_header
                _
              $region38: #{dueling_ddqn_forward.2} parent=35 // loop_header
                %s145 = sphi 0, %s149
                %p146 = scmp.ge.s32.totalorder %s145, 1
                %s150 = sphi %s137, %s137
                %s151 = sphi %s134, %s134
              $region39: #{dueling_ddqn_forward.2} parent=35 // loop_header_branch
                %148 = sbr.rel (%p146) target = $region43
              $region40: #{dueling_ddqn_forward.2} parent=35 // loop_body
                %v152 = vld [vmem:[%s150] sm:$0xff]
                %153 = vst [vmem:[%s151] sm:$0xff] %v152
                %v154 = vld [vmem:[%s150 + $0x18] sm:$0xff]
                %155 = vst [vmem:[%s151 + $0xc] sm:$0xff] %v154
                %v156 = vld [vmem:[%s150 + $0x30] sm:$0xff]
                %157 = vst [vmem:[%s151 + $0x18] sm:$0xff] %v156
                %v158 = vld [vmem:[%s150 + $0x48] sm:$0xff]
                %159 = vst [vmem:[%s151 + $0x24] sm:$0xff] %v158
                %v160 = vld [vmem:[%s150 + $0x60] sm:$0xff]
                %161 = vst [vmem:[%s151 + $0x30] sm:$0xff] %v160
                %v162 = vld [vmem:[%s150 + $0x78] sm:$0xff]
                %163 = vst [vmem:[%s151 + $0x3c] sm:$0xff] %v162
                %v164 = vld [vmem:[%s150 + $0x90] sm:$0xff]
                %165 = vst [vmem:[%s151 + $0x48] sm:$0xff] %v164
                %v166 = vld [vmem:[%s150 + $0xa8] sm:$0xff]
                %167 = vst [vmem:[%s151 + $0x54] sm:$0xff] %v166
                %v168 = vld [vmem:[%s150 + $0xc0] sm:$0xff]
                %169 = vst [vmem:[%s151 + $0x60] sm:$0xff] %v168
                %v170 = vld [vmem:[%s150 + $0xd8] sm:$0xff]
                %171 = vst [vmem:[%s151 + $0x6c] sm:$0xff] %v170
                %v172 = vld [vmem:[%s150 + $0xf0] sm:$0xff]
                %173 = vst [vmem:[%s151 + $0x78] sm:$0xff] %v172
                %v174 = vld [vmem:[%s150 + $0x108] sm:$0xff]
                %175 = vst [vmem:[%s151 + $0x84] sm:$0xff] %v174
                %v176 = vld [vmem:[%s150 + $0x120] sm:$0xff]
                %177 = vst [vmem:[%s151 + $0x90] sm:$0xff] %v176
                %v178 = vld [vmem:[%s150 + $0x138] sm:$0xff]
                %179 = vst [vmem:[%s151 + $0x9c] sm:$0xff] %v178
                %v180 = vld [vmem:[%s150 + $0x150] sm:$0xff]
                %181 = vst [vmem:[%s151 + $0xa8] sm:$0xff] %v180
                %v182 = vld [vmem:[%s150 + $0x168] sm:$0xff]
                %183 = vst [vmem:[%s151 + $0xb4] sm:$0xff] %v182
                %v184 = vld [vmem:[%s150 + $0x180] sm:$0xff]
                %185 = vst [vmem:[%s151 + $0xc0] sm:$0xff] %v184
                %v186 = vld [vmem:[%s150 + $0x198] sm:$0xff]
                %187 = vst [vmem:[%s151 + $0xcc] sm:$0xff] %v186
                %v188 = vld [vmem:[%s150 + $0x1b0] sm:$0xff]
                %189 = vst [vmem:[%s151 + $0xd8] sm:$0xff] %v188
                %v190 = vld [vmem:[%s150 + $0x1c8] sm:$0xff]
                %191 = vst [vmem:[%s151 + $0xe4] sm:$0xff] %v190
                %v192 = vld [vmem:[%s150 + $0x1e0] sm:$0xff]
                %193 = vst [vmem:[%s151 + $0xf0] sm:$0xff] %v192
                %v194 = vld [vmem:[%s150 + $0x1f8] sm:$0xff]
                %195 = vst [vmem:[%s151 + $0xfc] sm:$0xff] %v194
                %v196 = vld [vmem:[%s150 + $0x210] sm:$0xff]
                %197 = vst [vmem:[%s151 + $0x108] sm:$0xff] %v196
                %v198 = vld [vmem:[%s150 + $0x228] sm:$0xff]
                %199 = vst [vmem:[%s151 + $0x114] sm:$0xff] %v198
                %v200 = vld [vmem:[%s150 + $0x240] sm:$0xff]
                %201 = vst [vmem:[%s151 + $0x120] sm:$0xff] %v200
                %v202 = vld [vmem:[%s150 + $0x258] sm:$0xff]
                %203 = vst [vmem:[%s151 + $0x12c] sm:$0xff] %v202
                %v204 = vld [vmem:[%s150 + $0x270] sm:$0xff]
                %205 = vst [vmem:[%s151 + $0x138] sm:$0xff] %v204
                %v206 = vld [vmem:[%s150 + $0x288] sm:$0xff]
                %207 = vst [vmem:[%s151 + $0x144] sm:$0xff] %v206
                %v208 = vld [vmem:[%s150 + $0x2a0] sm:$0xff]
                %209 = vst [vmem:[%s151 + $0x150] sm:$0xff] %v208
                %v210 = vld [vmem:[%s150 + $0x2b8] sm:$0xff]
                %211 = vst [vmem:[%s151 + $0x15c] sm:$0xff] %v210
                %v212 = vld [vmem:[%s150 + $0x2d0] sm:$0xff]
                %213 = vst [vmem:[%s151 + $0x168] sm:$0xff] %v212
                %v214 = vld [vmem:[%s150 + $0x2e8] sm:$0xff]
                %215 = vst [vmem:[%s151 + $0x174] sm:$0xff] %v214
                %v216 = vld [vmem:[%s150 + $0x300] sm:$0xff]
                %217 = vst [vmem:[%s151 + $0x180] sm:$0xff] %v216
                %v218 = vld [vmem:[%s150 + $0x318] sm:$0xff]
                %219 = vst [vmem:[%s151 + $0x18c] sm:$0xff] %v218
                %v220 = vld [vmem:[%s150 + $0x330] sm:$0xff]
                %221 = vst [vmem:[%s151 + $0x198] sm:$0xff] %v220
                %v222 = vld [vmem:[%s150 + $0x348] sm:$0xff]
                %223 = vst [vmem:[%s151 + $0x1a4] sm:$0xff] %v222
                %v224 = vld [vmem:[%s150 + $0x360] sm:$0xff]
                %225 = vst [vmem:[%s151 + $0x1b0] sm:$0xff] %v224
                %v226 = vld [vmem:[%s150 + $0x378] sm:$0xff]
                %227 = vst [vmem:[%s151 + $0x1bc] sm:$0xff] %v226
                %v228 = vld [vmem:[%s150 + $0x390] sm:$0xff]
                %229 = vst [vmem:[%s151 + $0x1c8] sm:$0xff] %v228
                %v230 = vld [vmem:[%s150 + $0x3a8] sm:$0xff]
                %231 = vst [vmem:[%s151 + $0x1d4] sm:$0xff] %v230
                %v232 = vld [vmem:[%s150 + $0x3c0] sm:$0xff]
                %233 = vst [vmem:[%s151 + $0x1e0] sm:$0xff] %v232
                %v234 = vld [vmem:[%s150 + $0x3d8] sm:$0xff]
                %235 = vst [vmem:[%s151 + $0x1ec] sm:$0xff] %v234
                %v236 = vld [vmem:[%s150 + $0x3f0] sm:$0xff]
                %237 = vst [vmem:[%s151 + $0x1f8] sm:$0xff] %v236
                %v238 = vld [vmem:[%s150 + $0x408] sm:$0xff]
                %239 = vst [vmem:[%s151 + $0x204] sm:$0xff] %v238
                %v240 = vld [vmem:[%s150 + $0x420] sm:$0xff]
                %241 = vst [vmem:[%s151 + $0x210] sm:$0xff] %v240
                %v242 = vld [vmem:[%s150 + $0x438] sm:$0xff]
                %243 = vst [vmem:[%s151 + $0x21c] sm:$0xff] %v242
                %v244 = vld [vmem:[%s150 + $0x450] sm:$0xff]
                %245 = vst [vmem:[%s151 + $0x228] sm:$0xff] %v244
                %v246 = vld [vmem:[%s150 + $0x468] sm:$0xff]
                %247 = vst [vmem:[%s151 + $0x234] sm:$0xff] %v246
                %v248 = vld [vmem:[%s150 + $0x480] sm:$0xff]
                %249 = vst [vmem:[%s151 + $0x240] sm:$0xff] %v248
                %v250 = vld [vmem:[%s150 + $0x498] sm:$0xff]
                %251 = vst [vmem:[%s151 + $0x24c] sm:$0xff] %v250
                %v252 = vld [vmem:[%s150 + $0x4b0] sm:$0xff]
                %253 = vst [vmem:[%s151 + $0x258] sm:$0xff] %v252
                %v254 = vld [vmem:[%s150 + $0x4c8] sm:$0xff]
                %255 = vst [vmem:[%s151 + $0x264] sm:$0xff] %v254
                %v256 = vld [vmem:[%s150 + $0x4e0] sm:$0xff]
                %257 = vst [vmem:[%s151 + $0x270] sm:$0xff] %v256
                %v258 = vld [vmem:[%s150 + $0x4f8] sm:$0xff]
                %259 = vst [vmem:[%s151 + $0x27c] sm:$0xff] %v258
                %v260 = vld [vmem:[%s150 + $0x510] sm:$0xff]
                %261 = vst [vmem:[%s151 + $0x288] sm:$0xff] %v260
                %v262 = vld [vmem:[%s150 + $0x528] sm:$0xff]
                %263 = vst [vmem:[%s151 + $0x294] sm:$0xff] %v262
                %v264 = vld [vmem:[%s150 + $0x540] sm:$0xff]
                %265 = vst [vmem:[%s151 + $0x2a0] sm:$0xff] %v264
                %v266 = vld [vmem:[%s150 + $0x558] sm:$0xff]
                %267 = vst [vmem:[%s151 + $0x2ac] sm:$0xff] %v266
                %v268 = vld [vmem:[%s150 + $0x570] sm:$0xff]
                %269 = vst [vmem:[%s151 + $0x2b8] sm:$0xff] %v268
                %v270 = vld [vmem:[%s150 + $0x588] sm:$0xff]
                %271 = vst [vmem:[%s151 + $0x2c4] sm:$0xff] %v270
                %v272 = vld [vmem:[%s150 + $0x5a0] sm:$0xff]
                %273 = vst [vmem:[%s151 + $0x2d0] sm:$0xff] %v272
                %v274 = vld [vmem:[%s150 + $0x5b8] sm:$0xff]
                %275 = vst [vmem:[%s151 + $0x2dc] sm:$0xff] %v274
                %v276 = vld [vmem:[%s150 + $0x5d0] sm:$0xff]
                %277 = vst [vmem:[%s151 + $0x2e8] sm:$0xff] %v276
                %v278 = vld [vmem:[%s150 + $0x5e8] sm:$0xff]
                %279 = vst [vmem:[%s151 + $0x2f4] sm:$0xff] %v278
                %v280 = vld [vmem:[%s150 + $0x600] sm:$0xff]
                %281 = vst [vmem:[%s151 + $0x300] sm:$0xff] %v280
                %v282 = vld [vmem:[%s150 + $0x618] sm:$0xff]
                %283 = vst [vmem:[%s151 + $0x30c] sm:$0xff] %v282
                %v284 = vld [vmem:[%s150 + $0x630] sm:$0xff]
                %285 = vst [vmem:[%s151 + $0x318] sm:$0xff] %v284
                %v286 = vld [vmem:[%s150 + $0x648] sm:$0xff]
                %287 = vst [vmem:[%s151 + $0x324] sm:$0xff] %v286
                %v288 = vld [vmem:[%s150 + $0x660] sm:$0xff]
                %289 = vst [vmem:[%s151 + $0x330] sm:$0xff] %v288
                %v290 = vld [vmem:[%s150 + $0x678] sm:$0xff]
                %291 = vst [vmem:[%s151 + $0x33c] sm:$0xff] %v290
                %v292 = vld [vmem:[%s150 + $0x690] sm:$0xff]
                %293 = vst [vmem:[%s151 + $0x348] sm:$0xff] %v292
                %v294 = vld [vmem:[%s150 + $0x6a8] sm:$0xff]
                %295 = vst [vmem:[%s151 + $0x354] sm:$0xff] %v294
                %v296 = vld [vmem:[%s150 + $0x6c0] sm:$0xff]
                %297 = vst [vmem:[%s151 + $0x360] sm:$0xff] %v296
                %v298 = vld [vmem:[%s150 + $0x6d8] sm:$0xff]
                %299 = vst [vmem:[%s151 + $0x36c] sm:$0xff] %v298
                %v300 = vld [vmem:[%s150 + $0x6f0] sm:$0xff]
                %301 = vst [vmem:[%s151 + $0x378] sm:$0xff] %v300
                %v302 = vld [vmem:[%s150 + $0x708] sm:$0xff]
                %303 = vst [vmem:[%s151 + $0x384] sm:$0xff] %v302
                %v304 = vld [vmem:[%s150 + $0x720] sm:$0xff]
                %305 = vst [vmem:[%s151 + $0x390] sm:$0xff] %v304
                %v306 = vld [vmem:[%s150 + $0x738] sm:$0xff]
                %307 = vst [vmem:[%s151 + $0x39c] sm:$0xff] %v306
                %v308 = vld [vmem:[%s150 + $0x750] sm:$0xff]
                %309 = vst [vmem:[%s151 + $0x3a8] sm:$0xff] %v308
                %v310 = vld [vmem:[%s150 + $0x768] sm:$0xff]
                %311 = vst [vmem:[%s151 + $0x3b4] sm:$0xff] %v310
                %v312 = vld [vmem:[%s150 + $0x780] sm:$0xff]
                %313 = vst [vmem:[%s151 + $0x3c0] sm:$0xff] %v312
                %v314 = vld [vmem:[%s150 + $0x798] sm:$0xff]
                %315 = vst [vmem:[%s151 + $0x3cc] sm:$0xff] %v314
                %v316 = vld [vmem:[%s150 + $0x7b0] sm:$0xff]
                %317 = vst [vmem:[%s151 + $0x3d8] sm:$0xff] %v316
                %v318 = vld [vmem:[%s150 + $0x7c8] sm:$0xff]
                %319 = vst [vmem:[%s151 + $0x3e4] sm:$0xff] %v318
                %v320 = vld [vmem:[%s150 + $0x7e0] sm:$0xff]
                %321 = vst [vmem:[%s151 + $0x3f0] sm:$0xff] %v320
                %v322 = vld [vmem:[%s150 + $0x7f8] sm:$0xff]
                %323 = vst [vmem:[%s151 + $0x3fc] sm:$0xff] %v322
                %v324 = vld [vmem:[%s150 + $0x810] sm:$0xff]
                %325 = vst [vmem:[%s151 + $0x408] sm:$0xff] %v324
                %v326 = vld [vmem:[%s150 + $0x828] sm:$0xff]
                %327 = vst [vmem:[%s151 + $0x414] sm:$0xff] %v326
                %v328 = vld [vmem:[%s150 + $0x840] sm:$0xff]
                %329 = vst [vmem:[%s151 + $0x420] sm:$0xff] %v328
                %v330 = vld [vmem:[%s150 + $0x858] sm:$0xff]
                %331 = vst [vmem:[%s151 + $0x42c] sm:$0xff] %v330
                %v332 = vld [vmem:[%s150 + $0x870] sm:$0xff]
                %333 = vst [vmem:[%s151 + $0x438] sm:$0xff] %v332
                %v334 = vld [vmem:[%s150 + $0x888] sm:$0xff]
                %335 = vst [vmem:[%s151 + $0x444] sm:$0xff] %v334
                %v336 = vld [vmem:[%s150 + $0x8a0] sm:$0xff]
                %337 = vst [vmem:[%s151 + $0x450] sm:$0xff] %v336
                %v338 = vld [vmem:[%s150 + $0x8b8] sm:$0xff]
                %339 = vst [vmem:[%s151 + $0x45c] sm:$0xff] %v338
                %v340 = vld [vmem:[%s150 + $0x8d0] sm:$0xff]
                %341 = vst [vmem:[%s151 + $0x468] sm:$0xff] %v340
                %v342 = vld [vmem:[%s150 + $0x8e8] sm:$0xff]
                %343 = vst [vmem:[%s151 + $0x474] sm:$0xff] %v342
              $region41: #{dueling_ddqn_forward.2} parent=35 // loop_footer
                %s149 = sadd.s32 1, %s145
              $region42: #{dueling_ddqn_forward.2} parent=35 // loop_footer_branch
                %144 = sbr.rel target = $region38
              $region43: #{dueling_ddqn_forward.2} parent=35 // loop_exit
                _
              loop: start=0, step=1, limit=1
              $region44: #{dueling_ddqn_forward.2} parent=35 // loop_pre_header
                _
              $region45: #{dueling_ddqn_forward.2} parent=35 // loop_header
                %s346 = sphi 0, %s350
                %p347 = scmp.ge.s32.totalorder %s346, 1
                %s351 = sphi %s142, %s142
                %s352 = sphi %s143, %s143
              $region46: #{dueling_ddqn_forward.2} parent=35 // loop_header_branch
                %349 = sbr.rel (%p347) target = $region50
              $region47: #{dueling_ddqn_forward.2} parent=35 // loop_body
                %v353 = vld [vmem:[%s351] sm:$0xf]
                %354 = vst [vmem:[%s352] sm:$0xf] %v353
                %v355 = vld [vmem:[%s351 + $0x18] sm:$0xf]
                %356 = vst [vmem:[%s352 + $0xc] sm:$0xf] %v355
                %v357 = vld [vmem:[%s351 + $0x30] sm:$0xf]
                %358 = vst [vmem:[%s352 + $0x18] sm:$0xf] %v357
                %v359 = vld [vmem:[%s351 + $0x48] sm:$0xf]
                %360 = vst [vmem:[%s352 + $0x24] sm:$0xf] %v359
                %v361 = vld [vmem:[%s351 + $0x60] sm:$0xf]
                %362 = vst [vmem:[%s352 + $0x30] sm:$0xf] %v361
                %v363 = vld [vmem:[%s351 + $0x78] sm:$0xf]
                %364 = vst [vmem:[%s352 + $0x3c] sm:$0xf] %v363
                %v365 = vld [vmem:[%s351 + $0x90] sm:$0xf]
                %366 = vst [vmem:[%s352 + $0x48] sm:$0xf] %v365
                %v367 = vld [vmem:[%s351 + $0xa8] sm:$0xf]
                %368 = vst [vmem:[%s352 + $0x54] sm:$0xf] %v367
                %v369 = vld [vmem:[%s351 + $0xc0] sm:$0xf]
                %370 = vst [vmem:[%s352 + $0x60] sm:$0xf] %v369
                %v371 = vld [vmem:[%s351 + $0xd8] sm:$0xf]
                %372 = vst [vmem:[%s352 + $0x6c] sm:$0xf] %v371
                %v373 = vld [vmem:[%s351 + $0xf0] sm:$0xf]
                %374 = vst [vmem:[%s352 + $0x78] sm:$0xf] %v373
                %v375 = vld [vmem:[%s351 + $0x108] sm:$0xf]
                %376 = vst [vmem:[%s352 + $0x84] sm:$0xf] %v375
                %v377 = vld [vmem:[%s351 + $0x120] sm:$0xf]
                %378 = vst [vmem:[%s352 + $0x90] sm:$0xf] %v377
                %v379 = vld [vmem:[%s351 + $0x138] sm:$0xf]
                %380 = vst [vmem:[%s352 + $0x9c] sm:$0xf] %v379
                %v381 = vld [vmem:[%s351 + $0x150] sm:$0xf]
                %382 = vst [vmem:[%s352 + $0xa8] sm:$0xf] %v381
                %v383 = vld [vmem:[%s351 + $0x168] sm:$0xf]
                %384 = vst [vmem:[%s352 + $0xb4] sm:$0xf] %v383
                %v385 = vld [vmem:[%s351 + $0x180] sm:$0xf]
                %386 = vst [vmem:[%s352 + $0xc0] sm:$0xf] %v385
                %v387 = vld [vmem:[%s351 + $0x198] sm:$0xf]
                %388 = vst [vmem:[%s352 + $0xcc] sm:$0xf] %v387
                %v389 = vld [vmem:[%s351 + $0x1b0] sm:$0xf]
                %390 = vst [vmem:[%s352 + $0xd8] sm:$0xf] %v389
                %v391 = vld [vmem:[%s351 + $0x1c8] sm:$0xf]
                %392 = vst [vmem:[%s352 + $0xe4] sm:$0xf] %v391
                %v393 = vld [vmem:[%s351 + $0x1e0] sm:$0xf]
                %394 = vst [vmem:[%s352 + $0xf0] sm:$0xf] %v393
                %v395 = vld [vmem:[%s351 + $0x1f8] sm:$0xf]
                %396 = vst [vmem:[%s352 + $0xfc] sm:$0xf] %v395
                %v397 = vld [vmem:[%s351 + $0x210] sm:$0xf]
                %398 = vst [vmem:[%s352 + $0x108] sm:$0xf] %v397
                %v399 = vld [vmem:[%s351 + $0x228] sm:$0xf]
                %400 = vst [vmem:[%s352 + $0x114] sm:$0xf] %v399
                %v401 = vld [vmem:[%s351 + $0x240] sm:$0xf]
                %402 = vst [vmem:[%s352 + $0x120] sm:$0xf] %v401
                %v403 = vld [vmem:[%s351 + $0x258] sm:$0xf]
                %404 = vst [vmem:[%s352 + $0x12c] sm:$0xf] %v403
                %v405 = vld [vmem:[%s351 + $0x270] sm:$0xf]
                %406 = vst [vmem:[%s352 + $0x138] sm:$0xf] %v405
                %v407 = vld [vmem:[%s351 + $0x288] sm:$0xf]
                %408 = vst [vmem:[%s352 + $0x144] sm:$0xf] %v407
                %v409 = vld [vmem:[%s351 + $0x2a0] sm:$0xf]
                %410 = vst [vmem:[%s352 + $0x150] sm:$0xf] %v409
                %v411 = vld [vmem:[%s351 + $0x2b8] sm:$0xf]
                %412 = vst [vmem:[%s352 + $0x15c] sm:$0xf] %v411
                %v413 = vld [vmem:[%s351 + $0x2d0] sm:$0xf]
                %414 = vst [vmem:[%s352 + $0x168] sm:$0xf] %v413
                %v415 = vld [vmem:[%s351 + $0x2e8] sm:$0xf]
                %416 = vst [vmem:[%s352 + $0x174] sm:$0xf] %v415
                %v417 = vld [vmem:[%s351 + $0x300] sm:$0xf]
                %418 = vst [vmem:[%s352 + $0x180] sm:$0xf] %v417
                %v419 = vld [vmem:[%s351 + $0x318] sm:$0xf]
                %420 = vst [vmem:[%s352 + $0x18c] sm:$0xf] %v419
                %v421 = vld [vmem:[%s351 + $0x330] sm:$0xf]
                %422 = vst [vmem:[%s352 + $0x198] sm:$0xf] %v421
                %v423 = vld [vmem:[%s351 + $0x348] sm:$0xf]
                %424 = vst [vmem:[%s352 + $0x1a4] sm:$0xf] %v423
                %v425 = vld [vmem:[%s351 + $0x360] sm:$0xf]
                %426 = vst [vmem:[%s352 + $0x1b0] sm:$0xf] %v425
                %v427 = vld [vmem:[%s351 + $0x378] sm:$0xf]
                %428 = vst [vmem:[%s352 + $0x1bc] sm:$0xf] %v427
                %v429 = vld [vmem:[%s351 + $0x390] sm:$0xf]
                %430 = vst [vmem:[%s352 + $0x1c8] sm:$0xf] %v429
                %v431 = vld [vmem:[%s351 + $0x3a8] sm:$0xf]
                %432 = vst [vmem:[%s352 + $0x1d4] sm:$0xf] %v431
                %v433 = vld [vmem:[%s351 + $0x3c0] sm:$0xf]
                %434 = vst [vmem:[%s352 + $0x1e0] sm:$0xf] %v433
                %v435 = vld [vmem:[%s351 + $0x3d8] sm:$0xf]
                %436 = vst [vmem:[%s352 + $0x1ec] sm:$0xf] %v435
                %v437 = vld [vmem:[%s351 + $0x3f0] sm:$0xf]
                %438 = vst [vmem:[%s352 + $0x1f8] sm:$0xf] %v437
                %v439 = vld [vmem:[%s351 + $0x408] sm:$0xf]
                %440 = vst [vmem:[%s352 + $0x204] sm:$0xf] %v439
                %v441 = vld [vmem:[%s351 + $0x420] sm:$0xf]
                %442 = vst [vmem:[%s352 + $0x210] sm:$0xf] %v441
                %v443 = vld [vmem:[%s351 + $0x438] sm:$0xf]
                %444 = vst [vmem:[%s352 + $0x21c] sm:$0xf] %v443
                %v445 = vld [vmem:[%s351 + $0x450] sm:$0xf]
                %446 = vst [vmem:[%s352 + $0x228] sm:$0xf] %v445
                %v447 = vld [vmem:[%s351 + $0x468] sm:$0xf]
                %448 = vst [vmem:[%s352 + $0x234] sm:$0xf] %v447
                %v449 = vld [vmem:[%s351 + $0x480] sm:$0xf]
                %450 = vst [vmem:[%s352 + $0x240] sm:$0xf] %v449
                %v451 = vld [vmem:[%s351 + $0x498] sm:$0xf]
                %452 = vst [vmem:[%s352 + $0x24c] sm:$0xf] %v451
                %v453 = vld [vmem:[%s351 + $0x4b0] sm:$0xf]
                %454 = vst [vmem:[%s352 + $0x258] sm:$0xf] %v453
                %v455 = vld [vmem:[%s351 + $0x4c8] sm:$0xf]
                %456 = vst [vmem:[%s352 + $0x264] sm:$0xf] %v455
                %v457 = vld [vmem:[%s351 + $0x4e0] sm:$0xf]
                %458 = vst [vmem:[%s352 + $0x270] sm:$0xf] %v457
                %v459 = vld [vmem:[%s351 + $0x4f8] sm:$0xf]
                %460 = vst [vmem:[%s352 + $0x27c] sm:$0xf] %v459
                %v461 = vld [vmem:[%s351 + $0x510] sm:$0xf]
                %462 = vst [vmem:[%s352 + $0x288] sm:$0xf] %v461
                %v463 = vld [vmem:[%s351 + $0x528] sm:$0xf]
                %464 = vst [vmem:[%s352 + $0x294] sm:$0xf] %v463
                %v465 = vld [vmem:[%s351 + $0x540] sm:$0xf]
                %466 = vst [vmem:[%s352 + $0x2a0] sm:$0xf] %v465
                %v467 = vld [vmem:[%s351 + $0x558] sm:$0xf]
                %468 = vst [vmem:[%s352 + $0x2ac] sm:$0xf] %v467
                %v469 = vld [vmem:[%s351 + $0x570] sm:$0xf]
                %470 = vst [vmem:[%s352 + $0x2b8] sm:$0xf] %v469
                %v471 = vld [vmem:[%s351 + $0x588] sm:$0xf]
                %472 = vst [vmem:[%s352 + $0x2c4] sm:$0xf] %v471
                %v473 = vld [vmem:[%s351 + $0x5a0] sm:$0xf]
                %474 = vst [vmem:[%s352 + $0x2d0] sm:$0xf] %v473
                %v475 = vld [vmem:[%s351 + $0x5b8] sm:$0xf]
                %476 = vst [vmem:[%s352 + $0x2dc] sm:$0xf] %v475
                %v477 = vld [vmem:[%s351 + $0x5d0] sm:$0xf]
                %478 = vst [vmem:[%s352 + $0x2e8] sm:$0xf] %v477
                %v479 = vld [vmem:[%s351 + $0x5e8] sm:$0xf]
                %480 = vst [vmem:[%s352 + $0x2f4] sm:$0xf] %v479
                %v481 = vld [vmem:[%s351 + $0x600] sm:$0xf]
                %482 = vst [vmem:[%s352 + $0x300] sm:$0xf] %v481
                %v483 = vld [vmem:[%s351 + $0x618] sm:$0xf]
                %484 = vst [vmem:[%s352 + $0x30c] sm:$0xf] %v483
                %v485 = vld [vmem:[%s351 + $0x630] sm:$0xf]
                %486 = vst [vmem:[%s352 + $0x318] sm:$0xf] %v485
                %v487 = vld [vmem:[%s351 + $0x648] sm:$0xf]
                %488 = vst [vmem:[%s352 + $0x324] sm:$0xf] %v487
                %v489 = vld [vmem:[%s351 + $0x660] sm:$0xf]
                %490 = vst [vmem:[%s352 + $0x330] sm:$0xf] %v489
                %v491 = vld [vmem:[%s351 + $0x678] sm:$0xf]
                %492 = vst [vmem:[%s352 + $0x33c] sm:$0xf] %v491
                %v493 = vld [vmem:[%s351 + $0x690] sm:$0xf]
                %494 = vst [vmem:[%s352 + $0x348] sm:$0xf] %v493
                %v495 = vld [vmem:[%s351 + $0x6a8] sm:$0xf]
                %496 = vst [vmem:[%s352 + $0x354] sm:$0xf] %v495
                %v497 = vld [vmem:[%s351 + $0x6c0] sm:$0xf]
                %498 = vst [vmem:[%s352 + $0x360] sm:$0xf] %v497
                %v499 = vld [vmem:[%s351 + $0x6d8] sm:$0xf]
                %500 = vst [vmem:[%s352 + $0x36c] sm:$0xf] %v499
                %v501 = vld [vmem:[%s351 + $0x6f0] sm:$0xf]
                %502 = vst [vmem:[%s352 + $0x378] sm:$0xf] %v501
                %v503 = vld [vmem:[%s351 + $0x708] sm:$0xf]
                %504 = vst [vmem:[%s352 + $0x384] sm:$0xf] %v503
                %v505 = vld [vmem:[%s351 + $0x720] sm:$0xf]
                %506 = vst [vmem:[%s352 + $0x390] sm:$0xf] %v505
                %v507 = vld [vmem:[%s351 + $0x738] sm:$0xf]
                %508 = vst [vmem:[%s352 + $0x39c] sm:$0xf] %v507
                %v509 = vld [vmem:[%s351 + $0x750] sm:$0xf]
                %510 = vst [vmem:[%s352 + $0x3a8] sm:$0xf] %v509
                %v511 = vld [vmem:[%s351 + $0x768] sm:$0xf]
                %512 = vst [vmem:[%s352 + $0x3b4] sm:$0xf] %v511
                %v513 = vld [vmem:[%s351 + $0x780] sm:$0xf]
                %514 = vst [vmem:[%s352 + $0x3c0] sm:$0xf] %v513
                %v515 = vld [vmem:[%s351 + $0x798] sm:$0xf]
                %516 = vst [vmem:[%s352 + $0x3cc] sm:$0xf] %v515
                %v517 = vld [vmem:[%s351 + $0x7b0] sm:$0xf]
                %518 = vst [vmem:[%s352 + $0x3d8] sm:$0xf] %v517
                %v519 = vld [vmem:[%s351 + $0x7c8] sm:$0xf]
                %520 = vst [vmem:[%s352 + $0x3e4] sm:$0xf] %v519
                %v521 = vld [vmem:[%s351 + $0x7e0] sm:$0xf]
                %522 = vst [vmem:[%s352 + $0x3f0] sm:$0xf] %v521
                %v523 = vld [vmem:[%s351 + $0x7f8] sm:$0xf]
                %524 = vst [vmem:[%s352 + $0x3fc] sm:$0xf] %v523
                %v525 = vld [vmem:[%s351 + $0x810] sm:$0xf]
                %526 = vst [vmem:[%s352 + $0x408] sm:$0xf] %v525
                %v527 = vld [vmem:[%s351 + $0x828] sm:$0xf]
                %528 = vst [vmem:[%s352 + $0x414] sm:$0xf] %v527
                %v529 = vld [vmem:[%s351 + $0x840] sm:$0xf]
                %530 = vst [vmem:[%s352 + $0x420] sm:$0xf] %v529
                %v531 = vld [vmem:[%s351 + $0x858] sm:$0xf]
                %532 = vst [vmem:[%s352 + $0x42c] sm:$0xf] %v531
                %v533 = vld [vmem:[%s351 + $0x870] sm:$0xf]
                %534 = vst [vmem:[%s352 + $0x438] sm:$0xf] %v533
                %v535 = vld [vmem:[%s351 + $0x888] sm:$0xf]
                %536 = vst [vmem:[%s352 + $0x444] sm:$0xf] %v535
                %v537 = vld [vmem:[%s351 + $0x8a0] sm:$0xf]
                %538 = vst [vmem:[%s352 + $0x450] sm:$0xf] %v537
                %v539 = vld [vmem:[%s351 + $0x8b8] sm:$0xf]
                %540 = vst [vmem:[%s352 + $0x45c] sm:$0xf] %v539
                %v541 = vld [vmem:[%s351 + $0x8d0] sm:$0xf]
                %542 = vst [vmem:[%s352 + $0x468] sm:$0xf] %v541
                %v543 = vld [vmem:[%s351 + $0x8e8] sm:$0xf]
                %544 = vst [vmem:[%s352 + $0x474] sm:$0xf] %v543
              $region48: #{dueling_ddqn_forward.2} parent=35 // loop_footer
                %s350 = sadd.s32 1, %s346
              $region49: #{dueling_ddqn_forward.2} parent=35 // loop_footer_branch
                %345 = sbr.rel target = $region45
              $region50: #{dueling_ddqn_forward.2} parent=35 // loop_exit
                _
            $region36: #{dueling_ddqn_forward.2} parent=31 // pred_fallthru
              _
          $region32: #{dueling_ddqn_forward.2} parent=27 // pred_fallthru
            _
          %545 = vnop
        $region28: #{dueling_ddqn_forward.2} parent=23 // pred_fallthru
          _
      $region24: #{dueling_ddqn_forward.2} parent=5 // pred_fallthru
        _
      %p546 = scmp.le.s32.totalorder 1, %s9
      %p547 = scmp.lt.s32.totalorder %s9, 3
      %p548 = pnand %p546, %p547
      %p549 = pneg %p548
      // Predicated region
      $region51: #{dueling_ddqn_forward.2} parent=5 // pred_check
        _
      $region52: #{dueling_ddqn_forward.2} parent=5 // pred_check_branch
        %551 = sbr.rel (%p548) target = $region54
      $region53: #{dueling_ddqn_forward.2} parent=5 // pred_region
        %s552 = ssub.s32 %s9, 1
        %s553 = sand.u32 %s22, 1
        %s554 = sand.u32 %s22, 1
        %s555 = smul.addr %s554, 1152
        %s556 = scalar_lea.vmem [#allocation2], %s555
        // Predicated region
        $region55: #{dueling_ddqn_forward.2} parent=53 // pred_check
          %p557 = pneg %p35
        $region56: #{dueling_ddqn_forward.2} parent=53 // pred_check_branch
          %559 = sbr.rel (%p557) target = $region58
        $region57: #{dueling_ddqn_forward.2} parent=53 // pred_region
          _
        $region58: #{dueling_ddqn_forward.2} parent=53 // pred_fallthru
          _
        %s560 = sand.u32 %s22, 1
        %s561 = sand.u32 %s22, 1
        %s562 = smul.addr %s561, 1152
        %s563 = scalar_lea.vmem [#allocation2], %s562
        %p564 = pneg %p35
        %p565 = pneg %p32
        %p566 = pneg %p56
        %p567 = pneg %p53
        %p568 = pneg %p77
        %p569 = pneg %p74
        %p570 = pneg %p103
        %p571 = pneg %p100
        %s572 = sand.u32 %s90, 1
        %s573 = sand.u32 %s90, 1
        %s574 = smul.addr %s573, 48
        %s575 = scalar_lea.vmem [#allocation3], %s574
        %s576 = smul.u32 3, %s14
        %s577 = smul.u32 3, %s14
        %v579 = vld [vmem:[%s1] sm:$0xff]
        %v580 = vld [vmem:[%s1 + $0x8] sm:$0xff]
        %v581 = vld [vmem:[%s1 + $0x10] sm:$0xff]
        %v582 = vld [vmem:[%s1 + $0x18] sm:$0xff]
        %v583 = vld [vmem:[%s556] sm:$0xff]
        %v584 = vld [vmem:[%s556 + $0x8] sm:$0xf]
        %v585 = vld [vmem:[%s556 + $0xc] sm:$0xff]
        %v586 = vld [vmem:[%s556 + $0x14] sm:$0xf]
        %v587 = vld [vmem:[%s556 + $0x18] sm:$0xff]
        %v588 = vld [vmem:[%s556 + $0x20] sm:$0xf]
        %v589 = vld [vmem:[%s556 + $0x24] sm:$0xff]
        %v590 = vld [vmem:[%s556 + $0x2c] sm:$0xf]
        %v591 = vld [vmem:[%s556 + $0x30] sm:$0xff]
        %v592 = vld [vmem:[%s556 + $0x38] sm:$0xf]
        %v593 = vld [vmem:[%s556 + $0x3c] sm:$0xff]
        %v594 = vld [vmem:[%s556 + $0x44] sm:$0xf]
        %v595 = vld [vmem:[%s556 + $0x48] sm:$0xff]
        %v596 = vld [vmem:[%s556 + $0x50] sm:$0xf]
        %v597 = vld [vmem:[%s556 + $0x54] sm:$0xff]
        %v598 = vld [vmem:[%s556 + $0x5c] sm:$0xf]
        %v599 = vld [vmem:[%s556 + $0x60] sm:$0xff]
        %v600 = vld [vmem:[%s556 + $0x68] sm:$0xf]
        %v601 = vld [vmem:[%s556 + $0x6c] sm:$0xff]
        %v602 = vld [vmem:[%s556 + $0x74] sm:$0xf]
        %v603 = vld [vmem:[%s556 + $0x78] sm:$0xff]
        %v604 = vld [vmem:[%s556 + $0x80] sm:$0xf]
        %v605 = vld [vmem:[%s556 + $0x84] sm:$0xff]
        %v606 = vld [vmem:[%s556 + $0x8c] sm:$0xf]
        %v607 = vld [vmem:[%s556 + $0x90] sm:$0xff]
        %v608 = vld [vmem:[%s556 + $0x98] sm:$0xf]
        %v609 = vld [vmem:[%s556 + $0x9c] sm:$0xff]
        %v610 = vld [vmem:[%s556 + $0xa4] sm:$0xf]
        %v611 = vld [vmem:[%s556 + $0xa8] sm:$0xff]
        %v612 = vld [vmem:[%s556 + $0xb0] sm:$0xf]
        %v613 = vld [vmem:[%s556 + $0xb4] sm:$0xff]
        %v614 = vld [vmem:[%s556 + $0xbc] sm:$0xf]
        %v615 = vld [vmem:[%s556 + $0xc0] sm:$0xff]
        %v616 = vld [vmem:[%s556 + $0xc8] sm:$0xf]
        %v617 = vld [vmem:[%s556 + $0xcc] sm:$0xff]
        %v618 = vld [vmem:[%s556 + $0xd4] sm:$0xf]
        %v619 = vld [vmem:[%s556 + $0xd8] sm:$0xff]
        %v620 = vld [vmem:[%s556 + $0xe0] sm:$0xf]
        %v621 = vld [vmem:[%s556 + $0xe4] sm:$0xff]
        %v622 = vld [vmem:[%s556 + $0xec] sm:$0xf]
        %v623 = vld [vmem:[%s556 + $0xf0] sm:$0xff]
        %v624 = vld [vmem:[%s556 + $0xf8] sm:$0xf]
        %v625 = vld [vmem:[%s556 + $0xfc] sm:$0xff]
        %v626 = vld [vmem:[%s556 + $0x104] sm:$0xf]
        %v627 = vld [vmem:[%s556 + $0x108] sm:$0xff]
        %v628 = vld [vmem:[%s556 + $0x110] sm:$0xf]
        %v629 = vld [vmem:[%s556 + $0x114] sm:$0xff]
        %v630 = vld [vmem:[%s556 + $0x11c] sm:$0xf]
        %v635 = vunpack.c.l.b16 %v579
        %v636 = vunpack.c.h.b16 %v579
        %v637 = vunpack.c.l.b16 %v580
        %v638 = vunpack.c.h.b16 %v580
        %v639 = vunpack.c.l.b16 %v581
        %v640 = vunpack.c.h.b16 %v581
        %v641 = vunpack.c.l.b16 %v582
        %v642 = vunpack.c.h.b16 %v582
        %v643 = vpack.c.b16 %v637, %v635
        %v644 = vpack.c.b16 %v638, %v636
        %v645 = vpack.c.b16 %v641, %v639
        %v646 = vpack.c.b16 %v642, %v640
        %v697 = vunpack.c.l.b16 %v583
        %v698 = vunpack.c.h.b16 %v583
        %v699 = vunpack.c.l.b16 %v584
        %v700 = vunpack.c.l.b16 %v585
        %v701 = vunpack.c.h.b16 %v585
        %v702 = vunpack.c.l.b16 %v586
        %v703 = vunpack.c.l.b16 %v587
        %v704 = vunpack.c.h.b16 %v587
        %v705 = vunpack.c.l.b16 %v588
        %v706 = vunpack.c.l.b16 %v589
        %v707 = vunpack.c.h.b16 %v589
        %v708 = vunpack.c.l.b16 %v590
        %v709 = vunpack.c.l.b16 %v591
        %v710 = vunpack.c.h.b16 %v591
        %v711 = vunpack.c.l.b16 %v592
        %v712 = vunpack.c.l.b16 %v593
        %v713 = vunpack.c.h.b16 %v593
        %v714 = vunpack.c.l.b16 %v594
        %v715 = vunpack.c.l.b16 %v595
        %v716 = vunpack.c.h.b16 %v595
        %v717 = vunpack.c.l.b16 %v596
        %v718 = vunpack.c.l.b16 %v597
        %v719 = vunpack.c.h.b16 %v597
        %v720 = vunpack.c.l.b16 %v598
        %v721 = vunpack.c.l.b16 %v599
        %v722 = vunpack.c.h.b16 %v599
        %v723 = vunpack.c.l.b16 %v600
        %v724 = vunpack.c.l.b16 %v601
        %v725 = vunpack.c.h.b16 %v601
        %v726 = vunpack.c.l.b16 %v602
        %v727 = vunpack.c.l.b16 %v603
        %v728 = vunpack.c.h.b16 %v603
        %v729 = vunpack.c.l.b16 %v604
        %v730 = vunpack.c.l.b16 %v605
        %v731 = vunpack.c.h.b16 %v605
        %v732 = vunpack.c.l.b16 %v606
        %v733 = vunpack.c.l.b16 %v607
        %v734 = vunpack.c.h.b16 %v607
        %v735 = vunpack.c.l.b16 %v608
        %v736 = vunpack.c.l.b16 %v609
        %v737 = vunpack.c.h.b16 %v609
        %v738 = vunpack.c.l.b16 %v610
        %v739 = vunpack.c.l.b16 %v611
        %v740 = vunpack.c.h.b16 %v611
        %v741 = vunpack.c.l.b16 %v612
        %v742 = vunpack.c.l.b16 %v613
        %v743 = vunpack.c.h.b16 %v613
        %v744 = vunpack.c.l.b16 %v614
        %v745 = vunpack.c.l.b16 %v615
        %v746 = vunpack.c.h.b16 %v615
        %v747 = vunpack.c.l.b16 %v616
        %v748 = vunpack.c.l.b16 %v617
        %v749 = vunpack.c.h.b16 %v617
        %v750 = vunpack.c.l.b16 %v618
        %v751 = vunpack.c.l.b16 %v619
        %v752 = vunpack.c.h.b16 %v619
        %v753 = vunpack.c.l.b16 %v620
        %v754 = vunpack.c.l.b16 %v621
        %v755 = vunpack.c.h.b16 %v621
        %v756 = vunpack.c.l.b16 %v622
        %v757 = vunpack.c.l.b16 %v623
        %v758 = vunpack.c.h.b16 %v623
        %v759 = vunpack.c.l.b16 %v624
        %v760 = vunpack.c.l.b16 %v625
        %v761 = vunpack.c.h.b16 %v625
        %v762 = vunpack.c.l.b16 %v626
        %v763 = vunpack.c.l.b16 %v627
        %v764 = vunpack.c.h.b16 %v627
        %v765 = vunpack.c.l.b16 %v628
        %v766 = vunpack.c.l.b16 %v629
        %v767 = vunpack.c.h.b16 %v629
        %v768 = vunpack.c.l.b16 %v630
        %v769 = vpack.c.b16 %v700, %v697
        %v770 = vpack.c.b16 %v701, %v698
        %v771 = vpack.c.b16 %v702, %v699
        %v772 = vpack.c.b16 %v706, %v703
        %v773 = vpack.c.b16 %v707, %v704
        %v774 = vpack.c.b16 %v708, %v705
        %v775 = vpack.c.b16 %v712, %v709
        %v776 = vpack.c.b16 %v713, %v710
        %v777 = vpack.c.b16 %v714, %v711
        %v778 = vpack.c.b16 %v718, %v715
        %v779 = vpack.c.b16 %v719, %v716
        %v780 = vpack.c.b16 %v720, %v717
        %v781 = vpack.c.b16 %v724, %v721
        %v782 = vpack.c.b16 %v725, %v722
        %v783 = vpack.c.b16 %v726, %v723
        %v784 = vpack.c.b16 %v730, %v727
        %v785 = vpack.c.b16 %v731, %v728
        %v786 = vpack.c.b16 %v732, %v729
        %v787 = vpack.c.b16 %v736, %v733
        %v788 = vpack.c.b16 %v737, %v734
        %v789 = vpack.c.b16 %v738, %v735
        %v790 = vpack.c.b16 %v742, %v739
        %v791 = vpack.c.b16 %v743, %v740
        %v792 = vpack.c.b16 %v744, %v741
        %v793 = vpack.c.b16 %v748, %v745
        %v794 = vpack.c.b16 %v749, %v746
        %v795 = vpack.c.b16 %v750, %v747
        %v796 = vpack.c.b16 %v754, %v751
        %v797 = vpack.c.b16 %v755, %v752
        %v798 = vpack.c.b16 %v756, %v753
        %v799 = vpack.c.b16 %v760, %v757
        %v800 = vpack.c.b16 %v761, %v758
        %v801 = vpack.c.b16 %v762, %v759
        %v802 = vpack.c.b16 %v766, %v763
        %v803 = vpack.c.b16 %v767, %v764
        %v804 = vpack.c.b16 %v768, %v765
        %vm841 = vcmask 523264
        %v843 = vsel %vm841, %v644, 0
        %v846 = vsel %vm841, %v646, 0
        %848 = vmatprep.subr.bf16.mxu0 %v770
        %849 = vmatpush1.bf16.msra.mxu0 %v769
        %850 = vmatprep.subr.bf16.mxu0 %v773
        %851 = vmatpush1.bf16.msra.mxu0 %v772
        %852 = vmatprep.subr.bf16.mxu0 %v776
        %853 = vmatpush1.bf16.msra.mxu0 %v775
        %854 = vmatprep.subr.bf16.mxu0 %v779
        %855 = vmatpush1.bf16.msra.mxu0 %v778
        %856 = vmatprep.subr.bf16.mxu0 %v782
        %857 = vmatpush1.bf16.msra.mxu0 %v781
        %858 = vmatprep.subr.bf16.mxu0 %v785
        %859 = vmatpush1.bf16.msra.mxu0 %v784
        %860 = vmatprep.subr.bf16.mxu0 %v788
        %861 = vmatpush1.bf16.msra.mxu0 %v787
        %862 = vmatprep.subr.bf16.mxu0 %v791
        %863 = vmatpush1.bf16.msra.mxu0 %v790
        %864 = vmatprep.subr.bf16.mxu0 %v794
        %865 = vmatpush1.bf16.msra.mxu0 %v793
        %866 = vmatprep.subr.bf16.mxu0 %v797
        %867 = vmatpush1.bf16.msra.mxu0 %v796
        %868 = vmatprep.subr.bf16.mxu0 %v800
        %869 = vmatpush1.bf16.msra.mxu0 %v799
        %870 = vmatprep.subr.bf16.mxu0 %v803
        %871 = vmatpush1.bf16.msra.mxu0 %v802
        %872 = vmatprep.subr.bf16.mxu0 0
        %873 = vmatpush1.bf16.msra.mxu0 0
        %874 = vmatprep.subr.bf16.mxu0 0
        %875 = vmatpush1.bf16.msra.mxu0 0
        %876 = vmatprep.subr.bf16.mxu0 0
        %877 = vmatpush1.bf16.msra.mxu0 0
        %878 = vmatprep.subr.bf16.mxu0 0
        %879 = vmatpush1.bf16.msra.mxu0 0
        %880 = vmatprep.mubr.bf16.mxu0 %v843
        %881 = vmatmul.mubr.bf16.gmra.mrb[0].mxu0 %v643
        %v882 = vpop.f32.mrb[0].mxu0
        %v883 = vadd.f32 0.0, %v882
        %v884 = vpop.f32.mrb[0].mxu0
        %v885 = vadd.f32 0.0, %v884
        %v886 = vpop.f32.mrb[0].mxu0
        %v887 = vadd.f32 0.0, %v886
        %v888 = vpop.f32.mrb[0].mxu0
        %v889 = vadd.f32 0.0, %v888
        %890 = vmatprep.mubr.bf16.mxu0 %v846
        %891 = vmatmul.mubr.bf16.gmra.mrb[0].mxu0 %v645
        %v892 = vpop.f32.mrb[0].mxu0
        %v893 = vadd.f32 0.0, %v892
        %v894 = vpop.f32.mrb[0].mxu0
        %v895 = vadd.f32 0.0, %v894
        %v896 = vpop.f32.mrb[0].mxu0
        %v897 = vadd.f32 0.0, %v896
        %v898 = vpop.f32.mrb[0].mxu0
        %v899 = vadd.f32 0.0, %v898
        %900 = vdwg.mxu0
        %901 = vmatprep.subr.bf16.mxu0 0
        %902 = vmatpush1.bf16.msra.mxu0 %v771
        %903 = vmatprep.subr.bf16.mxu0 0
        %904 = vmatpush1.bf16.msra.mxu0 %v774
        %905 = vmatprep.subr.bf16.mxu0 0
        %906 = vmatpush1.bf16.msra.mxu0 %v777
        %907 = vmatprep.subr.bf16.mxu0 0
        %908 = vmatpush1.bf16.msra.mxu0 %v780
        %909 = vmatprep.subr.bf16.mxu0 0
        %910 = vmatpush1.bf16.msra.mxu0 %v783
        %911 = vmatprep.subr.bf16.mxu0 0
        %912 = vmatpush1.bf16.msra.mxu0 %v786
        %913 = vmatprep.subr.bf16.mxu0 0
        %914 = vmatpush1.bf16.msra.mxu0 %v789
        %915 = vmatprep.subr.bf16.mxu0 0
        %916 = vmatpush1.bf16.msra.mxu0 %v792
        %917 = vmatprep.subr.bf16.mxu0 0
        %918 = vmatpush1.bf16.msra.mxu0 %v795
        %919 = vmatprep.subr.bf16.mxu0 0
        %920 = vmatpush1.bf16.msra.mxu0 %v798
        %921 = vmatprep.subr.bf16.mxu0 0
        %922 = vmatpush1.bf16.msra.mxu0 %v801
        %923 = vmatprep.subr.bf16.mxu0 0
        %924 = vmatpush1.bf16.msra.mxu0 %v804
        %925 = vmatprep.subr.bf16.mxu0 0
        %926 = vmatpush1.bf16.msra.mxu0 0
        %927 = vmatprep.subr.bf16.mxu0 0
        %928 = vmatpush1.bf16.msra.mxu0 0
        %929 = vmatprep.subr.bf16.mxu0 0
        %930 = vmatpush1.bf16.msra.mxu0 0
        %931 = vmatprep.subr.bf16.mxu0 0
        %932 = vmatpush1.bf16.msra.mxu0 0
        %933 = vmatprep.mubr.bf16.mxu0 %v843
        %934 = vmatmul.mubr.bf16.gmra.mrb[0].mxu0 %v643
        %v935 = vpop.f32.mrb[0].mxu0
        %v936 = vadd.f32 0.0, %v935
        %v937 = vpop.f32.mrb[0].mxu0
        %v938 = vpop.f32.mrb[0].mxu0
        %v939 = vadd.f32 0.0, %v938
        %v940 = vpop.f32.mrb[0].mxu0
        %941 = vmatprep.mubr.bf16.mxu0 %v846
        %942 = vmatmul.mubr.bf16.gmra.mrb[0].mxu0 %v645
        %v943 = vpop.f32.mrb[0].mxu0
        %v944 = vadd.f32 0.0, %v943
        %v945 = vpop.f32.mrb[0].mxu0
        %v946 = vpop.f32.mrb[0].mxu0
        %v947 = vadd.f32 0.0, %v946
        %v948 = vpop.f32.mrb[0].mxu0
        %949 = vdwg.mxu0
        %s950 = scalar_lea.vmem %s556, 288 [#allocation2]
        %v951 = vld [vmem:[%s950] sm:$0xff]
        %v952 = vld [vmem:[%s950 + $0x8] sm:$0xf]
        %v953 = vld [vmem:[%s950 + $0xc] sm:$0xff]
        %v954 = vld [vmem:[%s950 + $0x14] sm:$0xf]
        %v955 = vld [vmem:[%s950 + $0x18] sm:$0xff]
        %v956 = vld [vmem:[%s950 + $0x20] sm:$0xf]
        %v957 = vld [vmem:[%s950 + $0x24] sm:$0xff]
        %v958 = vld [vmem:[%s950 + $0x2c] sm:$0xf]
        %v959 = vld [vmem:[%s950 + $0x30] sm:$0xff]
        %v960 = vld [vmem:[%s950 + $0x38] sm:$0xf]
        %v961 = vld [vmem:[%s950 + $0x3c] sm:$0xff]
        %v962 = vld [vmem:[%s950 + $0x44] sm:$0xf]
        %v963 = vld [vmem:[%s950 + $0x48] sm:$0xff]
        %v964 = vld [vmem:[%s950 + $0x50] sm:$0xf]
        %v965 = vld [vmem:[%s950 + $0x54] sm:$0xff]
        %v966 = vld [vmem:[%s950 + $0x5c] sm:$0xf]
        %v967 = vld [vmem:[%s950 + $0x60] sm:$0xff]
        %v968 = vld [vmem:[%s950 + $0x68] sm:$0xf]
        %v969 = vld [vmem:[%s950 + $0x6c] sm:$0xff]
        %v970 = vld [vmem:[%s950 + $0x74] sm:$0xf]
        %v971 = vld [vmem:[%s950 + $0x78] sm:$0xff]
        %v972 = vld [vmem:[%s950 + $0x80] sm:$0xf]
        %v973 = vld [vmem:[%s950 + $0x84] sm:$0xff]
        %v974 = vld [vmem:[%s950 + $0x8c] sm:$0xf]
        %v975 = vld [vmem:[%s950 + $0x90] sm:$0xff]
        %v976 = vld [vmem:[%s950 + $0x98] sm:$0xf]
        %v977 = vld [vmem:[%s950 + $0x9c] sm:$0xff]
        %v978 = vld [vmem:[%s950 + $0xa4] sm:$0xf]
        %v979 = vld [vmem:[%s950 + $0xa8] sm:$0xff]
        %v980 = vld [vmem:[%s950 + $0xb0] sm:$0xf]
        %v981 = vld [vmem:[%s950 + $0xb4] sm:$0xff]
        %v982 = vld [vmem:[%s950 + $0xbc] sm:$0xf]
        %v983 = vld [vmem:[%s950 + $0xc0] sm:$0xff]
        %v984 = vld [vmem:[%s950 + $0xc8] sm:$0xf]
        %v985 = vld [vmem:[%s950 + $0xcc] sm:$0xff]
        %v986 = vld [vmem:[%s950 + $0xd4] sm:$0xf]
        %v987 = vld [vmem:[%s950 + $0xd8] sm:$0xff]
        %v988 = vld [vmem:[%s950 + $0xe0] sm:$0xf]
        %v989 = vld [vmem:[%s950 + $0xe4] sm:$0xff]
        %v990 = vld [vmem:[%s950 + $0xec] sm:$0xf]
        %v991 = vld [vmem:[%s950 + $0xf0] sm:$0xff]
        %v992 = vld [vmem:[%s950 + $0xf8] sm:$0xf]
        %v993 = vld [vmem:[%s950 + $0xfc] sm:$0xff]
        %v994 = vld [vmem:[%s950 + $0x104] sm:$0xf]
        %v995 = vld [vmem:[%s950 + $0x108] sm:$0xff]
        %v996 = vld [vmem:[%s950 + $0x110] sm:$0xf]
        %v997 = vld [vmem:[%s950 + $0x114] sm:$0xff]
        %v998 = vld [vmem:[%s950 + $0x11c] sm:$0xf]
        %v1047 = vunpack.c.l.b16 %v951
        %v1048 = vunpack.c.h.b16 %v951
        %v1049 = vunpack.c.l.b16 %v952
        %v1050 = vunpack.c.l.b16 %v953
        %v1051 = vunpack.c.h.b16 %v953
        %v1052 = vunpack.c.l.b16 %v954
        %v1053 = vunpack.c.l.b16 %v955
        %v1054 = vunpack.c.h.b16 %v955
        %v1055 = vunpack.c.l.b16 %v956
        %v1056 = vunpack.c.l.b16 %v957
        %v1057 = vunpack.c.h.b16 %v957
        %v1058 = vunpack.c.l.b16 %v958
        %v1059 = vunpack.c.l.b16 %v959
        %v1060 = vunpack.c.h.b16 %v959
        %v1061 = vunpack.c.l.b16 %v960
        %v1062 = vunpack.c.l.b16 %v961
        %v1063 = vunpack.c.h.b16 %v961
        %v1064 = vunpack.c.l.b16 %v962
        %v1065 = vunpack.c.l.b16 %v963
        %v1066 = vunpack.c.h.b16 %v963
        %v1067 = vunpack.c.l.b16 %v964
        %v1068 = vunpack.c.l.b16 %v965
        %v1069 = vunpack.c.h.b16 %v965
        %v1070 = vunpack.c.l.b16 %v966
        %v1071 = vunpack.c.l.b16 %v967
        %v1072 = vunpack.c.h.b16 %v967
        %v1073 = vunpack.c.l.b16 %v968
        %v1074 = vunpack.c.l.b16 %v969
        %v1075 = vunpack.c.h.b16 %v969
        %v1076 = vunpack.c.l.b16 %v970
        %v1077 = vunpack.c.l.b16 %v971
        %v1078 = vunpack.c.h.b16 %v971
        %v1079 = vunpack.c.l.b16 %v972
        %v1080 = vunpack.c.l.b16 %v973
        %v1081 = vunpack.c.h.b16 %v973
        %v1082 = vunpack.c.l.b16 %v974
        %v1083 = vunpack.c.l.b16 %v975
        %v1084 = vunpack.c.h.b16 %v975
        %v1085 = vunpack.c.l.b16 %v976
        %v1086 = vunpack.c.l.b16 %v977
        %v1087 = vunpack.c.h.b16 %v977
        %v1088 = vunpack.c.l.b16 %v978
        %v1089 = vunpack.c.l.b16 %v979
        %v1090 = vunpack.c.h.b16 %v979
        %v1091 = vunpack.c.l.b16 %v980
        %v1092 = vunpack.c.l.b16 %v981
        %v1093 = vunpack.c.h.b16 %v981
        %v1094 = vunpack.c.l.b16 %v982
        %v1095 = vunpack.c.l.b16 %v983
        %v1096 = vunpack.c.h.b16 %v983
        %v1097 = vunpack.c.l.b16 %v984
        %v1098 = vunpack.c.l.b16 %v985
        %v1099 = vunpack.c.h.b16 %v985
        %v1100 = vunpack.c.l.b16 %v986
        %v1101 = vunpack.c.l.b16 %v987
        %v1102 = vunpack.c.h.b16 %v987
        %v1103 = vunpack.c.l.b16 %v988
        %v1104 = vunpack.c.l.b16 %v989
        %v1105 = vunpack.c.h.b16 %v989
        %v1106 = vunpack.c.l.b16 %v990
        %v1107 = vunpack.c.l.b16 %v991
        %v1108 = vunpack.c.h.b16 %v991
        %v1109 = vunpack.c.l.b16 %v992
        %v1110 = vunpack.c.l.b16 %v993
        %v1111 = vunpack.c.h.b16 %v993
        %v1112 = vunpack.c.l.b16 %v994
        %v1113 = vunpack.c.l.b16 %v995
        %v1114 = vunpack.c.h.b16 %v995
        %v1115 = vunpack.c.l.b16 %v996
        %v1116 = vunpack.c.l.b16 %v997
        %v1117 = vunpack.c.h.b16 %v997
        %v1118 = vunpack.c.l.b16 %v998
        %v1119 = vpack.c.b16 %v1050, %v1047
        %v1120 = vpack.c.b16 %v1051, %v1048
        %v1121 = vpack.c.b16 %v1052, %v1049
        %v1122 = vpack.c.b16 %v1056, %v1053
        %v1123 = vpack.c.b16 %v1057, %v1054
        %v1124 = vpack.c.b16 %v1058, %v1055
        %v1125 = vpack.c.b16 %v1062, %v1059
        %v1126 = vpack.c.b16 %v1063, %v1060
        %v1127 = vpack.c.b16 %v1064, %v1061
        %v1128 = vpack.c.b16 %v1068, %v1065
        %v1129 = vpack.c.b16 %v1069, %v1066
        %v1130 = vpack.c.b16 %v1070, %v1067
        %v1131 = vpack.c.b16 %v1074, %v1071
        %v1132 = vpack.c.b16 %v1075, %v1072
        %v1133 = vpack.c.b16 %v1076, %v1073
        %v1134 = vpack.c.b16 %v1080, %v1077
        %v1135 = vpack.c.b16 %v1081, %v1078
        %v1136 = vpack.c.b16 %v1082, %v1079
        %v1137 = vpack.c.b16 %v1086, %v1083
        %v1138 = vpack.c.b16 %v1087, %v1084
        %v1139 = vpack.c.b16 %v1088, %v1085
        %v1140 = vpack.c.b16 %v1092, %v1089
        %v1141 = vpack.c.b16 %v1093, %v1090
        %v1142 = vpack.c.b16 %v1094, %v1091
        %v1143 = vpack.c.b16 %v1098, %v1095
        %v1144 = vpack.c.b16 %v1099, %v1096
        %v1145 = vpack.c.b16 %v1100, %v1097
        %v1146 = vpack.c.b16 %v1104, %v1101
        %v1147 = vpack.c.b16 %v1105, %v1102
        %v1148 = vpack.c.b16 %v1106, %v1103
        %v1149 = vpack.c.b16 %v1110, %v1107
        %v1150 = vpack.c.b16 %v1111, %v1108
        %v1151 = vpack.c.b16 %v1112, %v1109
        %v1152 = vpack.c.b16 %v1116, %v1113
        %v1153 = vpack.c.b16 %v1117, %v1114
        %v1154 = vpack.c.b16 %v1118, %v1115
        %1191 = vmatprep.subr.bf16.mxu0 %v1120
        %1192 = vmatpush1.bf16.msra.mxu0 %v1119
        %1193 = vmatprep.subr.bf16.mxu0 %v1123
        %1194 = vmatpush1.bf16.msra.mxu0 %v1122
        %1195 = vmatprep.subr.bf16.mxu0 %v1126
        %1196 = vmatpush1.bf16.msra.mxu0 %v1125
        %1197 = vmatprep.subr.bf16.mxu0 %v1129
        %1198 = vmatpush1.bf16.msra.mxu0 %v1128
        %1199 = vmatprep.subr.bf16.mxu0 %v1132
        %1200 = vmatpush1.bf16.msra.mxu0 %v1131
        %1201 = vmatprep.subr.bf16.mxu0 %v1135
        %1202 = vmatpush1.bf16.msra.mxu0 %v1134
        %1203 = vmatprep.subr.bf16.mxu0 %v1138
        %1204 = vmatpush1.bf16.msra.mxu0 %v1137
        %1205 = vmatprep.subr.bf16.mxu0 %v1141
        %1206 = vmatpush1.bf16.msra.mxu0 %v1140
        %1207 = vmatprep.subr.bf16.mxu0 %v1144
        %1208 = vmatpush1.bf16.msra.mxu0 %v1143
        %1209 = vmatprep.subr.bf16.mxu0 %v1147
        %1210 = vmatpush1.bf16.msra.mxu0 %v1146
        %1211 = vmatprep.subr.bf16.mxu0 %v1150
        %1212 = vmatpush1.bf16.msra.mxu0 %v1149
        %1213 = vmatprep.subr.bf16.mxu0 %v1153
        %1214 = vmatpush1.bf16.msra.mxu0 %v1152
        %1215 = vmatprep.subr.bf16.mxu0 0
        %1216 = vmatpush1.bf16.msra.mxu0 0
        %1217 = vmatprep.subr.bf16.mxu0 0
        %1218 = vmatpush1.bf16.msra.mxu0 0
        %1219 = vmatprep.subr.bf16.mxu0 0
        %1220 = vmatpush1.bf16.msra.mxu0 0
        %1221 = vmatprep.subr.bf16.mxu0 0
        %1222 = vmatpush1.bf16.msra.mxu0 0
        %1223 = vmatprep.mubr.bf16.mxu0 %v843
        %1224 = vmatmul.mubr.bf16.gmra.mrb[0].mxu0 %v643
        %v1225 = vpop.f32.mrb[0].mxu0
        %v1226 = vadd.f32 0.0, %v1225
        %v1227 = vpop.f32.mrb[0].mxu0
        %v1228 = vadd.f32 0.0, %v1227
        %v1229 = vpop.f32.mrb[0].mxu0
        %v1230 = vadd.f32 0.0, %v1229
        %v1231 = vpop.f32.mrb[0].mxu0
        %v1232 = vadd.f32 0.0, %v1231
        %1233 = vmatprep.mubr.bf16.mxu0 %v846
        %1234 = vmatmul.mubr.bf16.gmra.mrb[0].mxu0 %v645
        %v1235 = vpop.f32.mrb[0].mxu0
        %v1236 = vadd.f32 0.0, %v1235
        %v1237 = vpop.f32.mrb[0].mxu0
        %v1238 = vadd.f32 0.0, %v1237
        %v1239 = vpop.f32.mrb[0].mxu0
        %v1240 = vadd.f32 0.0, %v1239
        %v1241 = vpop.f32.mrb[0].mxu0
        %v1242 = vadd.f32 0.0, %v1241
        %1243 = vdwg.mxu0
        %1244 = vmatprep.subr.bf16.mxu0 0
        %1245 = vmatpush1.bf16.msra.mxu0 %v1121
        %1246 = vmatprep.subr.bf16.mxu0 0
        %1247 = vmatpush1.bf16.msra.mxu0 %v1124
        %1248 = vmatprep.subr.bf16.mxu0 0
        %1249 = vmatpush1.bf16.msra.mxu0 %v1127
        %1250 = vmatprep.subr.bf16.mxu0 0
        %1251 = vmatpush1.bf16.msra.mxu0 %v1130
        %1252 = vmatprep.subr.bf16.mxu0 0
        %1253 = vmatpush1.bf16.msra.mxu0 %v1133
        %1254 = vmatprep.subr.bf16.mxu0 0
        %1255 = vmatpush1.bf16.msra.mxu0 %v1136
        %1256 = vmatprep.subr.bf16.mxu0 0
        %1257 = vmatpush1.bf16.msra.mxu0 %v1139
        %1258 = vmatprep.subr.bf16.mxu0 0
        %1259 = vmatpush1.bf16.msra.mxu0 %v1142
        %1260 = vmatprep.subr.bf16.mxu0 0
        %1261 = vmatpush1.bf16.msra.mxu0 %v1145
        %1262 = vmatprep.subr.bf16.mxu0 0
        %1263 = vmatpush1.bf16.msra.mxu0 %v1148
        %1264 = vmatprep.subr.bf16.mxu0 0
        %1265 = vmatpush1.bf16.msra.mxu0 %v1151
        %1266 = vmatprep.subr.bf16.mxu0 0
        %1267 = vmatpush1.bf16.msra.mxu0 %v1154
        %1268 = vmatprep.subr.bf16.mxu0 0
        %1269 = vmatpush1.bf16.msra.mxu0 0
        %1270 = vmatprep.subr.bf16.mxu0 0
        %1271 = vmatpush1.bf16.msra.mxu0 0
        %1272 = vmatprep.subr.bf16.mxu0 0
        %1273 = vmatpush1.bf16.msra.mxu0 0
        %1274 = vmatprep.subr.bf16.mxu0 0
        %1275 = vmatpush1.bf16.msra.mxu0 0
        %1276 = vmatprep.mubr.bf16.mxu0 %v843
        %1277 = vmatmul.mubr.bf16.gmra.mrb[0].mxu0 %v643
        %v1278 = vpop.f32.mrb[0].mxu0
        %v1279 = vadd.f32 0.0, %v1278
        %v1280 = vpop.f32.mrb[0].mxu0
        %v1281 = vpop.f32.mrb[0].mxu0
        %v1282 = vadd.f32 0.0, %v1281
        %v1283 = vpop.f32.mrb[0].mxu0
        %1284 = vmatprep.mubr.bf16.mxu0 %v846
        %1285 = vmatmul.mubr.bf16.gmra.mrb[0].mxu0 %v645
        %v1286 = vpop.f32.mrb[0].mxu0
        %v1287 = vadd.f32 0.0, %v1286
        %v1288 = vpop.f32.mrb[0].mxu0
        %v1289 = vpop.f32.mrb[0].mxu0
        %v1290 = vadd.f32 0.0, %v1289
        %v1291 = vpop.f32.mrb[0].mxu0
        %1292 = vdwg.mxu0
        %s1293 = scalar_lea.vmem %s556, 576 [#allocation2]
        %v1294 = vld [vmem:[%s1293] sm:$0xff]
        %v1295 = vld [vmem:[%s1293 + $0x8] sm:$0xf]
        %v1296 = vld [vmem:[%s1293 + $0xc] sm:$0xff]
        %v1297 = vld [vmem:[%s1293 + $0x14] sm:$0xf]
        %v1298 = vld [vmem:[%s1293 + $0x18] sm:$0xff]
        %v1299 = vld [vmem:[%s1293 + $0x20] sm:$0xf]
        %v1300 = vld [vmem:[%s1293 + $0x24] sm:$0xff]
        %v1301 = vld [vmem:[%s1293 + $0x2c] sm:$0xf]
        %v1302 = vld [vmem:[%s1293 + $0x30] sm:$0xff]
        %v1303 = vld [vmem:[%s1293 + $0x38] sm:$0xf]
        %v1304 = vld [vmem:[%s1293 + $0x3c] sm:$0xff]
        %v1305 = vld [vmem:[%s1293 + $0x44] sm:$0xf]
        %v1306 = vld [vmem:[%s1293 + $0x48] sm:$0xff]
        %v1307 = vld [vmem:[%s1293 + $0x50] sm:$0xf]
        %v1308 = vld [vmem:[%s1293 + $0x54] sm:$0xff]
        %v1309 = vld [vmem:[%s1293 + $0x5c] sm:$0xf]
        %v1310 = vld [vmem:[%s1293 + $0x60] sm:$0xff]
        %v1311 = vld [vmem:[%s1293 + $0x68] sm:$0xf]
        %v1312 = vld [vmem:[%s1293 + $0x6c] sm:$0xff]
        %v1313 = vld [vmem:[%s1293 + $0x74] sm:$0xf]
        %v1314 = vld [vmem:[%s1293 + $0x78] sm:$0xff]
        %v1315 = vld [vmem:[%s1293 + $0x80] sm:$0xf]
        %v1316 = vld [vmem:[%s1293 + $0x84] sm:$0xff]
        %v1317 = vld [vmem:[%s1293 + $0x8c] sm:$0xf]
        %v1318 = vld [vmem:[%s1293 + $0x90] sm:$0xff]
        %v1319 = vld [vmem:[%s1293 + $0x98] sm:$0xf]
        %v1320 = vld [vmem:[%s1293 + $0x9c] sm:$0xff]
        %v1321 = vld [vmem:[%s1293 + $0xa4] sm:$0xf]
        %v1322 = vld [vmem:[%s1293 + $0xa8] sm:$0xff]
        %v1323 = vld [vmem:[%s1293 + $0xb0] sm:$0xf]
        %v1324 = vld [vmem:[%s1293 + $0xb4] sm:$0xff]
        %v1325 = vld [vmem:[%s1293 + $0xbc] sm:$0xf]
        %v1326 = vld [vmem:[%s1293 + $0xc0] sm:$0xff]
        %v1327 = vld [vmem:[%s1293 + $0xc8] sm:$0xf]
        %v1328 = vld [vmem:[%s1293 + $0xcc] sm:$0xff]
        %v1329 = vld [vmem:[%s1293 + $0xd4] sm:$0xf]
        %v1330 = vld [vmem:[%s1293 + $0xd8] sm:$0xff]
        %v1331 = vld [vmem:[%s1293 + $0xe0] sm:$0xf]
        %v1332 = vld [vmem:[%s1293 + $0xe4] sm:$0xff]
        %v1333 = vld [vmem:[%s1293 + $0xec] sm:$0xf]
        %v1334 = vld [vmem:[%s1293 + $0xf0] sm:$0xff]
        %v1335 = vld [vmem:[%s1293 + $0xf8] sm:$0xf]
        %v1336 = vld [vmem:[%s1293 + $0xfc] sm:$0xff]
        %v1337 = vld [vmem:[%s1293 + $0x104] sm:$0xf]
        %v1338 = vld [vmem:[%s1293 + $0x108] sm:$0xff]
        %v1339 = vld [vmem:[%s1293 + $0x110] sm:$0xf]
        %v1340 = vld [vmem:[%s1293 + $0x114] sm:$0xff]
        %v1341 = vld [vmem:[%s1293 + $0x11c] sm:$0xf]
        %v1390 = vunpack.c.l.b16 %v1294
        %v1391 = vunpack.c.h.b16 %v1294
        %v1392 = vunpack.c.l.b16 %v1295
        %v1393 = vunpack.c.l.b16 %v1296
        %v1394 = vunpack.c.h.b16 %v1296
        %v1395 = vunpack.c.l.b16 %v1297
        %v1396 = vunpack.c.l.b16 %v1298
        %v1397 = vunpack.c.h.b16 %v1298
        %v1398 = vunpack.c.l.b16 %v1299
        %v1399 = vunpack.c.l.b16 %v1300
        %v1400 = vunpack.c.h.b16 %v1300
        %v1401 = vunpack.c.l.b16 %v1301
        %v1402 = vunpack.c.l.b16 %v1302
        %v1403 = vunpack.c.h.b16 %v1302
        %v1404 = vunpack.c.l.b16 %v1303
        %v1405 = vunpack.c.l.b16 %v1304
        %v1406 = vunpack.c.h.b16 %v1304
        %v1407 = vunpack.c.l.b16 %v1305
        %v1408 = vunpack.c.l.b16 %v1306
        %v1409 = vunpack.c.h.b16 %v1306
        %v1410 = vunpack.c.l.b16 %v1307
        %v1411 = vunpack.c.l.b16 %v1308
        %v1412 = vunpack.c.h.b16 %v1308
        %v1413 = vunpack.c.l.b16 %v1309
        %v1414 = vunpack.c.l.b16 %v1310
        %v1415 = vunpack.c.h.b16 %v1310
        %v1416 = vunpack.c.l.b16 %v1311
        %v1417 = vunpack.c.l.b16 %v1312
        %v1418 = vunpack.c.h.b16 %v1312
        %v1419 = vunpack.c.l.b16 %v1313
        %v1420 = vunpack.c.l.b16 %v1314
        %v1421 = vunpack.c.h.b16 %v1314
        %v1422 = vunpack.c.l.b16 %v1315
        %v1423 = vunpack.c.l.b16 %v1316
        %v1424 = vunpack.c.h.b16 %v1316
        %v1425 = vunpack.c.l.b16 %v1317
        %v1426 = vunpack.c.l.b16 %v1318
        %v1427 = vunpack.c.h.b16 %v1318
        %v1428 = vunpack.c.l.b16 %v1319
        %v1429 = vunpack.c.l.b16 %v1320
        %v1430 = vunpack.c.h.b16 %v1320
        %v1431 = vunpack.c.l.b16 %v1321
        %v1432 = vunpack.c.l.b16 %v1322
        %v1433 = vunpack.c.h.b16 %v1322
        %v1434 = vunpack.c.l.b16 %v1323
        %v1435 = vunpack.c.l.b16 %v1324
        %v1436 = vunpack.c.h.b16 %v1324
        %v1437 = vunpack.c.l.b16 %v1325
        %v1438 = vunpack.c.l.b16 %v1326
        %v1439 = vunpack.c.h.b16 %v1326
        %v1440 = vunpack.c.l.b16 %v1327
        %v1441 = vunpack.c.l.b16 %v1328
        %v1442 = vunpack.c.h.b16 %v1328
        %v1443 = vunpack.c.l.b16 %v1329
        %v1444 = vunpack.c.l.b16 %v1330
        %v1445 = vunpack.c.h.b16 %v1330
        %v1446 = vunpack.c.l.b16 %v1331
        %v1447 = vunpack.c.l.b16 %v1332
        %v1448 = vunpack.c.h.b16 %v1332
        %v1449 = vunpack.c.l.b16 %v1333
        %v1450 = vunpack.c.l.b16 %v1334
        %v1451 = vunpack.c.h.b16 %v1334
        %v1452 = vunpack.c.l.b16 %v1335
        %v1453 = vunpack.c.l.b16 %v1336
        %v1454 = vunpack.c.h.b16 %v1336
        %v1455 = vunpack.c.l.b16 %v1337
        %v1456 = vunpack.c.l.b16 %v1338
        %v1457 = vunpack.c.h.b16 %v1338
        %v1458 = vunpack.c.l.b16 %v1339
        %v1459 = vunpack.c.l.b16 %v1340
        %v1460 = vunpack.c.h.b16 %v1340
        %v1461 = vunpack.c.l.b16 %v1341
        %v1462 = vpack.c.b16 %v1393, %v1390
        %v1463 = vpack.c.b16 %v1394, %v1391
        %v1464 = vpack.c.b16 %v1395, %v1392
        %v1465 = vpack.c.b16 %v1399, %v1396
        %v1466 = vpack.c.b16 %v1400, %v1397
        %v1467 = vpack.c.b16 %v1401, %v1398
        %v1468 = vpack.c.b16 %v1405, %v1402
        %v1469 = vpack.c.b16 %v1406, %v1403
        %v1470 = vpack.c.b16 %v1407, %v1404
        %v1471 = vpack.c.b16 %v1411, %v1408
        %v1472 = vpack.c.b16 %v1412, %v1409
        %v1473 = vpack.c.b16 %v1413, %v1410
        %v1474 = vpack.c.b16 %v1417, %v1414
        %v1475 = vpack.c.b16 %v1418, %v1415
        %v1476 = vpack.c.b16 %v1419, %v1416
        %v1477 = vpack.c.b16 %v1423, %v1420
        %v1478 = vpack.c.b16 %v1424, %v1421
        %v1479 = vpack.c.b16 %v1425, %v1422
        %v1480 = vpack.c.b16 %v1429, %v1426
        %v1481 = vpack.c.b16 %v1430, %v1427
        %v1482 = vpack.c.b16 %v1431, %v1428
        %v1483 = vpack.c.b16 %v1435, %v1432
        %v1484 = vpack.c.b16 %v1436, %v1433
        %v1485 = vpack.c.b16 %v1437, %v1434
        %v1486 = vpack.c.b16 %v1441, %v1438
        %v1487 = vpack.c.b16 %v1442, %v1439
        %v1488 = vpack.c.b16 %v1443, %v1440
        %v1489 = vpack.c.b16 %v1447, %v1444
        %v1490 = vpack.c.b16 %v1448, %v1445
        %v1491 = vpack.c.b16 %v1449, %v1446
        %v1492 = vpack.c.b16 %v1453, %v1450
        %v1493 = vpack.c.b16 %v1454, %v1451
        %v1494 = vpack.c.b16 %v1455, %v1452
        %v1495 = vpack.c.b16 %v1459, %v1456
        %v1496 = vpack.c.b16 %v1460, %v1457
        %v1497 = vpack.c.b16 %v1461, %v1458
        %1534 = vmatprep.subr.bf16.mxu0 %v1463
        %1535 = vmatpush1.bf16.msra.mxu0 %v1462
        %1536 = vmatprep.subr.bf16.mxu0 %v1466
        %1537 = vmatpush1.bf16.msra.mxu0 %v1465
        %1538 = vmatprep.subr.bf16.mxu0 %v1469
        %1539 = vmatpush1.bf16.msra.mxu0 %v1468
        %1540 = vmatprep.subr.bf16.mxu0 %v1472
        %1541 = vmatpush1.bf16.msra.mxu0 %v1471
        %1542 = vmatprep.subr.bf16.mxu0 %v1475
        %1543 = vmatpush1.bf16.msra.mxu0 %v1474
        %1544 = vmatprep.subr.bf16.mxu0 %v1478
        %1545 = vmatpush1.bf16.msra.mxu0 %v1477
        %1546 = vmatprep.subr.bf16.mxu0 %v1481
        %1547 = vmatpush1.bf16.msra.mxu0 %v1480
        %1548 = vmatprep.subr.bf16.mxu0 %v1484
        %1549 = vmatpush1.bf16.msra.mxu0 %v1483
        %1550 = vmatprep.subr.bf16.mxu0 %v1487
        %1551 = vmatpush1.bf16.msra.mxu0 %v1486
        %1552 = vmatprep.subr.bf16.mxu0 %v1490
        %1553 = vmatpush1.bf16.msra.mxu0 %v1489
        %1554 = vmatprep.subr.bf16.mxu0 %v1493
        %1555 = vmatpush1.bf16.msra.mxu0 %v1492
        %1556 = vmatprep.subr.bf16.mxu0 %v1496
        %1557 = vmatpush1.bf16.msra.mxu0 %v1495
        %1558 = vmatprep.subr.bf16.mxu0 0
        %1559 = vmatpush1.bf16.msra.mxu0 0
        %1560 = vmatprep.subr.bf16.mxu0 0
        %1561 = vmatpush1.bf16.msra.mxu0 0
        %1562 = vmatprep.subr.bf16.mxu0 0
        %1563 = vmatpush1.bf16.msra.mxu0 0
        %1564 = vmatprep.subr.bf16.mxu0 0
        %1565 = vmatpush1.bf16.msra.mxu0 0
        %1566 = vmatprep.mubr.bf16.mxu0 %v843
        %1567 = vmatmul.mubr.bf16.gmra.mrb[0].mxu0 %v643
        %v1568 = vpop.f32.mrb[0].mxu0
        %v1569 = vadd.f32 0.0, %v1568
        %v1570 = vpop.f32.mrb[0].mxu0
        %v1571 = vadd.f32 0.0, %v1570
        %v1572 = vpop.f32.mrb[0].mxu0
        %v1573 = vadd.f32 0.0, %v1572
        %v1574 = vpop.f32.mrb[0].mxu0
        %v1575 = vadd.f32 0.0, %v1574
        %1576 = vmatprep.mubr.bf16.mxu0 %v846
        %1577 = vmatmul.mubr.bf16.gmra.mrb[0].mxu0 %v645
        %v1578 = vpop.f32.mrb[0].mxu0
        %v1579 = vadd.f32 0.0, %v1578
        %v1580 = vpop.f32.mrb[0].mxu0
        %v1581 = vadd.f32 0.0, %v1580
        %v1582 = vpop.f32.mrb[0].mxu0
        %v1583 = vadd.f32 0.0, %v1582
        %v1584 = vpop.f32.mrb[0].mxu0
        %v1585 = vadd.f32 0.0, %v1584
        %1586 = vdwg.mxu0
        %1587 = vmatprep.subr.bf16.mxu0 0
        %1588 = vmatpush1.bf16.msra.mxu0 %v1464
        %1589 = vmatprep.subr.bf16.mxu0 0
        %1590 = vmatpush1.bf16.msra.mxu0 %v1467
        %1591 = vmatprep.subr.bf16.mxu0 0
        %1592 = vmatpush1.bf16.msra.mxu0 %v1470
        %1593 = vmatprep.subr.bf16.mxu0 0
        %1594 = vmatpush1.bf16.msra.mxu0 %v1473
        %1595 = vmatprep.subr.bf16.mxu0 0
        %1596 = vmatpush1.bf16.msra.mxu0 %v1476
        %1597 = vmatprep.subr.bf16.mxu0 0
        %1598 = vmatpush1.bf16.msra.mxu0 %v1479
        %1599 = vmatprep.subr.bf16.mxu0 0
        %1600 = vmatpush1.bf16.msra.mxu0 %v1482
        %1601 = vmatprep.subr.bf16.mxu0 0
        %1602 = vmatpush1.bf16.msra.mxu0 %v1485
        %1603 = vmatprep.subr.bf16.mxu0 0
        %1604 = vmatpush1.bf16.msra.mxu0 %v1488
        %1605 = vmatprep.subr.bf16.mxu0 0
        %1606 = vmatpush1.bf16.msra.mxu0 %v1491
        %1607 = vmatprep.subr.bf16.mxu0 0
        %1608 = vmatpush1.bf16.msra.mxu0 %v1494
        %1609 = vmatprep.subr.bf16.mxu0 0
        %1610 = vmatpush1.bf16.msra.mxu0 %v1497
        %1611 = vmatprep.subr.bf16.mxu0 0
        %1612 = vmatpush1.bf16.msra.mxu0 0
        %1613 = vmatprep.subr.bf16.mxu0 0
        %1614 = vmatpush1.bf16.msra.mxu0 0
        %1615 = vmatprep.subr.bf16.mxu0 0
        %1616 = vmatpush1.bf16.msra.mxu0 0
        %1617 = vmatprep.subr.bf16.mxu0 0
        %1618 = vmatpush1.bf16.msra.mxu0 0
        %1619 = vmatprep.mubr.bf16.mxu0 %v843
        %1620 = vmatmul.mubr.bf16.gmra.mrb[0].mxu0 %v643
        %v1621 = vpop.f32.mrb[0].mxu0
        %v1622 = vadd.f32 0.0, %v1621
        %v1623 = vpop.f32.mrb[0].mxu0
        %v1624 = vpop.f32.mrb[0].mxu0
        %v1625 = vadd.f32 0.0, %v1624
        %v1626 = vpop.f32.mrb[0].mxu0
        %1627 = vmatprep.mubr.bf16.mxu0 %v846
        %1628 = vmatmul.mubr.bf16.gmra.mrb[0].mxu0 %v645
        %v1629 = vpop.f32.mrb[0].mxu0
        %v1630 = vadd.f32 0.0, %v1629
        %v1631 = vpop.f32.mrb[0].mxu0
        %v1632 = vpop.f32.mrb[0].mxu0
        %v1633 = vadd.f32 0.0, %v1632
        %v1634 = vpop.f32.mrb[0].mxu0
        %1635 = vdwg.mxu0
        %s1636 = scalar_lea.vmem %s556, 864 [#allocation2]
        %v1637 = vld [vmem:[%s1636] sm:$0xff]
        %v1638 = vld [vmem:[%s1636 + $0x8] sm:$0xf]
        %v1639 = vld [vmem:[%s1636 + $0xc] sm:$0xff]
        %v1640 = vld [vmem:[%s1636 + $0x14] sm:$0xf]
        %v1641 = vld [vmem:[%s1636 + $0x18] sm:$0xff]
        %v1642 = vld [vmem:[%s1636 + $0x20] sm:$0xf]
        %v1643 = vld [vmem:[%s1636 + $0x24] sm:$0xff]
        %v1644 = vld [vmem:[%s1636 + $0x2c] sm:$0xf]
        %v1645 = vld [vmem:[%s1636 + $0x30] sm:$0xff]
        %v1646 = vld [vmem:[%s1636 + $0x38] sm:$0xf]
        %v1647 = vld [vmem:[%s1636 + $0x3c] sm:$0xff]
        %v1648 = vld [vmem:[%s1636 + $0x44] sm:$0xf]
        %v1649 = vld [vmem:[%s1636 + $0x48] sm:$0xff]
        %v1650 = vld [vmem:[%s1636 + $0x50] sm:$0xf]
        %v1651 = vld [vmem:[%s1636 + $0x54] sm:$0xff]
        %v1652 = vld [vmem:[%s1636 + $0x5c] sm:$0xf]
        %v1653 = vld [vmem:[%s1636 + $0x60] sm:$0xff]
        %v1654 = vld [vmem:[%s1636 + $0x68] sm:$0xf]
        %v1655 = vld [vmem:[%s1636 + $0x6c] sm:$0xff]
        %v1656 = vld [vmem:[%s1636 + $0x74] sm:$0xf]
        %v1657 = vld [vmem:[%s1636 + $0x78] sm:$0xff]
        %v1658 = vld [vmem:[%s1636 + $0x80] sm:$0xf]
        %v1659 = vld [vmem:[%s1636 + $0x84] sm:$0xff]
        %v1660 = vld [vmem:[%s1636 + $0x8c] sm:$0xf]
        %v1661 = vld [vmem:[%s1636 + $0x90] sm:$0xff]
        %v1662 = vld [vmem:[%s1636 + $0x98] sm:$0xf]
        %v1663 = vld [vmem:[%s1636 + $0x9c] sm:$0xff]
        %v1664 = vld [vmem:[%s1636 + $0xa4] sm:$0xf]
        %v1665 = vld [vmem:[%s1636 + $0xa8] sm:$0xff]
        %v1666 = vld [vmem:[%s1636 + $0xb0] sm:$0xf]
        %v1667 = vld [vmem:[%s1636 + $0xb4] sm:$0xff]
        %v1668 = vld [vmem:[%s1636 + $0xbc] sm:$0xf]
        %v1669 = vld [vmem:[%s1636 + $0xc0] sm:$0xff]
        %v1670 = vld [vmem:[%s1636 + $0xc8] sm:$0xf]
        %v1671 = vld [vmem:[%s1636 + $0xcc] sm:$0xff]
        %v1672 = vld [vmem:[%s1636 + $0xd4] sm:$0xf]
        %v1673 = vld [vmem:[%s1636 + $0xd8] sm:$0xff]
        %v1674 = vld [vmem:[%s1636 + $0xe0] sm:$0xf]
        %v1675 = vld [vmem:[%s1636 + $0xe4] sm:$0xff]
        %v1676 = vld [vmem:[%s1636 + $0xec] sm:$0xf]
        %v1677 = vld [vmem:[%s1636 + $0xf0] sm:$0xff]
        %v1678 = vld [vmem:[%s1636 + $0xf8] sm:$0xf]
        %v1679 = vld [vmem:[%s1636 + $0xfc] sm:$0xff]
        %v1680 = vld [vmem:[%s1636 + $0x104] sm:$0xf]
        %v1681 = vld [vmem:[%s1636 + $0x108] sm:$0xff]
        %v1682 = vld [vmem:[%s1636 + $0x110] sm:$0xf]
        %v1683 = vld [vmem:[%s1636 + $0x114] sm:$0xff]
        %v1684 = vld [vmem:[%s1636 + $0x11c] sm:$0xf]
        %v1733 = vunpack.c.l.b16 %v1637
        %v1734 = vunpack.c.h.b16 %v1637
        %v1735 = vunpack.c.l.b16 %v1638
        %v1736 = vunpack.c.l.b16 %v1639
        %v1737 = vunpack.c.h.b16 %v1639
        %v1738 = vunpack.c.l.b16 %v1640
        %v1739 = vunpack.c.l.b16 %v1641
        %v1740 = vunpack.c.h.b16 %v1641
        %v1741 = vunpack.c.l.b16 %v1642
        %v1742 = vunpack.c.l.b16 %v1643
        %v1743 = vunpack.c.h.b16 %v1643
        %v1744 = vunpack.c.l.b16 %v1644
        %v1745 = vunpack.c.l.b16 %v1645
        %v1746 = vunpack.c.h.b16 %v1645
        %v1747 = vunpack.c.l.b16 %v1646
        %v1748 = vunpack.c.l.b16 %v1647
        %v1749 = vunpack.c.h.b16 %v1647
        %v1750 = vunpack.c.l.b16 %v1648
        %v1751 = vunpack.c.l.b16 %v1649
        %v1752 = vunpack.c.h.b16 %v1649
        %v1753 = vunpack.c.l.b16 %v1650
        %v1754 = vunpack.c.l.b16 %v1651
        %v1755 = vunpack.c.h.b16 %v1651
        %v1756 = vunpack.c.l.b16 %v1652
        %v1757 = vunpack.c.l.b16 %v1653
        %v1758 = vunpack.c.h.b16 %v1653
        %v1759 = vunpack.c.l.b16 %v1654
        %v1760 = vunpack.c.l.b16 %v1655
        %v1761 = vunpack.c.h.b16 %v1655
        %v1762 = vunpack.c.l.b16 %v1656
        %v1763 = vunpack.c.l.b16 %v1657
        %v1764 = vunpack.c.h.b16 %v1657
        %v1765 = vunpack.c.l.b16 %v1658
        %v1766 = vunpack.c.l.b16 %v1659
        %v1767 = vunpack.c.h.b16 %v1659
        %v1768 = vunpack.c.l.b16 %v1660
        %v1769 = vunpack.c.l.b16 %v1661
        %v1770 = vunpack.c.h.b16 %v1661
        %v1771 = vunpack.c.l.b16 %v1662
        %v1772 = vunpack.c.l.b16 %v1663
        %v1773 = vunpack.c.h.b16 %v1663
        %v1774 = vunpack.c.l.b16 %v1664
        %v1775 = vunpack.c.l.b16 %v1665
        %v1776 = vunpack.c.h.b16 %v1665
        %v1777 = vunpack.c.l.b16 %v1666
        %v1778 = vunpack.c.l.b16 %v1667
        %v1779 = vunpack.c.h.b16 %v1667
        %v1780 = vunpack.c.l.b16 %v1668
        %v1781 = vunpack.c.l.b16 %v1669
        %v1782 = vunpack.c.h.b16 %v1669
        %v1783 = vunpack.c.l.b16 %v1670
        %v1784 = vunpack.c.l.b16 %v1671
        %v1785 = vunpack.c.h.b16 %v1671
        %v1786 = vunpack.c.l.b16 %v1672
        %v1787 = vunpack.c.l.b16 %v1673
        %v1788 = vunpack.c.h.b16 %v1673
        %v1789 = vunpack.c.l.b16 %v1674
        %v1790 = vunpack.c.l.b16 %v1675
        %v1791 = vunpack.c.h.b16 %v1675
        %v1792 = vunpack.c.l.b16 %v1676
        %v1793 = vunpack.c.l.b16 %v1677
        %v1794 = vunpack.c.h.b16 %v1677
        %v1795 = vunpack.c.l.b16 %v1678
        %v1796 = vunpack.c.l.b16 %v1679
        %v1797 = vunpack.c.h.b16 %v1679
        %v1798 = vunpack.c.l.b16 %v1680
        %v1799 = vunpack.c.l.b16 %v1681
        %v1800 = vunpack.c.h.b16 %v1681
        %v1801 = vunpack.c.l.b16 %v1682
        %v1802 = vunpack.c.l.b16 %v1683
        %v1803 = vunpack.c.h.b16 %v1683
        %v1804 = vunpack.c.l.b16 %v1684
        %v1805 = vpack.c.b16 %v1736, %v1733
        %v1806 = vpack.c.b16 %v1737, %v1734
        %v1807 = vpack.c.b16 %v1738, %v1735
        %v1808 = vpack.c.b16 %v1742, %v1739
        %v1809 = vpack.c.b16 %v1743, %v1740
        %v1810 = vpack.c.b16 %v1744, %v1741
        %v1811 = vpack.c.b16 %v1748, %v1745
        %v1812 = vpack.c.b16 %v1749, %v1746
        %v1813 = vpack.c.b16 %v1750, %v1747
        %v1814 = vpack.c.b16 %v1754, %v1751
        %v1815 = vpack.c.b16 %v1755, %v1752
        %v1816 = vpack.c.b16 %v1756, %v1753
        %v1817 = vpack.c.b16 %v1760, %v1757
        %v1818 = vpack.c.b16 %v1761, %v1758
        %v1819 = vpack.c.b16 %v1762, %v1759
        %v1820 = vpack.c.b16 %v1766, %v1763
        %v1821 = vpack.c.b16 %v1767, %v1764
        %v1822 = vpack.c.b16 %v1768, %v1765
        %v1823 = vpack.c.b16 %v1772, %v1769
        %v1824 = vpack.c.b16 %v1773, %v1770
        %v1825 = vpack.c.b16 %v1774, %v1771
        %v1826 = vpack.c.b16 %v1778, %v1775
        %v1827 = vpack.c.b16 %v1779, %v1776
        %v1828 = vpack.c.b16 %v1780, %v1777
        %v1829 = vpack.c.b16 %v1784, %v1781
        %v1830 = vpack.c.b16 %v1785, %v1782
        %v1831 = vpack.c.b16 %v1786, %v1783
        %v1832 = vpack.c.b16 %v1790, %v1787
        %v1833 = vpack.c.b16 %v1791, %v1788
        %v1834 = vpack.c.b16 %v1792, %v1789
        %v1835 = vpack.c.b16 %v1796, %v1793
        %v1836 = vpack.c.b16 %v1797, %v1794
        %v1837 = vpack.c.b16 %v1798, %v1795
        %v1838 = vpack.c.b16 %v1802, %v1799
        %v1839 = vpack.c.b16 %v1803, %v1800
        %v1840 = vpack.c.b16 %v1804, %v1801
        %1877 = vmatprep.subr.bf16.mxu0 %v1806
        %1878 = vmatpush1.bf16.msra.mxu0 %v1805
        %1879 = vmatprep.subr.bf16.mxu0 %v1809
        %1880 = vmatpush1.bf16.msra.mxu0 %v1808
        %1881 = vmatprep.subr.bf16.mxu0 %v1812
        %1882 = vmatpush1.bf16.msra.mxu0 %v1811
        %1883 = vmatprep.subr.bf16.mxu0 %v1815
        %1884 = vmatpush1.bf16.msra.mxu0 %v1814
        %1885 = vmatprep.subr.bf16.mxu0 %v1818
        %1886 = vmatpush1.bf16.msra.mxu0 %v1817
        %1887 = vmatprep.subr.bf16.mxu0 %v1821
        %1888 = vmatpush1.bf16.msra.mxu0 %v1820
        %1889 = vmatprep.subr.bf16.mxu0 %v1824
        %1890 = vmatpush1.bf16.msra.mxu0 %v1823
        %1891 = vmatprep.subr.bf16.mxu0 %v1827
        %1892 = vmatpush1.bf16.msra.mxu0 %v1826
        %1893 = vmatprep.subr.bf16.mxu0 %v1830
        %1894 = vmatpush1.bf16.msra.mxu0 %v1829
        %1895 = vmatprep.subr.bf16.mxu0 %v1833
        %1896 = vmatpush1.bf16.msra.mxu0 %v1832
        %1897 = vmatprep.subr.bf16.mxu0 %v1836
        %1898 = vmatpush1.bf16.msra.mxu0 %v1835
        %1899 = vmatprep.subr.bf16.mxu0 %v1839
        %1900 = vmatpush1.bf16.msra.mxu0 %v1838
        %1901 = vmatprep.subr.bf16.mxu0 0
        %1902 = vmatpush1.bf16.msra.mxu0 0
        %1903 = vmatprep.subr.bf16.mxu0 0
        %1904 = vmatpush1.bf16.msra.mxu0 0
        %1905 = vmatprep.subr.bf16.mxu0 0
        %1906 = vmatpush1.bf16.msra.mxu0 0
        %1907 = vmatprep.subr.bf16.mxu0 0
        %1908 = vmatpush1.bf16.msra.mxu0 0
        %1909 = vmatprep.mubr.bf16.mxu0 %v843
        %1910 = vmatmul.mubr.bf16.gmra.mrb[0].mxu0 %v643
        %v1911 = vpop.f32.mrb[0].mxu0
        %v1912 = vadd.f32 0.0, %v1911
        %v1913 = vpop.f32.mrb[0].mxu0
        %v1914 = vadd.f32 0.0, %v1913
        %v1915 = vpop.f32.mrb[0].mxu0
        %v1916 = vadd.f32 0.0, %v1915
        %v1917 = vpop.f32.mrb[0].mxu0
        %v1918 = vadd.f32 0.0, %v1917
        %1919 = vmatprep.mubr.bf16.mxu0 %v846
        %1920 = vmatmul.mubr.bf16.gmra.mrb[0].mxu0 %v645
        %v1921 = vpop.f32.mrb[0].mxu0
        %v1922 = vadd.f32 0.0, %v1921
        %v1923 = vpop.f32.mrb[0].mxu0
        %v1924 = vadd.f32 0.0, %v1923
        %v1925 = vpop.f32.mrb[0].mxu0
        %v1926 = vadd.f32 0.0, %v1925
        %v1927 = vpop.f32.mrb[0].mxu0
        %v1928 = vadd.f32 0.0, %v1927
        %1929 = vdwg.mxu0
        %1930 = vmatprep.subr.bf16.mxu0 0
        %1931 = vmatpush1.bf16.msra.mxu0 %v1807
        %1932 = vmatprep.subr.bf16.mxu0 0
        %1933 = vmatpush1.bf16.msra.mxu0 %v1810
        %1934 = vmatprep.subr.bf16.mxu0 0
        %1935 = vmatpush1.bf16.msra.mxu0 %v1813
        %1936 = vmatprep.subr.bf16.mxu0 0
        %1937 = vmatpush1.bf16.msra.mxu0 %v1816
        %1938 = vmatprep.subr.bf16.mxu0 0
        %1939 = vmatpush1.bf16.msra.mxu0 %v1819
        %1940 = vmatprep.subr.bf16.mxu0 0
        %1941 = vmatpush1.bf16.msra.mxu0 %v1822
        %1942 = vmatprep.subr.bf16.mxu0 0
        %1943 = vmatpush1.bf16.msra.mxu0 %v1825
        %1944 = vmatprep.subr.bf16.mxu0 0
        %1945 = vmatpush1.bf16.msra.mxu0 %v1828
        %1946 = vmatprep.subr.bf16.mxu0 0
        %1947 = vmatpush1.bf16.msra.mxu0 %v1831
        %1948 = vmatprep.subr.bf16.mxu0 0
        %1949 = vmatpush1.bf16.msra.mxu0 %v1834
        %1950 = vmatprep.subr.bf16.mxu0 0
        %1951 = vmatpush1.bf16.msra.mxu0 %v1837
        %1952 = vmatprep.subr.bf16.mxu0 0
        %1953 = vmatpush1.bf16.msra.mxu0 %v1840
        %1954 = vmatprep.subr.bf16.mxu0 0
        %1955 = vmatpush1.bf16.msra.mxu0 0
        %1956 = vmatprep.subr.bf16.mxu0 0
        %1957 = vmatpush1.bf16.msra.mxu0 0
        %1958 = vmatprep.subr.bf16.mxu0 0
        %1959 = vmatpush1.bf16.msra.mxu0 0
        %1960 = vmatprep.subr.bf16.mxu0 0
        %1961 = vmatpush1.bf16.msra.mxu0 0
        %1962 = vmatprep.mubr.bf16.mxu0 %v843
        %1963 = vmatmul.mubr.bf16.gmra.mrb[0].mxu0 %v643
        %v1964 = vpop.f32.mrb[0].mxu0
        %v1965 = vadd.f32 0.0, %v1964
        %v1966 = vpop.f32.mrb[0].mxu0
        %v1967 = vpop.f32.mrb[0].mxu0
        %v1968 = vadd.f32 0.0, %v1967
        %v1969 = vpop.f32.mrb[0].mxu0
        %1970 = vmatprep.mubr.bf16.mxu0 %v846
        %1971 = vmatmul.mubr.bf16.gmra.mrb[0].mxu0 %v645
        %v1972 = vpop.f32.mrb[0].mxu0
        %v1973 = vadd.f32 0.0, %v1972
        %v1974 = vpop.f32.mrb[0].mxu0
        %v1975 = vpop.f32.mrb[0].mxu0
        %v1976 = vadd.f32 0.0, %v1975
        %v1977 = vpop.f32.mrb[0].mxu0
        %1978 = vdwg.mxu0
        %v1979 = vmax.f32 %v883, %v1226
        %v1980 = vmax.f32 %v885, %v1228
        %v1981 = vmax.f32 %v936, %v1279
        %v1982 = vmax.f32 %v887, %v1230
        %v1983 = vmax.f32 %v889, %v1232
        %v1984 = vmax.f32 %v939, %v1282
        %v1985 = vmax.f32 %v893, %v1236
        %v1986 = vmax.f32 %v895, %v1238
        %v1987 = vmax.f32 %v944, %v1287
        %v1988 = vmax.f32 %v897, %v1240
        %v1989 = vmax.f32 %v899, %v1242
        %v1990 = vmax.f32 %v947, %v1290
        %v1991 = vmax.f32 %v1569, %v1912
        %v1992 = vmax.f32 %v1571, %v1914
        %v1993 = vmax.f32 %v1622, %v1965
        %v1994 = vmax.f32 %v1573, %v1916
        %v1995 = vmax.f32 %v1575, %v1918
        %v1996 = vmax.f32 %v1625, %v1968
        %v1997 = vmax.f32 %v1579, %v1922
        %v1998 = vmax.f32 %v1581, %v1924
        %v1999 = vmax.f32 %v1630, %v1973
        %v2000 = vmax.f32 %v1583, %v1926
        %v2001 = vmax.f32 %v1585, %v1928
        %v2002 = vmax.f32 %v1633, %v1976
        %v2003 = vmax.f32 %v1979, %v1991
        %v2004 = vmax.f32 %v1980, %v1992
        %v2005 = vmax.f32 %v1981, %v1993
        %v2006 = vmax.f32 %v1982, %v1994
        %v2007 = vmax.f32 %v1983, %v1995
        %v2008 = vmax.f32 %v1984, %v1996
        %v2009 = vmax.f32 %v1985, %v1997
        %v2010 = vmax.f32 %v1986, %v1998
        %v2011 = vmax.f32 %v1987, %v1999
        %v2012 = vmax.f32 %v1988, %v2000
        %v2013 = vmax.f32 %v1989, %v2001
        %v2014 = vmax.f32 %v1990, %v2002
        %v2015 = vld [vmem:[%s2] sm:$0xff]
        %v2016 = vld [vmem:[%s2 + $0x8] sm:$0xff]
        %v2017 = vld [vmem:[%s2 + $0x10] sm:$0xff]
        %v2018 = vld [vmem:[%s2 + $0x18] sm:$0xff]
        %2020 = vset.pattern.permute.xlu0 0
        %2021 = vperm.xlu0 %2020, %v2015
        %v2022 = vpop.permute.xlu0 %2021
        %2025 = vset.pattern.permute.xlu0 0
        %2026 = vperm.xlu0 %2025, %v2016
        %v2027 = vpop.permute.xlu0 %2026
        %2030 = vset.pattern.permute.xlu0 0
        %2031 = vperm.xlu0 %2030, %v2017
        %v2032 = vpop.permute.xlu0 %2031
        %2035 = vset.pattern.permute.xlu0 0
        %2036 = vperm.xlu0 %2035, %v2018
        %v2037 = vpop.permute.xlu0 %2036
        %v2039 = vadd.f32 %v2003, %v2022
        %v2040 = vadd.f32 %v2004, %v2022
        %v2041 = vadd.f32 %v2005, %v2022
        %v2042 = vadd.f32 %v2006, %v2027
        %v2043 = vadd.f32 %v2007, %v2027
        %v2044 = vadd.f32 %v2008, %v2027
        %v2045 = vadd.f32 %v2009, %v2032
        %v2046 = vadd.f32 %v2010, %v2032
        %v2047 = vadd.f32 %v2011, %v2032
        %v2048 = vadd.f32 %v2012, %v2037
        %v2049 = vadd.f32 %v2013, %v2037
        %v2050 = vadd.f32 %v2014, %v2037
        %v2051 = vmax.f32 %v2039, 0.0
        %v2052 = vmax.f32 %v2040, 0.0
        %v2053 = vmax.f32 %v2041, 0.0
        %v2054 = vmax.f32 %v2042, 0.0
        %v2055 = vmax.f32 %v2043, 0.0
        %v2056 = vmax.f32 %v2044, 0.0
        %v2057 = vmax.f32 %v2045, 0.0
        %v2058 = vmax.f32 %v2046, 0.0
        %v2059 = vmax.f32 %v2047, 0.0
        %v2060 = vmax.f32 %v2048, 0.0
        %v2061 = vmax.f32 %v2049, 0.0
        %v2062 = vmax.f32 %v2050, 0.0
        %v2063 = vpack.c.bf16 %v2054, %v2051
        %v2064 = vpack.c.bf16 %v2055, %v2052
        %v2065 = vpack.c.bf16 %v2056, %v2053
        %v2066 = vpack.c.bf16 %v2060, %v2057
        %v2067 = vpack.c.bf16 %v2061, %v2058
        %v2068 = vpack.c.bf16 %v2062, %v2059
        %v2075 = vunpack.c.l.b16 %v2063
        %v2076 = vunpack.c.l.b16 %v2064
        %v2077 = vunpack.c.l.b16 %v2065
        %v2078 = vunpack.c.h.b16 %v2063
        %v2079 = vunpack.c.h.b16 %v2064
        %v2080 = vunpack.c.h.b16 %v2065
        %v2081 = vunpack.c.l.b16 %v2066
        %v2082 = vunpack.c.l.b16 %v2067
        %v2083 = vunpack.c.l.b16 %v2068
        %v2084 = vunpack.c.h.b16 %v2066
        %v2085 = vunpack.c.h.b16 %v2067
        %v2086 = vunpack.c.h.b16 %v2068
        %v2087 = vpack.c.b16 %v2076, %v2075
        %v2088 = vpack.c.b16 %v2077, %v2077
        %v2089 = vpack.c.b16 %v2079, %v2078
        %v2090 = vpack.c.b16 %v2080, %v2080
        %v2091 = vpack.c.b16 %v2082, %v2081
        %v2092 = vpack.c.b16 %v2083, %v2083
        %v2093 = vpack.c.b16 %v2085, %v2084
        %v2094 = vpack.c.b16 %v2086, %v2086
        %2103 = vst [vmem:[%s575] sm:$0xff] %v2087
        %2104 = vst [vmem:[%s575 + $0x8] sm:$0xf] %v2088
        %2105 = vst [vmem:[%s575 + $0xc] sm:$0xff] %v2089
        %2106 = vst [vmem:[%s575 + $0x14] sm:$0xf] %v2090
        %2107 = vst [vmem:[%s575 + $0x18] sm:$0xff] %v2091
        %2108 = vst [vmem:[%s575 + $0x20] sm:$0xf] %v2092
        %2109 = vst [vmem:[%s575 + $0x24] sm:$0xff] %v2093
        %2110 = vst [vmem:[%s575 + $0x2c] sm:$0xf] %v2094
        %s2111 = sand.u32 %s90, 1
        %s2112 = sand.u32 %s90, 1
        %s2113 = smul.addr %s2112, 48
        %s2114 = scalar_lea.vmem [#allocation3], %s2113
        // Predicated region
        $region59: #{dueling_ddqn_forward.2} parent=53 // pred_check
          %p2115 = pneg %p100
        $region60: #{dueling_ddqn_forward.2} parent=53 // pred_check_branch
          %2117 = sbr.rel (%p2115) target = $region62
        $region61: #{dueling_ddqn_forward.2} parent=53 // pred_region
          %s2118 = smul.u32 3, %s14
          %s2119 = smul.addr %s2118, 4
          %s2120 = scalar_lea.vmem %s3, %s2119
          // Predicated region
          $region63: #{dueling_ddqn_forward.2} parent=61 // pred_check
            _
          $region64: #{dueling_ddqn_forward.2} parent=61 // pred_check_branch
            %2122 = sbr.rel (0) target = $region66
          $region65: #{dueling_ddqn_forward.2} parent=61 // pred_region
            // Predicated region
            $region67: #{dueling_ddqn_forward.2} parent=65 // pred_check
              _
            $region68: #{dueling_ddqn_forward.2} parent=65 // pred_check_branch
              %2124 = sbr.rel (0) target = $region70
            $region69: #{dueling_ddqn_forward.2} parent=65 // pred_region
              %s2125 = scalar_lea.vmem %s2114, 8 [#allocation3]
              %s2126 = scalar_lea.vmem %s2120, 8
              loop: start=0, step=1, limit=1
              $region71: #{dueling_ddqn_forward.2} parent=69 // loop_pre_header
                _
              $region72: #{dueling_ddqn_forward.2} parent=69 // loop_header
                %s2128 = sphi 0, %s2132
                %p2129 = scmp.ge.s32.totalorder %s2128, 1
                %s2133 = sphi %s2114, %s2114
                %s2134 = sphi %s2120, %s2120
              $region73: #{dueling_ddqn_forward.2} parent=69 // loop_header_branch
                %2131 = sbr.rel (%p2129) target = $region77
              $region74: #{dueling_ddqn_forward.2} parent=69 // loop_body
                %v2135 = vld [vmem:[%s2133] sm:$0xff]
                %2136 = vst [vmem:[%s2134] sm:$0xff] %v2135
                %v2137 = vld [vmem:[%s2133 + $0xc] sm:$0xff]
                %2138 = vst [vmem:[%s2134 + $0x18] sm:$0xff] %v2137
                %v2139 = vld [vmem:[%s2133 + $0x18] sm:$0xff]
                %2140 = vst [vmem:[%s2134 + $0x30] sm:$0xff] %v2139
                %v2141 = vld [vmem:[%s2133 + $0x24] sm:$0xff]
                %2142 = vst [vmem:[%s2134 + $0x48] sm:$0xff] %v2141
              $region75: #{dueling_ddqn_forward.2} parent=69 // loop_footer
                %s2132 = sadd.s32 1, %s2128
              $region76: #{dueling_ddqn_forward.2} parent=69 // loop_footer_branch
                %2127 = sbr.rel target = $region72
              $region77: #{dueling_ddqn_forward.2} parent=69 // loop_exit
                _
              loop: start=0, step=1, limit=1
              $region78: #{dueling_ddqn_forward.2} parent=69 // loop_pre_header
                _
              $region79: #{dueling_ddqn_forward.2} parent=69 // loop_header
                %s2145 = sphi 0, %s2149
                %p2146 = scmp.ge.s32.totalorder %s2145, 1
                %s2150 = sphi %s2125, %s2125
                %s2151 = sphi %s2126, %s2126
              $region80: #{dueling_ddqn_forward.2} parent=69 // loop_header_branch
                %2148 = sbr.rel (%p2146) target = $region84
              $region81: #{dueling_ddqn_forward.2} parent=69 // loop_body
                %v2152 = vld [vmem:[%s2150] sm:$0xf]
                %2153 = vst [vmem:[%s2151] sm:$0xf] %v2152
                %v2154 = vld [vmem:[%s2150 + $0xc] sm:$0xf]
                %2155 = vst [vmem:[%s2151 + $0x18] sm:$0xf] %v2154
                %v2156 = vld [vmem:[%s2150 + $0x18] sm:$0xf]
                %2157 = vst [vmem:[%s2151 + $0x30] sm:$0xf] %v2156
                %v2158 = vld [vmem:[%s2150 + $0x24] sm:$0xf]
                %2159 = vst [vmem:[%s2151 + $0x48] sm:$0xf] %v2158
              $region82: #{dueling_ddqn_forward.2} parent=69 // loop_footer
                %s2149 = sadd.s32 1, %s2145
              $region83: #{dueling_ddqn_forward.2} parent=69 // loop_footer_branch
                %2144 = sbr.rel target = $region79
              $region84: #{dueling_ddqn_forward.2} parent=69 // loop_exit
                _
            $region70: #{dueling_ddqn_forward.2} parent=65 // pred_fallthru
              _
          $region66: #{dueling_ddqn_forward.2} parent=61 // pred_fallthru
            _
          %2160 = vnop
        $region62: #{dueling_ddqn_forward.2} parent=53 // pred_fallthru
          _
      $region54: #{dueling_ddqn_forward.2} parent=5 // pred_fallthru
        _
      %p2161 = scmp.le.s32.totalorder 2, %s9
      // Predicated region
      $region85: #{dueling_ddqn_forward.2} parent=5 // pred_check
        %p2162 = pneg %p2161
      $region86: #{dueling_ddqn_forward.2} parent=5 // pred_check_branch
        %2164 = sbr.rel (%p2162) target = $region88
      $region87: #{dueling_ddqn_forward.2} parent=5 // pred_region
        %s2165 = ssub.s32 %s9, 2
        // Predicated region
        $region89: #{dueling_ddqn_forward.2} parent=87 // pred_check
          %p2166 = pneg %p106
        $region90: #{dueling_ddqn_forward.2} parent=87 // pred_check_branch
          %2168 = sbr.rel (%p2166) target = $region92
        $region91: #{dueling_ddqn_forward.2} parent=87 // pred_region
          %s2169 = sand.u32 %s91, 1
          %s2170 = sand.u32 %s91, 1
          %s2171 = smul.addr %s2170, 48
          %s2172 = scalar_lea.vmem [#allocation3], %s2171
        $region92: #{dueling_ddqn_forward.2} parent=87 // pred_fallthru
          _
      $region88: #{dueling_ddqn_forward.2} parent=5 // pred_fallthru
        _
    $region6: #{dueling_ddqn_forward.2} parent=1 // loop_footer
      %s13 = sadd.s32 1, %s9
    $region7: #{dueling_ddqn_forward.2} parent=1 // loop_footer_branch
      %8 = sbr.rel target = $region3
    $region8: #{dueling_ddqn_forward.2} parent=1 // loop_exit
      _

// kernel: dueling_ddqn_forward.3
$region0: #{dueling_ddqn_forward.3}
  #allocation0 [shape = 'u32[]', space=smem, size = 0x4, offset = 0x4, fixed_abs, tag = 'smem constant byte address 0x4 - core index']
  #allocation1 [shape = 'u32[144,128]{1,0:T(1,128)}', space=vmem, size = 0x12000, scoped, tag = 'internal scratch']
  %s0 = inlined_call_operand.vmem [shape: bf16[512,128], index: 0, kind: input, shape index: {}]
  %s1 = inlined_call_operand.vmem [shape: bf16[64,512], index: 1, kind: input, shape index: {}]
  %s2 = inlined_call_operand.vmem [shape: f32[64,1], index: 2, kind: input, shape index: {}]
  %s3 = inlined_call_operand.vmem [shape: bf16[576,64], index: 3, kind: input, shape index: {}]
  %s4 = inlined_call_operand.vmem [shape: f32[64,1], index: 4, kind: input, shape index: {}]
  %s5 = inlined_call_operand.vmem [shape: bf16[512,64], index: 5, kind: input, shape index: {}]
  %s6 = inlined_call_operand.vmem [shape: f32[512,1], index: 6, kind: input, shape index: {}]
  %s7 = inlined_call_operand.vmem [shape: bf16[6,512], index: 7, kind: input, shape index: {}]
  %s8 = inlined_call_operand.vmem [shape: f32[6,1], index: 8, kind: input, shape index: {}]
  %s9 = inlined_call_operand.vmem [shape: f32[5,2], index: 9, kind: output, shape index: {}]
  %s10 = sld [smem:[#allocation0]]
  $region46: #{dueling_ddqn_forward.3} parent=0
    _
  %s12 = ssub.s32 1, %s10
  %s13 = scalar_select 0, %s12, %s10
  // Predicated region
  $region2: #{dueling_ddqn_forward.3} parent=0 // pred_check
    _
  $region3: #{dueling_ddqn_forward.3} parent=0 // pred_check_branch
    %15 = sbr.rel (0) target = $region5
  $region4: #{dueling_ddqn_forward.3} parent=0 // pred_region
    _
  $region5: #{dueling_ddqn_forward.3} parent=0 // pred_fallthru
    _
  // Predicated region
  $region6: #{dueling_ddqn_forward.3} parent=0 // pred_check
    _
  $region7: #{dueling_ddqn_forward.3} parent=0 // pred_check_branch
    %17 = sbr.rel (0) target = $region9
  $region8: #{dueling_ddqn_forward.3} parent=0 // pred_region
    _
  $region9: #{dueling_ddqn_forward.3} parent=0 // pred_fallthru
    _
  // Predicated region
  $region10: #{dueling_ddqn_forward.3} parent=0 // pred_check
    _
  $region11: #{dueling_ddqn_forward.3} parent=0 // pred_check_branch
    %19 = sbr.rel (0) target = $region13
  $region12: #{dueling_ddqn_forward.3} parent=0 // pred_region
    _
  $region13: #{dueling_ddqn_forward.3} parent=0 // pred_fallthru
    _
  // Predicated region
  $region14: #{dueling_ddqn_forward.3} parent=0 // pred_check
    _
  $region15: #{dueling_ddqn_forward.3} parent=0 // pred_check_branch
    %21 = sbr.rel (0) target = $region17
  $region16: #{dueling_ddqn_forward.3} parent=0 // pred_region
    _
  $region17: #{dueling_ddqn_forward.3} parent=0 // pred_fallthru
    _
  // Predicated region
  $region18: #{dueling_ddqn_forward.3} parent=0 // pred_check
    _
  $region19: #{dueling_ddqn_forward.3} parent=0 // pred_check_branch
    %23 = sbr.rel (0) target = $region21
  $region20: #{dueling_ddqn_forward.3} parent=0 // pred_region
    _
  $region21: #{dueling_ddqn_forward.3} parent=0 // pred_fallthru
    _
  // Predicated region
  $region22: #{dueling_ddqn_forward.3} parent=0 // pred_check
    _
  $region23: #{dueling_ddqn_forward.3} parent=0 // pred_check_branch
    %25 = sbr.rel (0) target = $region25
  $region24: #{dueling_ddqn_forward.3} parent=0 // pred_region
    _
  $region25: #{dueling_ddqn_forward.3} parent=0 // pred_fallthru
    _
  // Predicated region
  $region26: #{dueling_ddqn_forward.3} parent=0 // pred_check
    _
  $region27: #{dueling_ddqn_forward.3} parent=0 // pred_check_branch
    %27 = sbr.rel (0) target = $region29
  $region28: #{dueling_ddqn_forward.3} parent=0 // pred_region
    _
  $region29: #{dueling_ddqn_forward.3} parent=0 // pred_fallthru
    _
  // Predicated region
  $region30: #{dueling_ddqn_forward.3} parent=0 // pred_check
    _
  $region31: #{dueling_ddqn_forward.3} parent=0 // pred_check_branch
    %29 = sbr.rel (0) target = $region33
  $region32: #{dueling_ddqn_forward.3} parent=0 // pred_region
    _
  $region33: #{dueling_ddqn_forward.3} parent=0 // pred_fallthru
    _
  // Predicated region
  $region34: #{dueling_ddqn_forward.3} parent=0 // pred_check
    _
  $region35: #{dueling_ddqn_forward.3} parent=0 // pred_check_branch
    %31 = sbr.rel (0) target = $region37
  $region36: #{dueling_ddqn_forward.3} parent=0 // pred_region
    _
  $region37: #{dueling_ddqn_forward.3} parent=0 // pred_fallthru
    _
  %v33 = vld [vmem:[%s1] sm:$0xff]
  %v34 = vld [vmem:[%s1 + $0x8] sm:$0xff]
  %v35 = vld [vmem:[%s1 + $0x10] sm:$0xff]
  %v36 = vld [vmem:[%s1 + $0x18] sm:$0xff]
  %v37 = vld [vmem:[%s1 + $0x20] sm:$0xff]
  %v38 = vld [vmem:[%s1 + $0x28] sm:$0xff]
  %v39 = vld [vmem:[%s1 + $0x30] sm:$0xff]
  %v40 = vld [vmem:[%s1 + $0x38] sm:$0xff]
  %v41 = vld [vmem:[%s1 + $0x40] sm:$0xff]
  %v42 = vld [vmem:[%s1 + $0x48] sm:$0xff]
  %v43 = vld [vmem:[%s1 + $0x50] sm:$0xff]
  %v44 = vld [vmem:[%s1 + $0x58] sm:$0xff]
  %v45 = vld [vmem:[%s1 + $0x60] sm:$0xff]
  %v46 = vld [vmem:[%s1 + $0x68] sm:$0xff]
  %v47 = vld [vmem:[%s1 + $0x70] sm:$0xff]
  %v48 = vld [vmem:[%s1 + $0x78] sm:$0xff]
  %v49 = vld [vmem:[%s0] sm:$0xf]
  %v50 = vld [vmem:[%s0 + $0x4] sm:$0xf]
  %v51 = vld [vmem:[%s0 + $0x8] sm:$0xf]
  %v52 = vld [vmem:[%s0 + $0xc] sm:$0xf]
  %v53 = vld [vmem:[%s0 + $0x10] sm:$0xf]
  %v54 = vld [vmem:[%s0 + $0x14] sm:$0xf]
  %v55 = vld [vmem:[%s0 + $0x18] sm:$0xf]
  %v56 = vld [vmem:[%s0 + $0x1c] sm:$0xf]
  %v57 = vld [vmem:[%s0 + $0x20] sm:$0xf]
  %v58 = vld [vmem:[%s0 + $0x24] sm:$0xf]
  %v59 = vld [vmem:[%s0 + $0x28] sm:$0xf]
  %v60 = vld [vmem:[%s0 + $0x2c] sm:$0xf]
  %v61 = vld [vmem:[%s0 + $0x30] sm:$0xf]
  %v62 = vld [vmem:[%s0 + $0x34] sm:$0xf]
  %v63 = vld [vmem:[%s0 + $0x38] sm:$0xf]
  %v64 = vld [vmem:[%s0 + $0x3c] sm:$0xf]
  %v65 = vld [vmem:[%s0 + $0x40] sm:$0xf]
  %v66 = vld [vmem:[%s0 + $0x44] sm:$0xf]
  %v67 = vld [vmem:[%s0 + $0x48] sm:$0xf]
  %v68 = vld [vmem:[%s0 + $0x4c] sm:$0xf]
  %v69 = vld [vmem:[%s0 + $0x50] sm:$0xf]
  %v70 = vld [vmem:[%s0 + $0x54] sm:$0xf]
  %v71 = vld [vmem:[%s0 + $0x58] sm:$0xf]
  %v72 = vld [vmem:[%s0 + $0x5c] sm:$0xf]
  %v73 = vld [vmem:[%s0 + $0x60] sm:$0xf]
  %v74 = vld [vmem:[%s0 + $0x64] sm:$0xf]
  %v75 = vld [vmem:[%s0 + $0x68] sm:$0xf]
  %v76 = vld [vmem:[%s0 + $0x6c] sm:$0xf]
  %v77 = vld [vmem:[%s0 + $0x70] sm:$0xf]
  %v78 = vld [vmem:[%s0 + $0x74] sm:$0xf]
  %v79 = vld [vmem:[%s0 + $0x78] sm:$0xf]
  %v80 = vld [vmem:[%s0 + $0x7c] sm:$0xf]
  %v81 = vld [vmem:[%s0 + $0x80] sm:$0xf]
  %v82 = vld [vmem:[%s0 + $0x84] sm:$0xf]
  %v83 = vld [vmem:[%s0 + $0x88] sm:$0xf]
  %v84 = vld [vmem:[%s0 + $0x8c] sm:$0xf]
  %v85 = vld [vmem:[%s0 + $0x90] sm:$0xf]
  %v86 = vld [vmem:[%s0 + $0x94] sm:$0xf]
  %v87 = vld [vmem:[%s0 + $0x98] sm:$0xf]
  %v88 = vld [vmem:[%s0 + $0x9c] sm:$0xf]
  %v89 = vld [vmem:[%s0 + $0xa0] sm:$0xf]
  %v90 = vld [vmem:[%s0 + $0xa4] sm:$0xf]
  %v91 = vld [vmem:[%s0 + $0xa8] sm:$0xf]
  %v92 = vld [vmem:[%s0 + $0xac] sm:$0xf]
  %v93 = vld [vmem:[%s0 + $0xb0] sm:$0xf]
  %v94 = vld [vmem:[%s0 + $0xb4] sm:$0xf]
  %v95 = vld [vmem:[%s0 + $0xb8] sm:$0xf]
  %v96 = vld [vmem:[%s0 + $0xbc] sm:$0xf]
  %v97 = vld [vmem:[%s0 + $0xc0] sm:$0xf]
  %v98 = vld [vmem:[%s0 + $0xc4] sm:$0xf]
  %v99 = vld [vmem:[%s0 + $0xc8] sm:$0xf]
  %v100 = vld [vmem:[%s0 + $0xcc] sm:$0xf]
  %v101 = vld [vmem:[%s0 + $0xd0] sm:$0xf]
  %v102 = vld [vmem:[%s0 + $0xd4] sm:$0xf]
  %v103 = vld [vmem:[%s0 + $0xd8] sm:$0xf]
  %v104 = vld [vmem:[%s0 + $0xdc] sm:$0xf]
  %v105 = vld [vmem:[%s0 + $0xe0] sm:$0xf]
  %v106 = vld [vmem:[%s0 + $0xe4] sm:$0xf]
  %v107 = vld [vmem:[%s0 + $0xe8] sm:$0xf]
  %v108 = vld [vmem:[%s0 + $0xec] sm:$0xf]
  %v109 = vld [vmem:[%s0 + $0xf0] sm:$0xf]
  %v110 = vld [vmem:[%s0 + $0xf4] sm:$0xf]
  %v111 = vld [vmem:[%s0 + $0xf8] sm:$0xf]
  %v112 = vld [vmem:[%s0 + $0xfc] sm:$0xf]
  %v129 = vunpack.c.l.b16 %v33
  %v130 = vunpack.c.h.b16 %v33
  %v131 = vunpack.c.l.b16 %v34
  %v132 = vunpack.c.h.b16 %v34
  %v133 = vunpack.c.l.b16 %v35
  %v134 = vunpack.c.h.b16 %v35
  %v135 = vunpack.c.l.b16 %v36
  %v136 = vunpack.c.h.b16 %v36
  %v137 = vunpack.c.l.b16 %v37
  %v138 = vunpack.c.h.b16 %v37
  %v139 = vunpack.c.l.b16 %v38
  %v140 = vunpack.c.h.b16 %v38
  %v141 = vunpack.c.l.b16 %v39
  %v142 = vunpack.c.h.b16 %v39
  %v143 = vunpack.c.l.b16 %v40
  %v144 = vunpack.c.h.b16 %v40
  %v145 = vunpack.c.l.b16 %v41
  %v146 = vunpack.c.h.b16 %v41
  %v147 = vunpack.c.l.b16 %v42
  %v148 = vunpack.c.h.b16 %v42
  %v149 = vunpack.c.l.b16 %v43
  %v150 = vunpack.c.h.b16 %v43
  %v151 = vunpack.c.l.b16 %v44
  %v152 = vunpack.c.h.b16 %v44
  %v153 = vunpack.c.l.b16 %v45
  %v154 = vunpack.c.h.b16 %v45
  %v155 = vunpack.c.l.b16 %v46
  %v156 = vunpack.c.h.b16 %v46
  %v157 = vunpack.c.l.b16 %v47
  %v158 = vunpack.c.h.b16 %v47
  %v159 = vunpack.c.l.b16 %v48
  %v160 = vunpack.c.h.b16 %v48
  %v161 = vpack.c.b16 %v133, %v129
  %v162 = vpack.c.b16 %v134, %v130
  %v163 = vpack.c.b16 %v135, %v131
  %v164 = vpack.c.b16 %v136, %v132
  %v165 = vpack.c.b16 %v141, %v137
  %v166 = vpack.c.b16 %v142, %v138
  %v167 = vpack.c.b16 %v143, %v139
  %v168 = vpack.c.b16 %v144, %v140
  %v169 = vpack.c.b16 %v149, %v145
  %v170 = vpack.c.b16 %v150, %v146
  %v171 = vpack.c.b16 %v151, %v147
  %v172 = vpack.c.b16 %v152, %v148
  %v173 = vpack.c.b16 %v157, %v153
  %v174 = vpack.c.b16 %v158, %v154
  %v175 = vpack.c.b16 %v159, %v155
  %v176 = vpack.c.b16 %v160, %v156
  %v257 = vunpack.c.l.b16 %v49
  %v258 = vunpack.c.l.b16 %v50
  %v259 = vunpack.c.l.b16 %v51
  %v260 = vunpack.c.l.b16 %v52
  %v261 = vunpack.c.l.b16 %v53
  %v262 = vunpack.c.l.b16 %v54
  %v263 = vunpack.c.l.b16 %v55
  %v264 = vunpack.c.l.b16 %v56
  %v265 = vunpack.c.l.b16 %v57
  %v266 = vunpack.c.l.b16 %v58
  %v267 = vunpack.c.l.b16 %v59
  %v268 = vunpack.c.l.b16 %v60
  %v269 = vunpack.c.l.b16 %v61
  %v270 = vunpack.c.l.b16 %v62
  %v271 = vunpack.c.l.b16 %v63
  %v272 = vunpack.c.l.b16 %v64
  %v273 = vunpack.c.l.b16 %v65
  %v274 = vunpack.c.l.b16 %v66
  %v275 = vunpack.c.l.b16 %v67
  %v276 = vunpack.c.l.b16 %v68
  %v277 = vunpack.c.l.b16 %v69
  %v278 = vunpack.c.l.b16 %v70
  %v279 = vunpack.c.l.b16 %v71
  %v280 = vunpack.c.l.b16 %v72
  %v281 = vunpack.c.l.b16 %v73
  %v282 = vunpack.c.l.b16 %v74
  %v283 = vunpack.c.l.b16 %v75
  %v284 = vunpack.c.l.b16 %v76
  %v285 = vunpack.c.l.b16 %v77
  %v286 = vunpack.c.l.b16 %v78
  %v287 = vunpack.c.l.b16 %v79
  %v288 = vunpack.c.l.b16 %v80
  %v289 = vunpack.c.l.b16 %v81
  %v290 = vunpack.c.l.b16 %v82
  %v291 = vunpack.c.l.b16 %v83
  %v292 = vunpack.c.l.b16 %v84
  %v293 = vunpack.c.l.b16 %v85
  %v294 = vunpack.c.l.b16 %v86
  %v295 = vunpack.c.l.b16 %v87
  %v296 = vunpack.c.l.b16 %v88
  %v297 = vunpack.c.l.b16 %v89
  %v298 = vunpack.c.l.b16 %v90
  %v299 = vunpack.c.l.b16 %v91
  %v300 = vunpack.c.l.b16 %v92
  %v301 = vunpack.c.l.b16 %v93
  %v302 = vunpack.c.l.b16 %v94
  %v303 = vunpack.c.l.b16 %v95
  %v304 = vunpack.c.l.b16 %v96
  %v305 = vunpack.c.l.b16 %v97
  %v306 = vunpack.c.l.b16 %v98
  %v307 = vunpack.c.l.b16 %v99
  %v308 = vunpack.c.l.b16 %v100
  %v309 = vunpack.c.l.b16 %v101
  %v310 = vunpack.c.l.b16 %v102
  %v311 = vunpack.c.l.b16 %v103
  %v312 = vunpack.c.l.b16 %v104
  %v313 = vunpack.c.l.b16 %v105
  %v314 = vunpack.c.l.b16 %v106
  %v315 = vunpack.c.l.b16 %v107
  %v316 = vunpack.c.l.b16 %v108
  %v317 = vunpack.c.l.b16 %v109
  %v318 = vunpack.c.l.b16 %v110
  %v319 = vunpack.c.l.b16 %v111
  %v320 = vunpack.c.l.b16 %v112
  %v321 = vpack.c.b16 %v258, %v257
  %v322 = vpack.c.b16 %v260, %v259
  %v323 = vpack.c.b16 %v262, %v261
  %v324 = vpack.c.b16 %v264, %v263
  %v325 = vpack.c.b16 %v266, %v265
  %v326 = vpack.c.b16 %v268, %v267
  %v327 = vpack.c.b16 %v270, %v269
  %v328 = vpack.c.b16 %v272, %v271
  %v329 = vpack.c.b16 %v274, %v273
  %v330 = vpack.c.b16 %v276, %v275
  %v331 = vpack.c.b16 %v278, %v277
  %v332 = vpack.c.b16 %v280, %v279
  %v333 = vpack.c.b16 %v282, %v281
  %v334 = vpack.c.b16 %v284, %v283
  %v335 = vpack.c.b16 %v286, %v285
  %v336 = vpack.c.b16 %v288, %v287
  %v337 = vpack.c.b16 %v290, %v289
  %v338 = vpack.c.b16 %v292, %v291
  %v339 = vpack.c.b16 %v294, %v293
  %v340 = vpack.c.b16 %v296, %v295
  %v341 = vpack.c.b16 %v298, %v297
  %v342 = vpack.c.b16 %v300, %v299
  %v343 = vpack.c.b16 %v302, %v301
  %v344 = vpack.c.b16 %v304, %v303
  %v345 = vpack.c.b16 %v306, %v305
  %v346 = vpack.c.b16 %v308, %v307
  %v347 = vpack.c.b16 %v310, %v309
  %v348 = vpack.c.b16 %v312, %v311
  %v349 = vpack.c.b16 %v314, %v313
  %v350 = vpack.c.b16 %v316, %v315
  %v351 = vpack.c.b16 %v318, %v317
  %v352 = vpack.c.b16 %v320, %v319
  %385 = vmatprep.subr.bf16.mxu0 0
  %386 = vmatpush1.bf16.msra.mxu0 %v321
  %387 = vmatprep.subr.bf16.mxu0 0
  %388 = vmatpush1.bf16.msra.mxu0 %v322
  %389 = vmatprep.subr.bf16.mxu0 0
  %390 = vmatpush1.bf16.msra.mxu0 %v323
  %391 = vmatprep.subr.bf16.mxu0 0
  %392 = vmatpush1.bf16.msra.mxu0 %v324
  %393 = vmatprep.subr.bf16.mxu0 0
  %394 = vmatpush1.bf16.msra.mxu0 %v325
  %395 = vmatprep.subr.bf16.mxu0 0
  %396 = vmatpush1.bf16.msra.mxu0 %v326
  %397 = vmatprep.subr.bf16.mxu0 0
  %398 = vmatpush1.bf16.msra.mxu0 %v327
  %399 = vmatprep.subr.bf16.mxu0 0
  %400 = vmatpush1.bf16.msra.mxu0 %v328
  %401 = vmatprep.subr.bf16.mxu0 0
  %402 = vmatpush1.bf16.msra.mxu0 %v329
  %403 = vmatprep.subr.bf16.mxu0 0
  %404 = vmatpush1.bf16.msra.mxu0 %v330
  %405 = vmatprep.subr.bf16.mxu0 0
  %406 = vmatpush1.bf16.msra.mxu0 %v331
  %407 = vmatprep.subr.bf16.mxu0 0
  %408 = vmatpush1.bf16.msra.mxu0 %v332
  %409 = vmatprep.subr.bf16.mxu0 0
  %410 = vmatpush1.bf16.msra.mxu0 %v333
  %411 = vmatprep.subr.bf16.mxu0 0
  %412 = vmatpush1.bf16.msra.mxu0 %v334
  %413 = vmatprep.subr.bf16.mxu0 0
  %414 = vmatpush1.bf16.msra.mxu0 %v335
  %415 = vmatprep.subr.bf16.mxu0 0
  %416 = vmatpush1.bf16.msra.mxu0 %v336
  %417 = vmatprep.mubr.bf16.mxu0 %v162
  %418 = vmatmul.mubr.bf16.gmra.mrb[0].mxu0 %v161
  %v419 = vpop.f32.mrb[0].mxu0
  %v420 = vadd.f32 0.0, %v419
  %v421 = vpop.f32.mrb[0].mxu0
  %v422 = vpop.f32.mrb[0].mxu0
  %v423 = vadd.f32 0.0, %v422
  %v424 = vpop.f32.mrb[0].mxu0
  %425 = vmatprep.mubr.bf16.mxu0 %v166
  %426 = vmatmul.mubr.bf16.gmra.mrb[0].mxu0 %v165
  %v427 = vpop.f32.mrb[0].mxu0
  %v428 = vadd.f32 0.0, %v427
  %v429 = vpop.f32.mrb[0].mxu0
  %v430 = vpop.f32.mrb[0].mxu0
  %v431 = vadd.f32 0.0, %v430
  %v432 = vpop.f32.mrb[0].mxu0
  %433 = vmatprep.mubr.bf16.mxu0 %v170
  %434 = vmatmul.mubr.bf16.gmra.mrb[0].mxu0 %v169
  %v435 = vpop.f32.mrb[0].mxu0
  %v436 = vadd.f32 0.0, %v435
  %v437 = vpop.f32.mrb[0].mxu0
  %v438 = vpop.f32.mrb[0].mxu0
  %v439 = vadd.f32 0.0, %v438
  %v440 = vpop.f32.mrb[0].mxu0
  %441 = vmatprep.mubr.bf16.mxu0 %v174
  %442 = vmatmul.mubr.bf16.gmra.mrb[0].mxu0 %v173
  %v443 = vpop.f32.mrb[0].mxu0
  %v444 = vadd.f32 0.0, %v443
  %v445 = vpop.f32.mrb[0].mxu0
  %v446 = vpop.f32.mrb[0].mxu0
  %v447 = vadd.f32 0.0, %v446
  %v448 = vpop.f32.mrb[0].mxu0
  %449 = vdwg.mxu0
  %450 = vmatprep.subr.bf16.mxu0 0
  %451 = vmatpush1.bf16.msra.mxu0 %v337
  %452 = vmatprep.subr.bf16.mxu0 0
  %453 = vmatpush1.bf16.msra.mxu0 %v338
  %454 = vmatprep.subr.bf16.mxu0 0
  %455 = vmatpush1.bf16.msra.mxu0 %v339
  %456 = vmatprep.subr.bf16.mxu0 0
  %457 = vmatpush1.bf16.msra.mxu0 %v340
  %458 = vmatprep.subr.bf16.mxu0 0
  %459 = vmatpush1.bf16.msra.mxu0 %v341
  %460 = vmatprep.subr.bf16.mxu0 0
  %461 = vmatpush1.bf16.msra.mxu0 %v342
  %462 = vmatprep.subr.bf16.mxu0 0
  %463 = vmatpush1.bf16.msra.mxu0 %v343
  %464 = vmatprep.subr.bf16.mxu0 0
  %465 = vmatpush1.bf16.msra.mxu0 %v344
  %466 = vmatprep.subr.bf16.mxu0 0
  %467 = vmatpush1.bf16.msra.mxu0 %v345
  %468 = vmatprep.subr.bf16.mxu0 0
  %469 = vmatpush1.bf16.msra.mxu0 %v346
  %470 = vmatprep.subr.bf16.mxu0 0
  %471 = vmatpush1.bf16.msra.mxu0 %v347
  %472 = vmatprep.subr.bf16.mxu0 0
  %473 = vmatpush1.bf16.msra.mxu0 %v348
  %474 = vmatprep.subr.bf16.mxu0 0
  %475 = vmatpush1.bf16.msra.mxu0 %v349
  %476 = vmatprep.subr.bf16.mxu0 0
  %477 = vmatpush1.bf16.msra.mxu0 %v350
  %478 = vmatprep.subr.bf16.mxu0 0
  %479 = vmatpush1.bf16.msra.mxu0 %v351
  %480 = vmatprep.subr.bf16.mxu0 0
  %481 = vmatpush1.bf16.msra.mxu0 %v352
  %482 = vmatprep.mubr.bf16.mxu0 %v164
  %483 = vmatmul.mubr.bf16.gmra.mrb[0].mxu0 %v163
  %v484 = vpop.f32.mrb[0].mxu0
  %v485 = vadd.f32 %v420, %v484
  %v486 = vpop.f32.mrb[0].mxu0
  %v487 = vpop.f32.mrb[0].mxu0
  %v488 = vadd.f32 %v423, %v487
  %v489 = vpop.f32.mrb[0].mxu0
  %490 = vmatprep.mubr.bf16.mxu0 %v168
  %491 = vmatmul.mubr.bf16.gmra.mrb[0].mxu0 %v167
  %v492 = vpop.f32.mrb[0].mxu0
  %v493 = vadd.f32 %v428, %v492
  %v494 = vpop.f32.mrb[0].mxu0
  %v495 = vpop.f32.mrb[0].mxu0
  %v496 = vadd.f32 %v431, %v495
  %v497 = vpop.f32.mrb[0].mxu0
  %498 = vmatprep.mubr.bf16.mxu0 %v172
  %499 = vmatmul.mubr.bf16.gmra.mrb[0].mxu0 %v171
  %v500 = vpop.f32.mrb[0].mxu0
  %v501 = vadd.f32 %v436, %v500
  %v502 = vpop.f32.mrb[0].mxu0
  %v503 = vpop.f32.mrb[0].mxu0
  %v504 = vadd.f32 %v439, %v503
  %v505 = vpop.f32.mrb[0].mxu0
  %506 = vmatprep.mubr.bf16.mxu0 %v176
  %507 = vmatmul.mubr.bf16.gmra.mrb[0].mxu0 %v175
  %v508 = vpop.f32.mrb[0].mxu0
  %v509 = vadd.f32 %v444, %v508
  %v510 = vpop.f32.mrb[0].mxu0
  %v511 = vpop.f32.mrb[0].mxu0
  %v512 = vadd.f32 %v447, %v511
  %v513 = vpop.f32.mrb[0].mxu0
  %514 = vdwg.mxu0
  %523 = vrot.lane.b32.xlu0 %v485, 96
  %v524 = vpop.permute.xlu0 %523
  %525 = vrot.lane.b32.xlu0 %v488, 96
  %v526 = vpop.permute.xlu0 %525
  %527 = vrot.lane.b32.xlu0 %v493, 96
  %v528 = vpop.permute.xlu0 %527
  %529 = vrot.lane.b32.xlu0 %v496, 96
  %v530 = vpop.permute.xlu0 %529
  %531 = vrot.lane.b32.xlu0 %v501, 96
  %v532 = vpop.permute.xlu0 %531
  %533 = vrot.lane.b32.xlu0 %v504, 96
  %v534 = vpop.permute.xlu0 %533
  %535 = vrot.lane.b32.xlu0 %v509, 96
  %v536 = vpop.permute.xlu0 %535
  %537 = vrot.lane.b32.xlu0 %v512, 96
  %v538 = vpop.permute.xlu0 %537
  %v547 = vmax.f32 %v485, %v524
  %v548 = vmax.f32 %v488, %v526
  %v549 = vmax.f32 %v493, %v528
  %v550 = vmax.f32 %v496, %v530
  %v551 = vmax.f32 %v501, %v532
  %v552 = vmax.f32 %v504, %v534
  %v553 = vmax.f32 %v509, %v536
  %v554 = vmax.f32 %v512, %v538
  %563 = vrot.lane.b32.xlu0 %v547, 64
  %v564 = vpop.permute.xlu0 %563
  %565 = vrot.lane.b32.xlu0 %v548, 64
  %v566 = vpop.permute.xlu0 %565
  %567 = vrot.lane.b32.xlu0 %v549, 64
  %v568 = vpop.permute.xlu0 %567
  %569 = vrot.lane.b32.xlu0 %v550, 64
  %v570 = vpop.permute.xlu0 %569
  %571 = vrot.lane.b32.xlu0 %v551, 64
  %v572 = vpop.permute.xlu0 %571
  %573 = vrot.lane.b32.xlu0 %v552, 64
  %v574 = vpop.permute.xlu0 %573
  %575 = vrot.lane.b32.xlu0 %v553, 64
  %v576 = vpop.permute.xlu0 %575
  %577 = vrot.lane.b32.xlu0 %v554, 64
  %v578 = vpop.permute.xlu0 %577
  %v587 = vmax.f32 %v547, %v564
  %v588 = vmax.f32 %v548, %v566
  %v589 = vmax.f32 %v549, %v568
  %v590 = vmax.f32 %v550, %v570
  %v591 = vmax.f32 %v551, %v572
  %v592 = vmax.f32 %v552, %v574
  %v593 = vmax.f32 %v553, %v576
  %v594 = vmax.f32 %v554, %v578
  %v595 = vld [vmem:[%s2] sm:$0xff]
  %v596 = vld [vmem:[%s2 + $0x8] sm:$0xff]
  %v597 = vld [vmem:[%s2 + $0x10] sm:$0xff]
  %v598 = vld [vmem:[%s2 + $0x18] sm:$0xff]
  %v599 = vld [vmem:[%s2 + $0x20] sm:$0xff]
  %v600 = vld [vmem:[%s2 + $0x28] sm:$0xff]
  %v601 = vld [vmem:[%s2 + $0x30] sm:$0xff]
  %v602 = vld [vmem:[%s2 + $0x38] sm:$0xff]
  %604 = vset.pattern.permute.xlu0 0
  %605 = vperm.xlu0 %604, %v595
  %v606 = vpop.permute.xlu0 %605
  %609 = vset.pattern.permute.xlu0 0
  %610 = vperm.xlu0 %609, %v596
  %v611 = vpop.permute.xlu0 %610
  %614 = vset.pattern.permute.xlu0 0
  %615 = vperm.xlu0 %614, %v597
  %v616 = vpop.permute.xlu0 %615
  %619 = vset.pattern.permute.xlu0 0
  %620 = vperm.xlu0 %619, %v598
  %v621 = vpop.permute.xlu0 %620
  %624 = vset.pattern.permute.xlu0 0
  %625 = vperm.xlu0 %624, %v599
  %v626 = vpop.permute.xlu0 %625
  %629 = vset.pattern.permute.xlu0 0
  %630 = vperm.xlu0 %629, %v600
  %v631 = vpop.permute.xlu0 %630
  %634 = vset.pattern.permute.xlu0 0
  %635 = vperm.xlu0 %634, %v601
  %v636 = vpop.permute.xlu0 %635
  %639 = vset.pattern.permute.xlu0 0
  %640 = vperm.xlu0 %639, %v602
  %v641 = vpop.permute.xlu0 %640
  %v643 = vadd.f32 %v587, %v606
  %v644 = vadd.f32 %v588, %v611
  %v645 = vadd.f32 %v589, %v616
  %v646 = vadd.f32 %v590, %v621
  %v647 = vadd.f32 %v591, %v626
  %v648 = vadd.f32 %v592, %v631
  %v649 = vadd.f32 %v593, %v636
  %v650 = vadd.f32 %v594, %v641
  %v651 = vmax.f32 %v643, 0.0
  %v652 = vmax.f32 %v644, 0.0
  %v653 = vmax.f32 %v645, 0.0
  %v654 = vmax.f32 %v646, 0.0
  %v655 = vmax.f32 %v647, 0.0
  %v656 = vmax.f32 %v648, 0.0
  %v657 = vmax.f32 %v649, 0.0
  %v658 = vmax.f32 %v650, 0.0
  %v659 = vpack.c.bf16 %v652, %v651
  %v660 = vpack.c.bf16 %v654, %v653
  %v661 = vpack.c.bf16 %v656, %v655
  %v662 = vpack.c.bf16 %v658, %v657
  %v663 = vld [vmem:[%s3] sm:$0xf]
  %v664 = vld [vmem:[%s3 + $0x4] sm:$0xf]
  %v665 = vld [vmem:[%s3 + $0x8] sm:$0xf]
  %v666 = vld [vmem:[%s3 + $0xc] sm:$0xf]
  %v667 = vld [vmem:[%s3 + $0x10] sm:$0xf]
  %v668 = vld [vmem:[%s3 + $0x14] sm:$0xf]
  %v669 = vld [vmem:[%s3 + $0x18] sm:$0xf]
  %v670 = vld [vmem:[%s3 + $0x1c] sm:$0xf]
  %v671 = vld [vmem:[%s3 + $0x20] sm:$0xf]
  %v672 = vld [vmem:[%s3 + $0x24] sm:$0xf]
  %v673 = vld [vmem:[%s3 + $0x28] sm:$0xf]
  %v674 = vld [vmem:[%s3 + $0x2c] sm:$0xf]
  %v675 = vld [vmem:[%s3 + $0x30] sm:$0xf]
  %v676 = vld [vmem:[%s3 + $0x34] sm:$0xf]
  %v677 = vld [vmem:[%s3 + $0x38] sm:$0xf]
  %v678 = vld [vmem:[%s3 + $0x3c] sm:$0xf]
  %v679 = vld [vmem:[%s3 + $0x40] sm:$0xf]
  %v680 = vld [vmem:[%s3 + $0x44] sm:$0xf]
  %v681 = vld [vmem:[%s3 + $0x48] sm:$0xf]
  %v682 = vld [vmem:[%s3 + $0x4c] sm:$0xf]
  %v683 = vld [vmem:[%s3 + $0x50] sm:$0xf]
  %v684 = vld [vmem:[%s3 + $0x54] sm:$0xf]
  %v685 = vld [vmem:[%s3 + $0x58] sm:$0xf]
  %v686 = vld [vmem:[%s3 + $0x5c] sm:$0xf]
  %v687 = vld [vmem:[%s3 + $0x60] sm:$0xf]
  %v688 = vld [vmem:[%s3 + $0x64] sm:$0xf]
  %v689 = vld [vmem:[%s3 + $0x68] sm:$0xf]
  %v690 = vld [vmem:[%s3 + $0x6c] sm:$0xf]
  %v691 = vld [vmem:[%s3 + $0x70] sm:$0xf]
  %v692 = vld [vmem:[%s3 + $0x74] sm:$0xf]
  %v693 = vld [vmem:[%s3 + $0x78] sm:$0xf]
  %v694 = vld [vmem:[%s3 + $0x7c] sm:$0xf]
  %v695 = vld [vmem:[%s3 + $0x80] sm:$0xf]
  %v696 = vld [vmem:[%s3 + $0x84] sm:$0xf]
  %v697 = vld [vmem:[%s3 + $0x88] sm:$0xf]
  %v698 = vld [vmem:[%s3 + $0x8c] sm:$0xf]
  %v699 = vld [vmem:[%s3 + $0x90] sm:$0xf]
  %v700 = vld [vmem:[%s3 + $0x94] sm:$0xf]
  %v701 = vld [vmem:[%s3 + $0x98] sm:$0xf]
  %v702 = vld [vmem:[%s3 + $0x9c] sm:$0xf]
  %v703 = vld [vmem:[%s3 + $0xa0] sm:$0xf]
  %v704 = vld [vmem:[%s3 + $0xa4] sm:$0xf]
  %v705 = vld [vmem:[%s3 + $0xa8] sm:$0xf]
  %v706 = vld [vmem:[%s3 + $0xac] sm:$0xf]
  %v707 = vld [vmem:[%s3 + $0xb0] sm:$0xf]
  %v708 = vld [vmem:[%s3 + $0xb4] sm:$0xf]
  %v709 = vld [vmem:[%s3 + $0xb8] sm:$0xf]
  %v710 = vld [vmem:[%s3 + $0xbc] sm:$0xf]
  %v711 = vld [vmem:[%s3 + $0xc0] sm:$0xf]
  %v712 = vld [vmem:[%s3 + $0xc4] sm:$0xf]
  %v713 = vld [vmem:[%s3 + $0xc8] sm:$0xf]
  %v714 = vld [vmem:[%s3 + $0xcc] sm:$0xf]
  %v715 = vld [vmem:[%s3 + $0xd0] sm:$0xf]
  %v716 = vld [vmem:[%s3 + $0xd4] sm:$0xf]
  %v717 = vld [vmem:[%s3 + $0xd8] sm:$0xf]
  %v718 = vld [vmem:[%s3 + $0xdc] sm:$0xf]
  %v719 = vld [vmem:[%s3 + $0xe0] sm:$0xf]
  %v720 = vld [vmem:[%s3 + $0xe4] sm:$0xf]
  %v721 = vld [vmem:[%s3 + $0xe8] sm:$0xf]
  %v722 = vld [vmem:[%s3 + $0xec] sm:$0xf]
  %v723 = vld [vmem:[%s3 + $0xf0] sm:$0xf]
  %v724 = vld [vmem:[%s3 + $0xf4] sm:$0xf]
  %v725 = vld [vmem:[%s3 + $0xf8] sm:$0xf]
  %v726 = vld [vmem:[%s3 + $0xfc] sm:$0xf]
  %v727 = vld [vmem:[%s3 + $0x100] sm:$0xf]
  %v728 = vld [vmem:[%s3 + $0x104] sm:$0xf]
  %v729 = vld [vmem:[%s3 + $0x108] sm:$0xf]
  %v730 = vld [vmem:[%s3 + $0x10c] sm:$0xf]
  %v731 = vld [vmem:[%s3 + $0x110] sm:$0xf]
  %v732 = vld [vmem:[%s3 + $0x114] sm:$0xf]
  %v733 = vld [vmem:[%s3 + $0x118] sm:$0xf]
  %v734 = vld [vmem:[%s3 + $0x11c] sm:$0xf]
  %v807 = vunpack.c.l.b16 %v663
  %v808 = vunpack.c.l.b16 %v664
  %v809 = vunpack.c.l.b16 %v665
  %v810 = vunpack.c.l.b16 %v666
  %v811 = vunpack.c.l.b16 %v667
  %v812 = vunpack.c.l.b16 %v668
  %v813 = vunpack.c.l.b16 %v669
  %v814 = vunpack.c.l.b16 %v670
  %v815 = vunpack.c.l.b16 %v671
  %v816 = vunpack.c.l.b16 %v672
  %v817 = vunpack.c.l.b16 %v673
  %v818 = vunpack.c.l.b16 %v674
  %v819 = vunpack.c.l.b16 %v675
  %v820 = vunpack.c.l.b16 %v676
  %v821 = vunpack.c.l.b16 %v677
  %v822 = vunpack.c.l.b16 %v678
  %v823 = vunpack.c.l.b16 %v679
  %v824 = vunpack.c.l.b16 %v680
  %v825 = vunpack.c.l.b16 %v681
  %v826 = vunpack.c.l.b16 %v682
  %v827 = vunpack.c.l.b16 %v683
  %v828 = vunpack.c.l.b16 %v684
  %v829 = vunpack.c.l.b16 %v685
  %v830 = vunpack.c.l.b16 %v686
  %v831 = vunpack.c.l.b16 %v687
  %v832 = vunpack.c.l.b16 %v688
  %v833 = vunpack.c.l.b16 %v689
  %v834 = vunpack.c.l.b16 %v690
  %v835 = vunpack.c.l.b16 %v691
  %v836 = vunpack.c.l.b16 %v692
  %v837 = vunpack.c.l.b16 %v693
  %v838 = vunpack.c.l.b16 %v694
  %v839 = vunpack.c.l.b16 %v695
  %v840 = vunpack.c.l.b16 %v696
  %v841 = vunpack.c.l.b16 %v697
  %v842 = vunpack.c.l.b16 %v698
  %v843 = vunpack.c.l.b16 %v699
  %v844 = vunpack.c.l.b16 %v700
  %v845 = vunpack.c.l.b16 %v701
  %v846 = vunpack.c.l.b16 %v702
  %v847 = vunpack.c.l.b16 %v703
  %v848 = vunpack.c.l.b16 %v704
  %v849 = vunpack.c.l.b16 %v705
  %v850 = vunpack.c.l.b16 %v706
  %v851 = vunpack.c.l.b16 %v707
  %v852 = vunpack.c.l.b16 %v708
  %v853 = vunpack.c.l.b16 %v709
  %v854 = vunpack.c.l.b16 %v710
  %v855 = vunpack.c.l.b16 %v711
  %v856 = vunpack.c.l.b16 %v712
  %v857 = vunpack.c.l.b16 %v713
  %v858 = vunpack.c.l.b16 %v714
  %v859 = vunpack.c.l.b16 %v715
  %v860 = vunpack.c.l.b16 %v716
  %v861 = vunpack.c.l.b16 %v717
  %v862 = vunpack.c.l.b16 %v718
  %v863 = vunpack.c.l.b16 %v719
  %v864 = vunpack.c.l.b16 %v720
  %v865 = vunpack.c.l.b16 %v721
  %v866 = vunpack.c.l.b16 %v722
  %v867 = vunpack.c.l.b16 %v723
  %v868 = vunpack.c.l.b16 %v724
  %v869 = vunpack.c.l.b16 %v725
  %v870 = vunpack.c.l.b16 %v726
  %v871 = vunpack.c.l.b16 %v727
  %v872 = vunpack.c.l.b16 %v728
  %v873 = vunpack.c.l.b16 %v729
  %v874 = vunpack.c.l.b16 %v730
  %v875 = vunpack.c.l.b16 %v731
  %v876 = vunpack.c.l.b16 %v732
  %v877 = vunpack.c.l.b16 %v733
  %v878 = vunpack.c.l.b16 %v734
  %v879 = vpack.c.b16 %v808, %v807
  %v880 = vpack.c.b16 %v810, %v809
  %v881 = vpack.c.b16 %v812, %v811
  %v882 = vpack.c.b16 %v814, %v813
  %v883 = vpack.c.b16 %v816, %v815
  %v884 = vpack.c.b16 %v818, %v817
  %v885 = vpack.c.b16 %v820, %v819
  %v886 = vpack.c.b16 %v822, %v821
  %v887 = vpack.c.b16 %v824, %v823
  %v888 = vpack.c.b16 %v826, %v825
  %v889 = vpack.c.b16 %v828, %v827
  %v890 = vpack.c.b16 %v830, %v829
  %v891 = vpack.c.b16 %v832, %v831
  %v892 = vpack.c.b16 %v834, %v833
  %v893 = vpack.c.b16 %v836, %v835
  %v894 = vpack.c.b16 %v838, %v837
  %v895 = vpack.c.b16 %v840, %v839
  %v896 = vpack.c.b16 %v842, %v841
  %v897 = vpack.c.b16 %v844, %v843
  %v898 = vpack.c.b16 %v846, %v845
  %v899 = vpack.c.b16 %v848, %v847
  %v900 = vpack.c.b16 %v850, %v849
  %v901 = vpack.c.b16 %v852, %v851
  %v902 = vpack.c.b16 %v854, %v853
  %v903 = vpack.c.b16 %v856, %v855
  %v904 = vpack.c.b16 %v858, %v857
  %v905 = vpack.c.b16 %v860, %v859
  %v906 = vpack.c.b16 %v862, %v861
  %v907 = vpack.c.b16 %v864, %v863
  %v908 = vpack.c.b16 %v866, %v865
  %v909 = vpack.c.b16 %v868, %v867
  %v910 = vpack.c.b16 %v870, %v869
  %v911 = vpack.c.b16 %v872, %v871
  %v912 = vpack.c.b16 %v874, %v873
  %v913 = vpack.c.b16 %v876, %v875
  %v914 = vpack.c.b16 %v878, %v877
  %vm915 = vcmask 523264
  %v917 = vsel %vm915, %v879, 0
  %v920 = vsel %vm915, %v880, 0
  %v923 = vsel %vm915, %v881, 0
  %v926 = vsel %vm915, %v882, 0
  %v929 = vsel %vm915, %v883, 0
  %v932 = vsel %vm915, %v884, 0
  %v935 = vsel %vm915, %v885, 0
  %v938 = vsel %vm915, %v886, 0
  %v941 = vsel %vm915, %v887, 0
  %v944 = vsel %vm915, %v888, 0
  %v947 = vsel %vm915, %v889, 0
  %v950 = vsel %vm915, %v890, 0
  %v953 = vsel %vm915, %v891, 0
  %v956 = vsel %vm915, %v892, 0
  %v959 = vsel %vm915, %v893, 0
  %v962 = vsel %vm915, %v894, 0
  %v965 = vsel %vm915, %v895, 0
  %v968 = vsel %vm915, %v896, 0
  %v971 = vsel %vm915, %v897, 0
  %v974 = vsel %vm915, %v898, 0
  %v977 = vsel %vm915, %v899, 0
  %v980 = vsel %vm915, %v900, 0
  %v983 = vsel %vm915, %v901, 0
  %v986 = vsel %vm915, %v902, 0
  %v989 = vsel %vm915, %v903, 0
  %v992 = vsel %vm915, %v904, 0
  %v995 = vsel %vm915, %v905, 0
  %v998 = vsel %vm915, %v906, 0
  %v1001 = vsel %vm915, %v907, 0
  %v1004 = vsel %vm915, %v908, 0
  %v1007 = vsel %vm915, %v909, 0
  %v1010 = vsel %vm915, %v910, 0
  %v1013 = vsel %vm915, %v911, 0
  %v1016 = vsel %vm915, %v912, 0
  %v1019 = vsel %vm915, %v913, 0
  %v1022 = vsel %vm915, %v914, 0
  %1024 = vmatprep.subr.bf16.mxu0 0
  %1025 = vmatpush1.bf16.msra.mxu0 %v659
  %1026 = vmatprep.subr.bf16.mxu0 0
  %1027 = vmatpush1.bf16.msra.mxu0 %v660
  %1028 = vmatprep.subr.bf16.mxu0 0
  %1029 = vmatpush1.bf16.msra.mxu0 %v661
  %1030 = vmatprep.subr.bf16.mxu0 0
  %1031 = vmatpush1.bf16.msra.mxu0 %v662
  %1032 = vmatprep.subr.bf16.mxu0 0
  %1033 = vmatpush1.bf16.msra.mxu0 0
  %1034 = vmatprep.subr.bf16.mxu0 0
  %1035 = vmatpush1.bf16.msra.mxu0 0
  %1036 = vmatprep.subr.bf16.mxu0 0
  %1037 = vmatpush1.bf16.msra.mxu0 0
  %1038 = vmatprep.subr.bf16.mxu0 0
  %1039 = vmatpush1.bf16.msra.mxu0 0
  %1040 = vmatprep.subr.bf16.mxu0 0
  %1041 = vmatpush1.bf16.msra.mxu0 0
  %1042 = vmatprep.subr.bf16.mxu0 0
  %1043 = vmatpush1.bf16.msra.mxu0 0
  %1044 = vmatprep.subr.bf16.mxu0 0
  %1045 = vmatpush1.bf16.msra.mxu0 0
  %1046 = vmatprep.subr.bf16.mxu0 0
  %1047 = vmatpush1.bf16.msra.mxu0 0
  %1048 = vmatprep.subr.bf16.mxu0 0
  %1049 = vmatpush1.bf16.msra.mxu0 0
  %1050 = vmatprep.subr.bf16.mxu0 0
  %1051 = vmatpush1.bf16.msra.mxu0 0
  %1052 = vmatprep.subr.bf16.mxu0 0
  %1053 = vmatpush1.bf16.msra.mxu0 0
  %1054 = vmatprep.subr.bf16.mxu0 0
  %1055 = vmatpush1.bf16.msra.mxu0 0
  %1056 = vmatprep.mubr.bf16.mxu0 0
  %1057 = vmatmul.mubr.bf16.gmra.mrb[0].mxu0 %v917
  %v1058 = vpop.f32.mrb[0].mxu0
  %v1059 = vadd.f32 0.0, %v1058
  %v1060 = vpop.f32.mrb[0].mxu0
  %v1061 = vpop.f32.mrb[0].mxu0
  %v1062 = vadd.f32 0.0, %v1061
  %v1063 = vpop.f32.mrb[0].mxu0
  %1064 = vmatprep.mubr.bf16.mxu0 0
  %1065 = vmatmul.mubr.bf16.gmra.mrb[0].mxu0 %v920
  %v1066 = vpop.f32.mrb[0].mxu0
  %v1067 = vadd.f32 0.0, %v1066
  %v1068 = vpop.f32.mrb[0].mxu0
  %v1069 = vpop.f32.mrb[0].mxu0
  %v1070 = vadd.f32 0.0, %v1069
  %v1071 = vpop.f32.mrb[0].mxu0
  %1072 = vmatprep.mubr.bf16.mxu0 0
  %1073 = vmatmul.mubr.bf16.gmra.mrb[0].mxu0 %v923
  %v1074 = vpop.f32.mrb[0].mxu0
  %v1075 = vadd.f32 0.0, %v1074
  %v1076 = vpop.f32.mrb[0].mxu0
  %v1077 = vpop.f32.mrb[0].mxu0
  %v1078 = vadd.f32 0.0, %v1077
  %v1079 = vpop.f32.mrb[0].mxu0
  %1080 = vmatprep.mubr.bf16.mxu0 0
  %1081 = vmatmul.mubr.bf16.gmra.mrb[0].mxu0 %v926
  %v1082 = vpop.f32.mrb[0].mxu0
  %v1083 = vadd.f32 0.0, %v1082
  %v1084 = vpop.f32.mrb[0].mxu0
  %v1085 = vpop.f32.mrb[0].mxu0
  %v1086 = vadd.f32 0.0, %v1085
  %v1087 = vpop.f32.mrb[0].mxu0
  %1088 = vmatprep.mubr.bf16.mxu0 0
  %1089 = vmatmul.mubr.bf16.gmra.mrb[0].mxu0 %v929
  %v1090 = vpop.f32.mrb[0].mxu0
  %v1091 = vadd.f32 0.0, %v1090
  %v1092 = vpop.f32.mrb[0].mxu0
  %v1093 = vpop.f32.mrb[0].mxu0
  %v1094 = vadd.f32 0.0, %v1093
  %v1095 = vpop.f32.mrb[0].mxu0
  %1096 = vmatprep.mubr.bf16.mxu0 0
  %1097 = vmatmul.mubr.bf16.gmra.mrb[0].mxu0 %v932
  %v1098 = vpop.f32.mrb[0].mxu0
  %v1099 = vadd.f32 0.0, %v1098
  %v1100 = vpop.f32.mrb[0].mxu0
  %v1101 = vpop.f32.mrb[0].mxu0
  %v1102 = vadd.f32 0.0, %v1101
  %v1103 = vpop.f32.mrb[0].mxu0
  %1104 = vmatprep.mubr.bf16.mxu0 0
  %1105 = vmatmul.mubr.bf16.gmra.mrb[0].mxu0 %v935
  %v1106 = vpop.f32.mrb[0].mxu0
  %v1107 = vadd.f32 0.0, %v1106
  %v1108 = vpop.f32.mrb[0].mxu0
  %v1109 = vpop.f32.mrb[0].mxu0
  %v1110 = vadd.f32 0.0, %v1109
  %v1111 = vpop.f32.mrb[0].mxu0
  %1112 = vmatprep.mubr.bf16.mxu0 0
  %1113 = vmatmul.mubr.bf16.gmra.mrb[0].mxu0 %v938
  %v1114 = vpop.f32.mrb[0].mxu0
  %v1115 = vadd.f32 0.0, %v1114
  %v1116 = vpop.f32.mrb[0].mxu0
  %v1117 = vpop.f32.mrb[0].mxu0
  %v1118 = vadd.f32 0.0, %v1117
  %v1119 = vpop.f32.mrb[0].mxu0
  %1120 = vmatprep.mubr.bf16.mxu0 0
  %1121 = vmatmul.mubr.bf16.gmra.mrb[0].mxu0 %v941
  %v1122 = vpop.f32.mrb[0].mxu0
  %v1123 = vadd.f32 0.0, %v1122
  %v1124 = vpop.f32.mrb[0].mxu0
  %v1125 = vpop.f32.mrb[0].mxu0
  %v1126 = vadd.f32 0.0, %v1125
  %v1127 = vpop.f32.mrb[0].mxu0
  %1128 = vmatprep.mubr.bf16.mxu0 0
  %1129 = vmatmul.mubr.bf16.gmra.mrb[0].mxu0 %v944
  %v1130 = vpop.f32.mrb[0].mxu0
  %v1131 = vadd.f32 0.0, %v1130
  %v1132 = vpop.f32.mrb[0].mxu0
  %v1133 = vpop.f32.mrb[0].mxu0
  %v1134 = vadd.f32 0.0, %v1133
  %v1135 = vpop.f32.mrb[0].mxu0
  %1136 = vmatprep.mubr.bf16.mxu0 0
  %1137 = vmatmul.mubr.bf16.gmra.mrb[0].mxu0 %v947
  %v1138 = vpop.f32.mrb[0].mxu0
  %v1139 = vadd.f32 0.0, %v1138
  %v1140 = vpop.f32.mrb[0].mxu0
  %v1141 = vpop.f32.mrb[0].mxu0
  %v1142 = vadd.f32 0.0, %v1141
  %v1143 = vpop.f32.mrb[0].mxu0
  %1144 = vmatprep.mubr.bf16.mxu0 0
  %1145 = vmatmul.mubr.bf16.gmra.mrb[0].mxu0 %v950
  %v1146 = vpop.f32.mrb[0].mxu0
  %v1147 = vadd.f32 0.0, %v1146
  %v1148 = vpop.f32.mrb[0].mxu0
  %v1149 = vpop.f32.mrb[0].mxu0
  %v1150 = vadd.f32 0.0, %v1149
  %v1151 = vpop.f32.mrb[0].mxu0
  %1152 = vmatprep.mubr.bf16.mxu0 0
  %1153 = vmatmul.mubr.bf16.gmra.mrb[0].mxu0 %v953
  %v1154 = vpop.f32.mrb[0].mxu0
  %v1155 = vadd.f32 0.0, %v1154
  %v1156 = vpop.f32.mrb[0].mxu0
  %v1157 = vpop.f32.mrb[0].mxu0
  %v1158 = vadd.f32 0.0, %v1157
  %v1159 = vpop.f32.mrb[0].mxu0
  %1160 = vmatprep.mubr.bf16.mxu0 0
  %1161 = vmatmul.mubr.bf16.gmra.mrb[0].mxu0 %v956
  %v1162 = vpop.f32.mrb[0].mxu0
  %v1163 = vadd.f32 0.0, %v1162
  %v1164 = vpop.f32.mrb[0].mxu0
  %v1165 = vpop.f32.mrb[0].mxu0
  %v1166 = vadd.f32 0.0, %v1165
  %v1167 = vpop.f32.mrb[0].mxu0
  %1168 = vmatprep.mubr.bf16.mxu0 0
  %1169 = vmatmul.mubr.bf16.gmra.mrb[0].mxu0 %v959
  %v1170 = vpop.f32.mrb[0].mxu0
  %v1171 = vadd.f32 0.0, %v1170
  %v1172 = vpop.f32.mrb[0].mxu0
  %v1173 = vpop.f32.mrb[0].mxu0
  %v1174 = vadd.f32 0.0, %v1173
  %v1175 = vpop.f32.mrb[0].mxu0
  %1176 = vmatprep.mubr.bf16.mxu0 0
  %1177 = vmatmul.mubr.bf16.gmra.mrb[0].mxu0 %v962
  %v1178 = vpop.f32.mrb[0].mxu0
  %v1179 = vadd.f32 0.0, %v1178
  %v1180 = vpop.f32.mrb[0].mxu0
  %v1181 = vpop.f32.mrb[0].mxu0
  %v1182 = vadd.f32 0.0, %v1181
  %v1183 = vpop.f32.mrb[0].mxu0
  %1184 = vmatprep.mubr.bf16.mxu0 0
  %1185 = vmatmul.mubr.bf16.gmra.mrb[0].mxu0 %v965
  %v1186 = vpop.f32.mrb[0].mxu0
  %v1187 = vadd.f32 0.0, %v1186
  %v1188 = vpop.f32.mrb[0].mxu0
  %v1189 = vpop.f32.mrb[0].mxu0
  %v1190 = vadd.f32 0.0, %v1189
  %v1191 = vpop.f32.mrb[0].mxu0
  %1192 = vmatprep.mubr.bf16.mxu0 0
  %1193 = vmatmul.mubr.bf16.gmra.mrb[0].mxu0 %v968
  %v1194 = vpop.f32.mrb[0].mxu0
  %v1195 = vadd.f32 0.0, %v1194
  %v1196 = vpop.f32.mrb[0].mxu0
  %v1197 = vpop.f32.mrb[0].mxu0
  %v1198 = vadd.f32 0.0, %v1197
  %v1199 = vpop.f32.mrb[0].mxu0
  %1200 = vmatprep.mubr.bf16.mxu0 0
  %1201 = vmatmul.mubr.bf16.gmra.mrb[0].mxu0 %v971
  %v1202 = vpop.f32.mrb[0].mxu0
  %v1203 = vadd.f32 0.0, %v1202
  %v1204 = vpop.f32.mrb[0].mxu0
  %v1205 = vpop.f32.mrb[0].mxu0
  %v1206 = vadd.f32 0.0, %v1205
  %v1207 = vpop.f32.mrb[0].mxu0
  %1208 = vmatprep.mubr.bf16.mxu0 0
  %1209 = vmatmul.mubr.bf16.gmra.mrb[0].mxu0 %v974
  %v1210 = vpop.f32.mrb[0].mxu0
  %v1211 = vadd.f32 0.0, %v1210
  %v1212 = vpop.f32.mrb[0].mxu0
  %v1213 = vpop.f32.mrb[0].mxu0
  %v1214 = vadd.f32 0.0, %v1213
  %v1215 = vpop.f32.mrb[0].mxu0
  %1216 = vmatprep.mubr.bf16.mxu0 0
  %1217 = vmatmul.mubr.bf16.gmra.mrb[0].mxu0 %v977
  %v1218 = vpop.f32.mrb[0].mxu0
  %v1219 = vadd.f32 0.0, %v1218
  %v1220 = vpop.f32.mrb[0].mxu0
  %v1221 = vpop.f32.mrb[0].mxu0
  %v1222 = vadd.f32 0.0, %v1221
  %v1223 = vpop.f32.mrb[0].mxu0
  %1224 = vmatprep.mubr.bf16.mxu0 0
  %1225 = vmatmul.mubr.bf16.gmra.mrb[0].mxu0 %v980
  %v1226 = vpop.f32.mrb[0].mxu0
  %v1227 = vadd.f32 0.0, %v1226
  %v1228 = vpop.f32.mrb[0].mxu0
  %v1229 = vpop.f32.mrb[0].mxu0
  %v1230 = vadd.f32 0.0, %v1229
  %v1231 = vpop.f32.mrb[0].mxu0
  %1232 = vmatprep.mubr.bf16.mxu0 0
  %1233 = vmatmul.mubr.bf16.gmra.mrb[0].mxu0 %v983
  %v1234 = vpop.f32.mrb[0].mxu0
  %v1235 = vadd.f32 0.0, %v1234
  %v1236 = vpop.f32.mrb[0].mxu0
  %v1237 = vpop.f32.mrb[0].mxu0
  %v1238 = vadd.f32 0.0, %v1237
  %v1239 = vpop.f32.mrb[0].mxu0
  %1240 = vmatprep.mubr.bf16.mxu0 0
  %1241 = vmatmul.mubr.bf16.gmra.mrb[0].mxu0 %v986
  %v1242 = vpop.f32.mrb[0].mxu0
  %v1243 = vadd.f32 0.0, %v1242
  %v1244 = vpop.f32.mrb[0].mxu0
  %v1245 = vpop.f32.mrb[0].mxu0
  %v1246 = vadd.f32 0.0, %v1245
  %v1247 = vpop.f32.mrb[0].mxu0
  %1248 = vmatprep.mubr.bf16.mxu0 0
  %1249 = vmatmul.mubr.bf16.gmra.mrb[0].mxu0 %v989
  %v1250 = vpop.f32.mrb[0].mxu0
  %v1251 = vadd.f32 0.0, %v1250
  %v1252 = vpop.f32.mrb[0].mxu0
  %v1253 = vpop.f32.mrb[0].mxu0
  %v1254 = vadd.f32 0.0, %v1253
  %v1255 = vpop.f32.mrb[0].mxu0
  %1256 = vmatprep.mubr.bf16.mxu0 0
  %1257 = vmatmul.mubr.bf16.gmra.mrb[0].mxu0 %v992
  %v1258 = vpop.f32.mrb[0].mxu0
  %v1259 = vadd.f32 0.0, %v1258
  %v1260 = vpop.f32.mrb[0].mxu0
  %v1261 = vpop.f32.mrb[0].mxu0
  %v1262 = vadd.f32 0.0, %v1261
  %v1263 = vpop.f32.mrb[0].mxu0
  %1264 = vmatprep.mubr.bf16.mxu0 0
  %1265 = vmatmul.mubr.bf16.gmra.mrb[0].mxu0 %v995
  %v1266 = vpop.f32.mrb[0].mxu0
  %v1267 = vadd.f32 0.0, %v1266
  %v1268 = vpop.f32.mrb[0].mxu0
  %v1269 = vpop.f32.mrb[0].mxu0
  %v1270 = vadd.f32 0.0, %v1269
  %v1271 = vpop.f32.mrb[0].mxu0
  %1272 = vmatprep.mubr.bf16.mxu0 0
  %1273 = vmatmul.mubr.bf16.gmra.mrb[0].mxu0 %v998
  %v1274 = vpop.f32.mrb[0].mxu0
  %v1275 = vadd.f32 0.0, %v1274
  %v1276 = vpop.f32.mrb[0].mxu0
  %v1277 = vpop.f32.mrb[0].mxu0
  %v1278 = vadd.f32 0.0, %v1277
  %v1279 = vpop.f32.mrb[0].mxu0
  %1280 = vmatprep.mubr.bf16.mxu0 0
  %1281 = vmatmul.mubr.bf16.gmra.mrb[0].mxu0 %v1001
  %v1282 = vpop.f32.mrb[0].mxu0
  %v1283 = vadd.f32 0.0, %v1282
  %v1284 = vpop.f32.mrb[0].mxu0
  %v1285 = vpop.f32.mrb[0].mxu0
  %v1286 = vadd.f32 0.0, %v1285
  %v1287 = vpop.f32.mrb[0].mxu0
  %1288 = vmatprep.mubr.bf16.mxu0 0
  %1289 = vmatmul.mubr.bf16.gmra.mrb[0].mxu0 %v1004
  %v1290 = vpop.f32.mrb[0].mxu0
  %v1291 = vadd.f32 0.0, %v1290
  %v1292 = vpop.f32.mrb[0].mxu0
  %v1293 = vpop.f32.mrb[0].mxu0
  %v1294 = vadd.f32 0.0, %v1293
  %v1295 = vpop.f32.mrb[0].mxu0
  %1296 = vmatprep.mubr.bf16.mxu0 0
  %1297 = vmatmul.mubr.bf16.gmra.mrb[0].mxu0 %v1007
  %v1298 = vpop.f32.mrb[0].mxu0
  %v1299 = vadd.f32 0.0, %v1298
  %v1300 = vpop.f32.mrb[0].mxu0
  %v1301 = vpop.f32.mrb[0].mxu0
  %v1302 = vadd.f32 0.0, %v1301
  %v1303 = vpop.f32.mrb[0].mxu0
  %1304 = vmatprep.mubr.bf16.mxu0 0
  %1305 = vmatmul.mubr.bf16.gmra.mrb[0].mxu0 %v1010
  %v1306 = vpop.f32.mrb[0].mxu0
  %v1307 = vadd.f32 0.0, %v1306
  %v1308 = vpop.f32.mrb[0].mxu0
  %v1309 = vpop.f32.mrb[0].mxu0
  %v1310 = vadd.f32 0.0, %v1309
  %v1311 = vpop.f32.mrb[0].mxu0
  %1312 = vmatprep.mubr.bf16.mxu0 0
  %1313 = vmatmul.mubr.bf16.gmra.mrb[0].mxu0 %v1013
  %v1314 = vpop.f32.mrb[0].mxu0
  %v1315 = vadd.f32 0.0, %v1314
  %v1316 = vpop.f32.mrb[0].mxu0
  %v1317 = vpop.f32.mrb[0].mxu0
  %v1318 = vadd.f32 0.0, %v1317
  %v1319 = vpop.f32.mrb[0].mxu0
  %1320 = vmatprep.mubr.bf16.mxu0 0
  %1321 = vmatmul.mubr.bf16.gmra.mrb[0].mxu0 %v1016
  %v1322 = vpop.f32.mrb[0].mxu0
  %v1323 = vadd.f32 0.0, %v1322
  %v1324 = vpop.f32.mrb[0].mxu0
  %v1325 = vpop.f32.mrb[0].mxu0
  %v1326 = vadd.f32 0.0, %v1325
  %v1327 = vpop.f32.mrb[0].mxu0
  %1328 = vmatprep.mubr.bf16.mxu0 0
  %1329 = vmatmul.mubr.bf16.gmra.mrb[0].mxu0 %v1019
  %v1330 = vpop.f32.mrb[0].mxu0
  %v1331 = vadd.f32 0.0, %v1330
  %v1332 = vpop.f32.mrb[0].mxu0
  %v1333 = vpop.f32.mrb[0].mxu0
  %v1334 = vadd.f32 0.0, %v1333
  %v1335 = vpop.f32.mrb[0].mxu0
  %1336 = vmatprep.mubr.bf16.mxu0 0
  %1337 = vmatmul.mubr.bf16.gmra.mrb[0].mxu0 %v1022
  %v1338 = vpop.f32.mrb[0].mxu0
  %v1339 = vadd.f32 0.0, %v1338
  %v1340 = vpop.f32.mrb[0].mxu0
  %v1341 = vpop.f32.mrb[0].mxu0
  %v1342 = vadd.f32 0.0, %v1341
  %v1343 = vpop.f32.mrb[0].mxu0
  %1344 = vdwg.mxu0
  %1353 = vrot.lane.b32.xlu0 %v1059, 124
  %v1354 = vpop.permute.xlu0 %1353
  %1355 = vrot.lane.b32.xlu0 %v1062, 124
  %v1356 = vpop.permute.xlu0 %1355
  %1357 = vrot.lane.b32.xlu0 %v1067, 124
  %v1358 = vpop.permute.xlu0 %1357
  %1359 = vrot.lane.b32.xlu0 %v1070, 124
  %v1360 = vpop.permute.xlu0 %1359
  %1361 = vrot.lane.b32.xlu0 %v1075, 124
  %v1362 = vpop.permute.xlu0 %1361
  %1363 = vrot.lane.b32.xlu0 %v1078, 124
  %v1364 = vpop.permute.xlu0 %1363
  %1365 = vrot.lane.b32.xlu0 %v1083, 124
  %v1366 = vpop.permute.xlu0 %1365
  %1367 = vrot.lane.b32.xlu0 %v1086, 124
  %v1368 = vpop.permute.xlu0 %1367
  %vm1377 = vcmask 31744
  %v1378 = vsel %vm1377, %v1059, %v1354
  %v1379 = vsel %vm1377, %v1062, %v1356
  %v1380 = vsel %vm1377, %v1067, %v1358
  %v1381 = vsel %vm1377, %v1070, %v1360
  %v1382 = vsel %vm1377, %v1075, %v1362
  %v1383 = vsel %vm1377, %v1078, %v1364
  %v1384 = vsel %vm1377, %v1083, %v1366
  %v1385 = vsel %vm1377, %v1086, %v1368
  %1394 = vrot.lane.b32.xlu0 %v1091, 126
  %v1395 = vpop.permute.xlu0 %1394
  %1396 = vrot.lane.b32.xlu0 %v1094, 126
  %v1397 = vpop.permute.xlu0 %1396
  %1398 = vrot.lane.b32.xlu0 %v1099, 126
  %v1399 = vpop.permute.xlu0 %1398
  %1400 = vrot.lane.b32.xlu0 %v1102, 126
  %v1401 = vpop.permute.xlu0 %1400
  %1402 = vrot.lane.b32.xlu0 %v1107, 126
  %v1403 = vpop.permute.xlu0 %1402
  %1404 = vrot.lane.b32.xlu0 %v1110, 126
  %v1405 = vpop.permute.xlu0 %1404
  %1406 = vrot.lane.b32.xlu0 %v1115, 126
  %v1407 = vpop.permute.xlu0 %1406
  %1408 = vrot.lane.b32.xlu0 %v1118, 126
  %v1409 = vpop.permute.xlu0 %1408
  %1418 = vrot.lane.b32.xlu0 %v1091, 122
  %v1419 = vpop.permute.xlu0 %1418
  %1420 = vrot.lane.b32.xlu0 %v1094, 122
  %v1421 = vpop.permute.xlu0 %1420
  %1422 = vrot.lane.b32.xlu0 %v1099, 122
  %v1423 = vpop.permute.xlu0 %1422
  %1424 = vrot.lane.b32.xlu0 %v1102, 122
  %v1425 = vpop.permute.xlu0 %1424
  %1426 = vrot.lane.b32.xlu0 %v1107, 122
  %v1427 = vpop.permute.xlu0 %1426
  %1428 = vrot.lane.b32.xlu0 %v1110, 122
  %v1429 = vpop.permute.xlu0 %1428
  %1430 = vrot.lane.b32.xlu0 %v1115, 122
  %v1431 = vpop.permute.xlu0 %1430
  %1432 = vrot.lane.b32.xlu0 %v1118, 122
  %v1433 = vpop.permute.xlu0 %1432
  %v1442 = vsel %vm1377, %v1395, %v1419
  %v1443 = vsel %vm1377, %v1397, %v1421
  %v1444 = vsel %vm1377, %v1399, %v1423
  %v1445 = vsel %vm1377, %v1401, %v1425
  %v1446 = vsel %vm1377, %v1403, %v1427
  %v1447 = vsel %vm1377, %v1405, %v1429
  %v1448 = vsel %vm1377, %v1407, %v1431
  %v1449 = vsel %vm1377, %v1409, %v1433
  %v1450 = vadd.f32 %v1378, %v1442
  %v1451 = vadd.f32 %v1379, %v1443
  %v1452 = vadd.f32 %v1380, %v1444
  %v1453 = vadd.f32 %v1381, %v1445
  %v1454 = vadd.f32 %v1382, %v1446
  %v1455 = vadd.f32 %v1383, %v1447
  %v1456 = vadd.f32 %v1384, %v1448
  %v1457 = vadd.f32 %v1385, %v1449
  %1466 = vrot.lane.b32.xlu0 %v1123, 124
  %v1467 = vpop.permute.xlu0 %1466
  %1468 = vrot.lane.b32.xlu0 %v1126, 124
  %v1469 = vpop.permute.xlu0 %1468
  %1470 = vrot.lane.b32.xlu0 %v1131, 124
  %v1471 = vpop.permute.xlu0 %1470
  %1472 = vrot.lane.b32.xlu0 %v1134, 124
  %v1473 = vpop.permute.xlu0 %1472
  %1474 = vrot.lane.b32.xlu0 %v1139, 124
  %v1475 = vpop.permute.xlu0 %1474
  %1476 = vrot.lane.b32.xlu0 %v1142, 124
  %v1477 = vpop.permute.xlu0 %1476
  %1478 = vrot.lane.b32.xlu0 %v1147, 124
  %v1479 = vpop.permute.xlu0 %1478
  %1480 = vrot.lane.b32.xlu0 %v1150, 124
  %v1481 = vpop.permute.xlu0 %1480
  %1490 = vrot.lane.b32.xlu0 %v1123, 120
  %v1491 = vpop.permute.xlu0 %1490
  %1492 = vrot.lane.b32.xlu0 %v1126, 120
  %v1493 = vpop.permute.xlu0 %1492
  %1494 = vrot.lane.b32.xlu0 %v1131, 120
  %v1495 = vpop.permute.xlu0 %1494
  %1496 = vrot.lane.b32.xlu0 %v1134, 120
  %v1497 = vpop.permute.xlu0 %1496
  %1498 = vrot.lane.b32.xlu0 %v1139, 120
  %v1499 = vpop.permute.xlu0 %1498
  %1500 = vrot.lane.b32.xlu0 %v1142, 120
  %v1501 = vpop.permute.xlu0 %1500
  %1502 = vrot.lane.b32.xlu0 %v1147, 120
  %v1503 = vpop.permute.xlu0 %1502
  %1504 = vrot.lane.b32.xlu0 %v1150, 120
  %v1505 = vpop.permute.xlu0 %1504
  %v1514 = vsel %vm1377, %v1467, %v1491
  %v1515 = vsel %vm1377, %v1469, %v1493
  %v1516 = vsel %vm1377, %v1471, %v1495
  %v1517 = vsel %vm1377, %v1473, %v1497
  %v1518 = vsel %vm1377, %v1475, %v1499
  %v1519 = vsel %vm1377, %v1477, %v1501
  %v1520 = vsel %vm1377, %v1479, %v1503
  %v1521 = vsel %vm1377, %v1481, %v1505
  %v1522 = vadd.f32 %v1450, %v1514
  %v1523 = vadd.f32 %v1451, %v1515
  %v1524 = vadd.f32 %v1452, %v1516
  %v1525 = vadd.f32 %v1453, %v1517
  %v1526 = vadd.f32 %v1454, %v1518
  %v1527 = vadd.f32 %v1455, %v1519
  %v1528 = vadd.f32 %v1456, %v1520
  %v1529 = vadd.f32 %v1457, %v1521
  %1538 = vrot.lane.b32.xlu0 %v1155, 120
  %v1539 = vpop.permute.xlu0 %1538
  %1540 = vrot.lane.b32.xlu0 %v1158, 120
  %v1541 = vpop.permute.xlu0 %1540
  %1542 = vrot.lane.b32.xlu0 %v1163, 120
  %v1543 = vpop.permute.xlu0 %1542
  %1544 = vrot.lane.b32.xlu0 %v1166, 120
  %v1545 = vpop.permute.xlu0 %1544
  %1546 = vrot.lane.b32.xlu0 %v1171, 120
  %v1547 = vpop.permute.xlu0 %1546
  %1548 = vrot.lane.b32.xlu0 %v1174, 120
  %v1549 = vpop.permute.xlu0 %1548
  %1550 = vrot.lane.b32.xlu0 %v1179, 120
  %v1551 = vpop.permute.xlu0 %1550
  %1552 = vrot.lane.b32.xlu0 %v1182, 120
  %v1553 = vpop.permute.xlu0 %1552
  %1562 = vrot.lane.b32.xlu0 %v1155, 116
  %v1563 = vpop.permute.xlu0 %1562
  %1564 = vrot.lane.b32.xlu0 %v1158, 116
  %v1565 = vpop.permute.xlu0 %1564
  %1566 = vrot.lane.b32.xlu0 %v1163, 116
  %v1567 = vpop.permute.xlu0 %1566
  %1568 = vrot.lane.b32.xlu0 %v1166, 116
  %v1569 = vpop.permute.xlu0 %1568
  %1570 = vrot.lane.b32.xlu0 %v1171, 116
  %v1571 = vpop.permute.xlu0 %1570
  %1572 = vrot.lane.b32.xlu0 %v1174, 116
  %v1573 = vpop.permute.xlu0 %1572
  %1574 = vrot.lane.b32.xlu0 %v1179, 116
  %v1575 = vpop.permute.xlu0 %1574
  %1576 = vrot.lane.b32.xlu0 %v1182, 116
  %v1577 = vpop.permute.xlu0 %1576
  %v1586 = vsel %vm1377, %v1539, %v1563
  %v1587 = vsel %vm1377, %v1541, %v1565
  %v1588 = vsel %vm1377, %v1543, %v1567
  %v1589 = vsel %vm1377, %v1545, %v1569
  %v1590 = vsel %vm1377, %v1547, %v1571
  %v1591 = vsel %vm1377, %v1549, %v1573
  %v1592 = vsel %vm1377, %v1551, %v1575
  %v1593 = vsel %vm1377, %v1553, %v1577
  %v1594 = vadd.f32 %v1522, %v1586
  %v1595 = vadd.f32 %v1523, %v1587
  %v1596 = vadd.f32 %v1524, %v1588
  %v1597 = vadd.f32 %v1525, %v1589
  %v1598 = vadd.f32 %v1526, %v1590
  %v1599 = vadd.f32 %v1527, %v1591
  %v1600 = vadd.f32 %v1528, %v1592
  %v1601 = vadd.f32 %v1529, %v1593
  %1610 = vrot.lane.b32.xlu0 %v1187, 118
  %v1611 = vpop.permute.xlu0 %1610
  %1612 = vrot.lane.b32.xlu0 %v1190, 118
  %v1613 = vpop.permute.xlu0 %1612
  %1614 = vrot.lane.b32.xlu0 %v1195, 118
  %v1615 = vpop.permute.xlu0 %1614
  %1616 = vrot.lane.b32.xlu0 %v1198, 118
  %v1617 = vpop.permute.xlu0 %1616
  %1618 = vrot.lane.b32.xlu0 %v1203, 118
  %v1619 = vpop.permute.xlu0 %1618
  %1620 = vrot.lane.b32.xlu0 %v1206, 118
  %v1621 = vpop.permute.xlu0 %1620
  %1622 = vrot.lane.b32.xlu0 %v1211, 118
  %v1623 = vpop.permute.xlu0 %1622
  %1624 = vrot.lane.b32.xlu0 %v1214, 118
  %v1625 = vpop.permute.xlu0 %1624
  %1634 = vrot.lane.b32.xlu0 %v1187, 114
  %v1635 = vpop.permute.xlu0 %1634
  %1636 = vrot.lane.b32.xlu0 %v1190, 114
  %v1637 = vpop.permute.xlu0 %1636
  %1638 = vrot.lane.b32.xlu0 %v1195, 114
  %v1639 = vpop.permute.xlu0 %1638
  %1640 = vrot.lane.b32.xlu0 %v1198, 114
  %v1641 = vpop.permute.xlu0 %1640
  %1642 = vrot.lane.b32.xlu0 %v1203, 114
  %v1643 = vpop.permute.xlu0 %1642
  %1644 = vrot.lane.b32.xlu0 %v1206, 114
  %v1645 = vpop.permute.xlu0 %1644
  %1646 = vrot.lane.b32.xlu0 %v1211, 114
  %v1647 = vpop.permute.xlu0 %1646
  %1648 = vrot.lane.b32.xlu0 %v1214, 114
  %v1649 = vpop.permute.xlu0 %1648
  %v1658 = vsel %vm1377, %v1611, %v1635
  %v1659 = vsel %vm1377, %v1613, %v1637
  %v1660 = vsel %vm1377, %v1615, %v1639
  %v1661 = vsel %vm1377, %v1617, %v1641
  %v1662 = vsel %vm1377, %v1619, %v1643
  %v1663 = vsel %vm1377, %v1621, %v1645
  %v1664 = vsel %vm1377, %v1623, %v1647
  %v1665 = vsel %vm1377, %v1625, %v1649
  %v1666 = vadd.f32 %v1594, %v1658
  %v1667 = vadd.f32 %v1595, %v1659
  %v1668 = vadd.f32 %v1596, %v1660
  %v1669 = vadd.f32 %v1597, %v1661
  %v1670 = vadd.f32 %v1598, %v1662
  %v1671 = vadd.f32 %v1599, %v1663
  %v1672 = vadd.f32 %v1600, %v1664
  %v1673 = vadd.f32 %v1601, %v1665
  %1682 = vrot.lane.b32.xlu0 %v1219, 116
  %v1683 = vpop.permute.xlu0 %1682
  %1684 = vrot.lane.b32.xlu0 %v1222, 116
  %v1685 = vpop.permute.xlu0 %1684
  %1686 = vrot.lane.b32.xlu0 %v1227, 116
  %v1687 = vpop.permute.xlu0 %1686
  %1688 = vrot.lane.b32.xlu0 %v1230, 116
  %v1689 = vpop.permute.xlu0 %1688
  %1690 = vrot.lane.b32.xlu0 %v1235, 116
  %v1691 = vpop.permute.xlu0 %1690
  %1692 = vrot.lane.b32.xlu0 %v1238, 116
  %v1693 = vpop.permute.xlu0 %1692
  %1694 = vrot.lane.b32.xlu0 %v1243, 116
  %v1695 = vpop.permute.xlu0 %1694
  %1696 = vrot.lane.b32.xlu0 %v1246, 116
  %v1697 = vpop.permute.xlu0 %1696
  %1706 = vrot.lane.b32.xlu0 %v1219, 112
  %v1707 = vpop.permute.xlu0 %1706
  %1708 = vrot.lane.b32.xlu0 %v1222, 112
  %v1709 = vpop.permute.xlu0 %1708
  %1710 = vrot.lane.b32.xlu0 %v1227, 112
  %v1711 = vpop.permute.xlu0 %1710
  %1712 = vrot.lane.b32.xlu0 %v1230, 112
  %v1713 = vpop.permute.xlu0 %1712
  %1714 = vrot.lane.b32.xlu0 %v1235, 112
  %v1715 = vpop.permute.xlu0 %1714
  %1716 = vrot.lane.b32.xlu0 %v1238, 112
  %v1717 = vpop.permute.xlu0 %1716
  %1718 = vrot.lane.b32.xlu0 %v1243, 112
  %v1719 = vpop.permute.xlu0 %1718
  %1720 = vrot.lane.b32.xlu0 %v1246, 112
  %v1721 = vpop.permute.xlu0 %1720
  %v1730 = vsel %vm1377, %v1683, %v1707
  %v1731 = vsel %vm1377, %v1685, %v1709
  %v1732 = vsel %vm1377, %v1687, %v1711
  %v1733 = vsel %vm1377, %v1689, %v1713
  %v1734 = vsel %vm1377, %v1691, %v1715
  %v1735 = vsel %vm1377, %v1693, %v1717
  %v1736 = vsel %vm1377, %v1695, %v1719
  %v1737 = vsel %vm1377, %v1697, %v1721
  %v1738 = vadd.f32 %v1666, %v1730
  %v1739 = vadd.f32 %v1667, %v1731
  %v1740 = vadd.f32 %v1668, %v1732
  %v1741 = vadd.f32 %v1669, %v1733
  %v1742 = vadd.f32 %v1670, %v1734
  %v1743 = vadd.f32 %v1671, %v1735
  %v1744 = vadd.f32 %v1672, %v1736
  %v1745 = vadd.f32 %v1673, %v1737
  %1754 = vrot.lane.b32.xlu0 %v1251, 112
  %v1755 = vpop.permute.xlu0 %1754
  %1756 = vrot.lane.b32.xlu0 %v1254, 112
  %v1757 = vpop.permute.xlu0 %1756
  %1758 = vrot.lane.b32.xlu0 %v1259, 112
  %v1759 = vpop.permute.xlu0 %1758
  %1760 = vrot.lane.b32.xlu0 %v1262, 112
  %v1761 = vpop.permute.xlu0 %1760
  %1762 = vrot.lane.b32.xlu0 %v1267, 112
  %v1763 = vpop.permute.xlu0 %1762
  %1764 = vrot.lane.b32.xlu0 %v1270, 112
  %v1765 = vpop.permute.xlu0 %1764
  %1766 = vrot.lane.b32.xlu0 %v1275, 112
  %v1767 = vpop.permute.xlu0 %1766
  %1768 = vrot.lane.b32.xlu0 %v1278, 112
  %v1769 = vpop.permute.xlu0 %1768
  %1778 = vrot.lane.b32.xlu0 %v1251, 108
  %v1779 = vpop.permute.xlu0 %1778
  %1780 = vrot.lane.b32.xlu0 %v1254, 108
  %v1781 = vpop.permute.xlu0 %1780
  %1782 = vrot.lane.b32.xlu0 %v1259, 108
  %v1783 = vpop.permute.xlu0 %1782
  %1784 = vrot.lane.b32.xlu0 %v1262, 108
  %v1785 = vpop.permute.xlu0 %1784
  %1786 = vrot.lane.b32.xlu0 %v1267, 108
  %v1787 = vpop.permute.xlu0 %1786
  %1788 = vrot.lane.b32.xlu0 %v1270, 108
  %v1789 = vpop.permute.xlu0 %1788
  %1790 = vrot.lane.b32.xlu0 %v1275, 108
  %v1791 = vpop.permute.xlu0 %1790
  %1792 = vrot.lane.b32.xlu0 %v1278, 108
  %v1793 = vpop.permute.xlu0 %1792
  %v1802 = vsel %vm1377, %v1755, %v1779
  %v1803 = vsel %vm1377, %v1757, %v1781
  %v1804 = vsel %vm1377, %v1759, %v1783
  %v1805 = vsel %vm1377, %v1761, %v1785
  %v1806 = vsel %vm1377, %v1763, %v1787
  %v1807 = vsel %vm1377, %v1765, %v1789
  %v1808 = vsel %vm1377, %v1767, %v1791
  %v1809 = vsel %vm1377, %v1769, %v1793
  %v1810 = vadd.f32 %v1738, %v1802
  %v1811 = vadd.f32 %v1739, %v1803
  %v1812 = vadd.f32 %v1740, %v1804
  %v1813 = vadd.f32 %v1741, %v1805
  %v1814 = vadd.f32 %v1742, %v1806
  %v1815 = vadd.f32 %v1743, %v1807
  %v1816 = vadd.f32 %v1744, %v1808
  %v1817 = vadd.f32 %v1745, %v1809
  %1826 = vrot.lane.b32.xlu0 %v1283, 110
  %v1827 = vpop.permute.xlu0 %1826
  %1828 = vrot.lane.b32.xlu0 %v1286, 110
  %v1829 = vpop.permute.xlu0 %1828
  %1830 = vrot.lane.b32.xlu0 %v1291, 110
  %v1831 = vpop.permute.xlu0 %1830
  %1832 = vrot.lane.b32.xlu0 %v1294, 110
  %v1833 = vpop.permute.xlu0 %1832
  %1834 = vrot.lane.b32.xlu0 %v1299, 110
  %v1835 = vpop.permute.xlu0 %1834
  %1836 = vrot.lane.b32.xlu0 %v1302, 110
  %v1837 = vpop.permute.xlu0 %1836
  %1838 = vrot.lane.b32.xlu0 %v1307, 110
  %v1839 = vpop.permute.xlu0 %1838
  %1840 = vrot.lane.b32.xlu0 %v1310, 110
  %v1841 = vpop.permute.xlu0 %1840
  %1850 = vrot.lane.b32.xlu0 %v1283, 106
  %v1851 = vpop.permute.xlu0 %1850
  %1852 = vrot.lane.b32.xlu0 %v1286, 106
  %v1853 = vpop.permute.xlu0 %1852
  %1854 = vrot.lane.b32.xlu0 %v1291, 106
  %v1855 = vpop.permute.xlu0 %1854
  %1856 = vrot.lane.b32.xlu0 %v1294, 106
  %v1857 = vpop.permute.xlu0 %1856
  %1858 = vrot.lane.b32.xlu0 %v1299, 106
  %v1859 = vpop.permute.xlu0 %1858
  %1860 = vrot.lane.b32.xlu0 %v1302, 106
  %v1861 = vpop.permute.xlu0 %1860
  %1862 = vrot.lane.b32.xlu0 %v1307, 106
  %v1863 = vpop.permute.xlu0 %1862
  %1864 = vrot.lane.b32.xlu0 %v1310, 106
  %v1865 = vpop.permute.xlu0 %1864
  %v1874 = vsel %vm1377, %v1827, %v1851
  %v1875 = vsel %vm1377, %v1829, %v1853
  %v1876 = vsel %vm1377, %v1831, %v1855
  %v1877 = vsel %vm1377, %v1833, %v1857
  %v1878 = vsel %vm1377, %v1835, %v1859
  %v1879 = vsel %vm1377, %v1837, %v1861
  %v1880 = vsel %vm1377, %v1839, %v1863
  %v1881 = vsel %vm1377, %v1841, %v1865
  %v1882 = vadd.f32 %v1810, %v1874
  %v1883 = vadd.f32 %v1811, %v1875
  %v1884 = vadd.f32 %v1812, %v1876
  %v1885 = vadd.f32 %v1813, %v1877
  %v1886 = vadd.f32 %v1814, %v1878
  %v1887 = vadd.f32 %v1815, %v1879
  %v1888 = vadd.f32 %v1816, %v1880
  %v1889 = vadd.f32 %v1817, %v1881
  %1898 = vrot.lane.b32.xlu0 %v1315, 108
  %v1899 = vpop.permute.xlu0 %1898
  %1900 = vrot.lane.b32.xlu0 %v1318, 108
  %v1901 = vpop.permute.xlu0 %1900
  %1902 = vrot.lane.b32.xlu0 %v1323, 108
  %v1903 = vpop.permute.xlu0 %1902
  %1904 = vrot.lane.b32.xlu0 %v1326, 108
  %v1905 = vpop.permute.xlu0 %1904
  %1906 = vrot.lane.b32.xlu0 %v1331, 108
  %v1907 = vpop.permute.xlu0 %1906
  %1908 = vrot.lane.b32.xlu0 %v1334, 108
  %v1909 = vpop.permute.xlu0 %1908
  %1910 = vrot.lane.b32.xlu0 %v1339, 108
  %v1911 = vpop.permute.xlu0 %1910
  %1912 = vrot.lane.b32.xlu0 %v1342, 108
  %v1913 = vpop.permute.xlu0 %1912
  %1922 = vrot.lane.b32.xlu0 %v1315, 104
  %v1923 = vpop.permute.xlu0 %1922
  %1924 = vrot.lane.b32.xlu0 %v1318, 104
  %v1925 = vpop.permute.xlu0 %1924
  %1926 = vrot.lane.b32.xlu0 %v1323, 104
  %v1927 = vpop.permute.xlu0 %1926
  %1928 = vrot.lane.b32.xlu0 %v1326, 104
  %v1929 = vpop.permute.xlu0 %1928
  %1930 = vrot.lane.b32.xlu0 %v1331, 104
  %v1931 = vpop.permute.xlu0 %1930
  %1932 = vrot.lane.b32.xlu0 %v1334, 104
  %v1933 = vpop.permute.xlu0 %1932
  %1934 = vrot.lane.b32.xlu0 %v1339, 104
  %v1935 = vpop.permute.xlu0 %1934
  %1936 = vrot.lane.b32.xlu0 %v1342, 104
  %v1937 = vpop.permute.xlu0 %1936
  %v1946 = vsel %vm1377, %v1899, %v1923
  %v1947 = vsel %vm1377, %v1901, %v1925
  %v1948 = vsel %vm1377, %v1903, %v1927
  %v1949 = vsel %vm1377, %v1905, %v1929
  %v1950 = vsel %vm1377, %v1907, %v1931
  %v1951 = vsel %vm1377, %v1909, %v1933
  %v1952 = vsel %vm1377, %v1911, %v1935
  %v1953 = vsel %vm1377, %v1913, %v1937
  %v1954 = vadd.f32 %v1882, %v1946
  %v1955 = vadd.f32 %v1883, %v1947
  %v1956 = vadd.f32 %v1884, %v1948
  %v1957 = vadd.f32 %v1885, %v1949
  %v1958 = vadd.f32 %v1886, %v1950
  %v1959 = vadd.f32 %v1887, %v1951
  %v1960 = vadd.f32 %v1888, %v1952
  %v1961 = vadd.f32 %v1889, %v1953
  %1970 = vrot.lane.b32.xlu0 %v1954, 126
  %v1971 = vpop.permute.xlu0 %1970
  %1972 = vrot.lane.b32.xlu0 %v1955, 126
  %v1973 = vpop.permute.xlu0 %1972
  %1974 = vrot.lane.b32.xlu0 %v1956, 126
  %v1975 = vpop.permute.xlu0 %1974
  %1976 = vrot.lane.b32.xlu0 %v1957, 126
  %v1977 = vpop.permute.xlu0 %1976
  %1978 = vrot.lane.b32.xlu0 %v1958, 126
  %v1979 = vpop.permute.xlu0 %1978
  %1980 = vrot.lane.b32.xlu0 %v1959, 126
  %v1981 = vpop.permute.xlu0 %1980
  %1982 = vrot.lane.b32.xlu0 %v1960, 126
  %v1983 = vpop.permute.xlu0 %1982
  %1984 = vrot.lane.b32.xlu0 %v1961, 126
  %v1985 = vpop.permute.xlu0 %1984
  %v1994 = vmax.f32 %v1954, %v1971
  %v1995 = vmax.f32 %v1955, %v1973
  %v1996 = vmax.f32 %v1956, %v1975
  %v1997 = vmax.f32 %v1957, %v1977
  %v1998 = vmax.f32 %v1958, %v1979
  %v1999 = vmax.f32 %v1959, %v1981
  %v2000 = vmax.f32 %v1960, %v1983
  %v2001 = vmax.f32 %v1961, %v1985
  %2010 = vrot.lane.b32.xlu0 %v1994, 124
  %v2011 = vpop.permute.xlu0 %2010
  %2012 = vrot.lane.b32.xlu0 %v1995, 124
  %v2013 = vpop.permute.xlu0 %2012
  %2014 = vrot.lane.b32.xlu0 %v1996, 124
  %v2015 = vpop.permute.xlu0 %2014
  %2016 = vrot.lane.b32.xlu0 %v1997, 124
  %v2017 = vpop.permute.xlu0 %2016
  %2018 = vrot.lane.b32.xlu0 %v1998, 124
  %v2019 = vpop.permute.xlu0 %2018
  %2020 = vrot.lane.b32.xlu0 %v1999, 124
  %v2021 = vpop.permute.xlu0 %2020
  %2022 = vrot.lane.b32.xlu0 %v2000, 124
  %v2023 = vpop.permute.xlu0 %2022
  %2024 = vrot.lane.b32.xlu0 %v2001, 124
  %v2025 = vpop.permute.xlu0 %2024
  %v2034 = vmax.f32 %v1994, %v2011
  %v2035 = vmax.f32 %v1995, %v2013
  %v2036 = vmax.f32 %v1996, %v2015
  %v2037 = vmax.f32 %v1997, %v2017
  %v2038 = vmax.f32 %v1998, %v2019
  %v2039 = vmax.f32 %v1999, %v2021
  %v2040 = vmax.f32 %v2000, %v2023
  %v2041 = vmax.f32 %v2001, %v2025
  %v2042 = vld [vmem:[%s4] sm:$0xff]
  %v2043 = vld [vmem:[%s4 + $0x8] sm:$0xff]
  %v2044 = vld [vmem:[%s4 + $0x10] sm:$0xff]
  %v2045 = vld [vmem:[%s4 + $0x18] sm:$0xff]
  %v2046 = vld [vmem:[%s4 + $0x20] sm:$0xff]
  %v2047 = vld [vmem:[%s4 + $0x28] sm:$0xff]
  %v2048 = vld [vmem:[%s4 + $0x30] sm:$0xff]
  %v2049 = vld [vmem:[%s4 + $0x38] sm:$0xff]
  %2051 = vset.pattern.permute.xlu0 0
  %2052 = vperm.xlu0 %2051, %v2042
  %v2053 = vpop.permute.xlu0 %2052
  %2056 = vset.pattern.permute.xlu0 0
  %2057 = vperm.xlu0 %2056, %v2043
  %v2058 = vpop.permute.xlu0 %2057
  %2061 = vset.pattern.permute.xlu0 0
  %2062 = vperm.xlu0 %2061, %v2044
  %v2063 = vpop.permute.xlu0 %2062
  %2066 = vset.pattern.permute.xlu0 0
  %2067 = vperm.xlu0 %2066, %v2045
  %v2068 = vpop.permute.xlu0 %2067
  %2071 = vset.pattern.permute.xlu0 0
  %2072 = vperm.xlu0 %2071, %v2046
  %v2073 = vpop.permute.xlu0 %2072
  %2076 = vset.pattern.permute.xlu0 0
  %2077 = vperm.xlu0 %2076, %v2047
  %v2078 = vpop.permute.xlu0 %2077
  %2081 = vset.pattern.permute.xlu0 0
  %2082 = vperm.xlu0 %2081, %v2048
  %v2083 = vpop.permute.xlu0 %2082
  %2086 = vset.pattern.permute.xlu0 0
  %2087 = vperm.xlu0 %2086, %v2049
  %v2088 = vpop.permute.xlu0 %2087
  %v2090 = vadd.f32 %v2034, %v2053
  %v2091 = vadd.f32 %v2035, %v2058
  %v2092 = vadd.f32 %v2036, %v2063
  %v2093 = vadd.f32 %v2037, %v2068
  %v2094 = vadd.f32 %v2038, %v2073
  %v2095 = vadd.f32 %v2039, %v2078
  %v2096 = vadd.f32 %v2040, %v2083
  %v2097 = vadd.f32 %v2041, %v2088
  %v2098 = vmax.f32 %v2090, 0.0
  %v2099 = vmax.f32 %v2091, 0.0
  %v2100 = vmax.f32 %v2092, 0.0
  %v2101 = vmax.f32 %v2093, 0.0
  %v2102 = vmax.f32 %v2094, 0.0
  %v2103 = vmax.f32 %v2095, 0.0
  %v2104 = vmax.f32 %v2096, 0.0
  %v2105 = vmax.f32 %v2097, 0.0
  %v2106 = vpack.c.bf16 %v2099, %v2098
  %v2107 = vpack.c.bf16 %v2101, %v2100
  %v2108 = vpack.c.bf16 %v2103, %v2102
  %v2109 = vpack.c.bf16 %v2105, %v2104
  %v2110 = vld [vmem:[%s5] sm:$0xf]
  %v2111 = vld [vmem:[%s5 + $0x4] sm:$0xf]
  %v2112 = vld [vmem:[%s5 + $0x8] sm:$0xf]
  %v2113 = vld [vmem:[%s5 + $0xc] sm:$0xf]
  %v2114 = vld [vmem:[%s5 + $0x10] sm:$0xf]
  %v2115 = vld [vmem:[%s5 + $0x14] sm:$0xf]
  %v2116 = vld [vmem:[%s5 + $0x18] sm:$0xf]
  %v2117 = vld [vmem:[%s5 + $0x1c] sm:$0xf]
  %v2118 = vld [vmem:[%s5 + $0x20] sm:$0xf]
  %v2119 = vld [vmem:[%s5 + $0x24] sm:$0xf]
  %v2120 = vld [vmem:[%s5 + $0x28] sm:$0xf]
  %v2121 = vld [vmem:[%s5 + $0x2c] sm:$0xf]
  %v2122 = vld [vmem:[%s5 + $0x30] sm:$0xf]
  %v2123 = vld [vmem:[%s5 + $0x34] sm:$0xf]
  %v2124 = vld [vmem:[%s5 + $0x38] sm:$0xf]
  %v2125 = vld [vmem:[%s5 + $0x3c] sm:$0xf]
  %v2126 = vld [vmem:[%s5 + $0x40] sm:$0xf]
  %v2127 = vld [vmem:[%s5 + $0x44] sm:$0xf]
  %v2128 = vld [vmem:[%s5 + $0x48] sm:$0xf]
  %v2129 = vld [vmem:[%s5 + $0x4c] sm:$0xf]
  %v2130 = vld [vmem:[%s5 + $0x50] sm:$0xf]
  %v2131 = vld [vmem:[%s5 + $0x54] sm:$0xf]
  %v2132 = vld [vmem:[%s5 + $0x58] sm:$0xf]
  %v2133 = vld [vmem:[%s5 + $0x5c] sm:$0xf]
  %v2134 = vld [vmem:[%s5 + $0x60] sm:$0xf]
  %v2135 = vld [vmem:[%s5 + $0x64] sm:$0xf]
  %v2136 = vld [vmem:[%s5 + $0x68] sm:$0xf]
  %v2137 = vld [vmem:[%s5 + $0x6c] sm:$0xf]
  %v2138 = vld [vmem:[%s5 + $0x70] sm:$0xf]
  %v2139 = vld [vmem:[%s5 + $0x74] sm:$0xf]
  %v2140 = vld [vmem:[%s5 + $0x78] sm:$0xf]
  %v2141 = vld [vmem:[%s5 + $0x7c] sm:$0xf]
  %v2142 = vld [vmem:[%s5 + $0x80] sm:$0xf]
  %v2143 = vld [vmem:[%s5 + $0x84] sm:$0xf]
  %v2144 = vld [vmem:[%s5 + $0x88] sm:$0xf]
  %v2145 = vld [vmem:[%s5 + $0x8c] sm:$0xf]
  %v2146 = vld [vmem:[%s5 + $0x90] sm:$0xf]
  %v2147 = vld [vmem:[%s5 + $0x94] sm:$0xf]
  %v2148 = vld [vmem:[%s5 + $0x98] sm:$0xf]
  %v2149 = vld [vmem:[%s5 + $0x9c] sm:$0xf]
  %v2150 = vld [vmem:[%s5 + $0xa0] sm:$0xf]
  %v2151 = vld [vmem:[%s5 + $0xa4] sm:$0xf]
  %v2152 = vld [vmem:[%s5 + $0xa8] sm:$0xf]
  %v2153 = vld [vmem:[%s5 + $0xac] sm:$0xf]
  %v2154 = vld [vmem:[%s5 + $0xb0] sm:$0xf]
  %v2155 = vld [vmem:[%s5 + $0xb4] sm:$0xf]
  %v2156 = vld [vmem:[%s5 + $0xb8] sm:$0xf]
  %v2157 = vld [vmem:[%s5 + $0xbc] sm:$0xf]
  %v2158 = vld [vmem:[%s5 + $0xc0] sm:$0xf]
  %v2159 = vld [vmem:[%s5 + $0xc4] sm:$0xf]
  %v2160 = vld [vmem:[%s5 + $0xc8] sm:$0xf]
  %v2161 = vld [vmem:[%s5 + $0xcc] sm:$0xf]
  %v2162 = vld [vmem:[%s5 + $0xd0] sm:$0xf]
  %v2163 = vld [vmem:[%s5 + $0xd4] sm:$0xf]
  %v2164 = vld [vmem:[%s5 + $0xd8] sm:$0xf]
  %v2165 = vld [vmem:[%s5 + $0xdc] sm:$0xf]
  %v2166 = vld [vmem:[%s5 + $0xe0] sm:$0xf]
  %v2167 = vld [vmem:[%s5 + $0xe4] sm:$0xf]
  %v2168 = vld [vmem:[%s5 + $0xe8] sm:$0xf]
  %v2169 = vld [vmem:[%s5 + $0xec] sm:$0xf]
  %v2170 = vld [vmem:[%s5 + $0xf0] sm:$0xf]
  %v2171 = vld [vmem:[%s5 + $0xf4] sm:$0xf]
  %v2172 = vld [vmem:[%s5 + $0xf8] sm:$0xf]
  %v2173 = vld [vmem:[%s5 + $0xfc] sm:$0xf]
  %v2174 = vld [vmem:[%s6] sm:$0xff]
  %v2175 = vld [vmem:[%s6 + $0x8] sm:$0xff]
  %v2176 = vld [vmem:[%s6 + $0x10] sm:$0xff]
  %v2177 = vld [vmem:[%s6 + $0x18] sm:$0xff]
  %v2178 = vld [vmem:[%s6 + $0x20] sm:$0xff]
  %v2179 = vld [vmem:[%s6 + $0x28] sm:$0xff]
  %v2180 = vld [vmem:[%s6 + $0x30] sm:$0xff]
  %v2181 = vld [vmem:[%s6 + $0x38] sm:$0xff]
  %v2182 = vld [vmem:[%s6 + $0x40] sm:$0xff]
  %v2183 = vld [vmem:[%s6 + $0x48] sm:$0xff]
  %v2184 = vld [vmem:[%s6 + $0x50] sm:$0xff]
  %v2185 = vld [vmem:[%s6 + $0x58] sm:$0xff]
  %v2186 = vld [vmem:[%s6 + $0x60] sm:$0xff]
  %v2187 = vld [vmem:[%s6 + $0x68] sm:$0xff]
  %v2188 = vld [vmem:[%s6 + $0x70] sm:$0xff]
  %v2189 = vld [vmem:[%s6 + $0x78] sm:$0xff]
  %v2190 = vld [vmem:[%s6 + $0x80] sm:$0xff]
  %v2191 = vld [vmem:[%s6 + $0x88] sm:$0xff]
  %v2192 = vld [vmem:[%s6 + $0x90] sm:$0xff]
  %v2193 = vld [vmem:[%s6 + $0x98] sm:$0xff]
  %v2194 = vld [vmem:[%s6 + $0xa0] sm:$0xff]
  %v2195 = vld [vmem:[%s6 + $0xa8] sm:$0xff]
  %v2196 = vld [vmem:[%s6 + $0xb0] sm:$0xff]
  %v2197 = vld [vmem:[%s6 + $0xb8] sm:$0xff]
  %v2198 = vld [vmem:[%s6 + $0xc0] sm:$0xff]
  %v2199 = vld [vmem:[%s6 + $0xc8] sm:$0xff]
  %v2200 = vld [vmem:[%s6 + $0xd0] sm:$0xff]
  %v2201 = vld [vmem:[%s6 + $0xd8] sm:$0xff]
  %v2202 = vld [vmem:[%s6 + $0xe0] sm:$0xff]
  %v2203 = vld [vmem:[%s6 + $0xe8] sm:$0xff]
  %v2204 = vld [vmem:[%s6 + $0xf0] sm:$0xff]
  %v2205 = vld [vmem:[%s6 + $0xf8] sm:$0xff]
  %v2206 = vld [vmem:[%s6 + $0x100] sm:$0xff]
  %v2207 = vld [vmem:[%s6 + $0x108] sm:$0xff]
  %v2208 = vld [vmem:[%s6 + $0x110] sm:$0xff]
  %v2209 = vld [vmem:[%s6 + $0x118] sm:$0xff]
  %v2210 = vld [vmem:[%s6 + $0x120] sm:$0xff]
  %v2211 = vld [vmem:[%s6 + $0x128] sm:$0xff]
  %v2212 = vld [vmem:[%s6 + $0x130] sm:$0xff]
  %v2213 = vld [vmem:[%s6 + $0x138] sm:$0xff]
  %v2214 = vld [vmem:[%s6 + $0x140] sm:$0xff]
  %v2215 = vld [vmem:[%s6 + $0x148] sm:$0xff]
  %v2216 = vld [vmem:[%s6 + $0x150] sm:$0xff]
  %v2217 = vld [vmem:[%s6 + $0x158] sm:$0xff]
  %v2218 = vld [vmem:[%s6 + $0x160] sm:$0xff]
  %v2219 = vld [vmem:[%s6 + $0x168] sm:$0xff]
  %v2220 = vld [vmem:[%s6 + $0x170] sm:$0xff]
  %v2221 = vld [vmem:[%s6 + $0x178] sm:$0xff]
  %v2222 = vld [vmem:[%s6 + $0x180] sm:$0xff]
  %v2223 = vld [vmem:[%s6 + $0x188] sm:$0xff]
  %v2224 = vld [vmem:[%s6 + $0x190] sm:$0xff]
  %v2225 = vld [vmem:[%s6 + $0x198] sm:$0xff]
  %v2226 = vld [vmem:[%s6 + $0x1a0] sm:$0xff]
  %v2227 = vld [vmem:[%s6 + $0x1a8] sm:$0xff]
  %v2228 = vld [vmem:[%s6 + $0x1b0] sm:$0xff]
  %v2229 = vld [vmem:[%s6 + $0x1b8] sm:$0xff]
  %v2230 = vld [vmem:[%s6 + $0x1c0] sm:$0xff]
  %v2231 = vld [vmem:[%s6 + $0x1c8] sm:$0xff]
  %v2232 = vld [vmem:[%s6 + $0x1d0] sm:$0xff]
  %v2233 = vld [vmem:[%s6 + $0x1d8] sm:$0xff]
  %v2234 = vld [vmem:[%s6 + $0x1e0] sm:$0xff]
  %v2235 = vld [vmem:[%s6 + $0x1e8] sm:$0xff]
  %v2236 = vld [vmem:[%s6 + $0x1f0] sm:$0xff]
  %v2237 = vld [vmem:[%s6 + $0x1f8] sm:$0xff]
  %2239 = vset.pattern.permute.xlu0 0
  %2240 = vperm.xlu0 %2239, %v2174
  %v2241 = vpop.permute.xlu0 %2240
  %2244 = vset.pattern.permute.xlu0 0
  %2245 = vperm.xlu0 %2244, %v2175
  %v2246 = vpop.permute.xlu0 %2245
  %2249 = vset.pattern.permute.xlu0 0
  %2250 = vperm.xlu0 %2249, %v2176
  %v2251 = vpop.permute.xlu0 %2250
  %2254 = vset.pattern.permute.xlu0 0
  %2255 = vperm.xlu0 %2254, %v2177
  %v2256 = vpop.permute.xlu0 %2255
  %2259 = vset.pattern.permute.xlu0 0
  %2260 = vperm.xlu0 %2259, %v2178
  %v2261 = vpop.permute.xlu0 %2260
  %2264 = vset.pattern.permute.xlu0 0
  %2265 = vperm.xlu0 %2264, %v2179
  %v2266 = vpop.permute.xlu0 %2265
  %2269 = vset.pattern.permute.xlu0 0
  %2270 = vperm.xlu0 %2269, %v2180
  %v2271 = vpop.permute.xlu0 %2270
  %2274 = vset.pattern.permute.xlu0 0
  %2275 = vperm.xlu0 %2274, %v2181
  %v2276 = vpop.permute.xlu0 %2275
  %2279 = vset.pattern.permute.xlu0 0
  %2280 = vperm.xlu0 %2279, %v2182
  %v2281 = vpop.permute.xlu0 %2280
  %2284 = vset.pattern.permute.xlu0 0
  %2285 = vperm.xlu0 %2284, %v2183
  %v2286 = vpop.permute.xlu0 %2285
  %2289 = vset.pattern.permute.xlu0 0
  %2290 = vperm.xlu0 %2289, %v2184
  %v2291 = vpop.permute.xlu0 %2290
  %2294 = vset.pattern.permute.xlu0 0
  %2295 = vperm.xlu0 %2294, %v2185
  %v2296 = vpop.permute.xlu0 %2295
  %2299 = vset.pattern.permute.xlu0 0
  %2300 = vperm.xlu0 %2299, %v2186
  %v2301 = vpop.permute.xlu0 %2300
  %2304 = vset.pattern.permute.xlu0 0
  %2305 = vperm.xlu0 %2304, %v2187
  %v2306 = vpop.permute.xlu0 %2305
  %2309 = vset.pattern.permute.xlu0 0
  %2310 = vperm.xlu0 %2309, %v2188
  %v2311 = vpop.permute.xlu0 %2310
  %2314 = vset.pattern.permute.xlu0 0
  %2315 = vperm.xlu0 %2314, %v2189
  %v2316 = vpop.permute.xlu0 %2315
  %2319 = vset.pattern.permute.xlu0 0
  %2320 = vperm.xlu0 %2319, %v2190
  %v2321 = vpop.permute.xlu0 %2320
  %2324 = vset.pattern.permute.xlu0 0
  %2325 = vperm.xlu0 %2324, %v2191
  %v2326 = vpop.permute.xlu0 %2325
  %2329 = vset.pattern.permute.xlu0 0
  %2330 = vperm.xlu0 %2329, %v2192
  %v2331 = vpop.permute.xlu0 %2330
  %2334 = vset.pattern.permute.xlu0 0
  %2335 = vperm.xlu0 %2334, %v2193
  %v2336 = vpop.permute.xlu0 %2335
  %2339 = vset.pattern.permute.xlu0 0
  %2340 = vperm.xlu0 %2339, %v2194
  %v2341 = vpop.permute.xlu0 %2340
  %2344 = vset.pattern.permute.xlu0 0
  %2345 = vperm.xlu0 %2344, %v2195
  %v2346 = vpop.permute.xlu0 %2345
  %2349 = vset.pattern.permute.xlu0 0
  %2350 = vperm.xlu0 %2349, %v2196
  %v2351 = vpop.permute.xlu0 %2350
  %2354 = vset.pattern.permute.xlu0 0
  %2355 = vperm.xlu0 %2354, %v2197
  %v2356 = vpop.permute.xlu0 %2355
  %2359 = vset.pattern.permute.xlu0 0
  %2360 = vperm.xlu0 %2359, %v2198
  %v2361 = vpop.permute.xlu0 %2360
  %2364 = vset.pattern.permute.xlu0 0
  %2365 = vperm.xlu0 %2364, %v2199
  %v2366 = vpop.permute.xlu0 %2365
  %2369 = vset.pattern.permute.xlu0 0
  %2370 = vperm.xlu0 %2369, %v2200
  %v2371 = vpop.permute.xlu0 %2370
  %2374 = vset.pattern.permute.xlu0 0
  %2375 = vperm.xlu0 %2374, %v2201
  %v2376 = vpop.permute.xlu0 %2375
  %2379 = vset.pattern.permute.xlu0 0
  %2380 = vperm.xlu0 %2379, %v2202
  %v2381 = vpop.permute.xlu0 %2380
  %2384 = vset.pattern.permute.xlu0 0
  %2385 = vperm.xlu0 %2384, %v2203
  %v2386 = vpop.permute.xlu0 %2385
  %2389 = vset.pattern.permute.xlu0 0
  %2390 = vperm.xlu0 %2389, %v2204
  %v2391 = vpop.permute.xlu0 %2390
  %2394 = vset.pattern.permute.xlu0 0
  %2395 = vperm.xlu0 %2394, %v2205
  %v2396 = vpop.permute.xlu0 %2395
  %2399 = vset.pattern.permute.xlu0 0
  %2400 = vperm.xlu0 %2399, %v2206
  %v2401 = vpop.permute.xlu0 %2400
  %2404 = vset.pattern.permute.xlu0 0
  %2405 = vperm.xlu0 %2404, %v2207
  %v2406 = vpop.permute.xlu0 %2405
  %2409 = vset.pattern.permute.xlu0 0
  %2410 = vperm.xlu0 %2409, %v2208
  %v2411 = vpop.permute.xlu0 %2410
  %2414 = vset.pattern.permute.xlu0 0
  %2415 = vperm.xlu0 %2414, %v2209
  %v2416 = vpop.permute.xlu0 %2415
  %2419 = vset.pattern.permute.xlu0 0
  %2420 = vperm.xlu0 %2419, %v2210
  %v2421 = vpop.permute.xlu0 %2420
  %2424 = vset.pattern.permute.xlu0 0
  %2425 = vperm.xlu0 %2424, %v2211
  %v2426 = vpop.permute.xlu0 %2425
  %2429 = vset.pattern.permute.xlu0 0
  %2430 = vperm.xlu0 %2429, %v2212
  %v2431 = vpop.permute.xlu0 %2430
  %2434 = vset.pattern.permute.xlu0 0
  %2435 = vperm.xlu0 %2434, %v2213
  %v2436 = vpop.permute.xlu0 %2435
  %2439 = vset.pattern.permute.xlu0 0
  %2440 = vperm.xlu0 %2439, %v2214
  %v2441 = vpop.permute.xlu0 %2440
  %2444 = vset.pattern.permute.xlu0 0
  %2445 = vperm.xlu0 %2444, %v2215
  %v2446 = vpop.permute.xlu0 %2445
  %2449 = vset.pattern.permute.xlu0 0
  %2450 = vperm.xlu0 %2449, %v2216
  %v2451 = vpop.permute.xlu0 %2450
  %2454 = vset.pattern.permute.xlu0 0
  %2455 = vperm.xlu0 %2454, %v2217
  %v2456 = vpop.permute.xlu0 %2455
  %2459 = vset.pattern.permute.xlu0 0
  %2460 = vperm.xlu0 %2459, %v2218
  %v2461 = vpop.permute.xlu0 %2460
  %2464 = vset.pattern.permute.xlu0 0
  %2465 = vperm.xlu0 %2464, %v2219
  %v2466 = vpop.permute.xlu0 %2465
  %2469 = vset.pattern.permute.xlu0 0
  %2470 = vperm.xlu0 %2469, %v2220
  %v2471 = vpop.permute.xlu0 %2470
  %2474 = vset.pattern.permute.xlu0 0
  %2475 = vperm.xlu0 %2474, %v2221
  %v2476 = vpop.permute.xlu0 %2475
  %2479 = vset.pattern.permute.xlu0 0
  %2480 = vperm.xlu0 %2479, %v2222
  %v2481 = vpop.permute.xlu0 %2480
  %2484 = vset.pattern.permute.xlu0 0
  %2485 = vperm.xlu0 %2484, %v2223
  %v2486 = vpop.permute.xlu0 %2485
  %2489 = vset.pattern.permute.xlu0 0
  %2490 = vperm.xlu0 %2489, %v2224
  %v2491 = vpop.permute.xlu0 %2490
  %2494 = vset.pattern.permute.xlu0 0
  %2495 = vperm.xlu0 %2494, %v2225
  %v2496 = vpop.permute.xlu0 %2495
  %2499 = vset.pattern.permute.xlu0 0
  %2500 = vperm.xlu0 %2499, %v2226
  %v2501 = vpop.permute.xlu0 %2500
  %2504 = vset.pattern.permute.xlu0 0
  %2505 = vperm.xlu0 %2504, %v2227
  %v2506 = vpop.permute.xlu0 %2505
  %2509 = vset.pattern.permute.xlu0 0
  %2510 = vperm.xlu0 %2509, %v2228
  %v2511 = vpop.permute.xlu0 %2510
  %2514 = vset.pattern.permute.xlu0 0
  %2515 = vperm.xlu0 %2514, %v2229
  %v2516 = vpop.permute.xlu0 %2515
  %2519 = vset.pattern.permute.xlu0 0
  %2520 = vperm.xlu0 %2519, %v2230
  %v2521 = vpop.permute.xlu0 %2520
  %2524 = vset.pattern.permute.xlu0 0
  %2525 = vperm.xlu0 %2524, %v2231
  %v2526 = vpop.permute.xlu0 %2525
  %2529 = vset.pattern.permute.xlu0 0
  %2530 = vperm.xlu0 %2529, %v2232
  %v2531 = vpop.permute.xlu0 %2530
  %2534 = vset.pattern.permute.xlu0 0
  %2535 = vperm.xlu0 %2534, %v2233
  %v2536 = vpop.permute.xlu0 %2535
  %2539 = vset.pattern.permute.xlu0 0
  %2540 = vperm.xlu0 %2539, %v2234
  %v2541 = vpop.permute.xlu0 %2540
  %2544 = vset.pattern.permute.xlu0 0
  %2545 = vperm.xlu0 %2544, %v2235
  %v2546 = vpop.permute.xlu0 %2545
  %2549 = vset.pattern.permute.xlu0 0
  %2550 = vperm.xlu0 %2549, %v2236
  %v2551 = vpop.permute.xlu0 %2550
  %2554 = vset.pattern.permute.xlu0 0
  %2555 = vperm.xlu0 %2554, %v2237
  %v2556 = vpop.permute.xlu0 %2555
  %v2622 = vunpack.c.l.b16 %v2110
  %v2623 = vunpack.c.l.b16 %v2111
  %v2624 = vunpack.c.l.b16 %v2112
  %v2625 = vunpack.c.l.b16 %v2113
  %v2626 = vunpack.c.l.b16 %v2114
  %v2627 = vunpack.c.l.b16 %v2115
  %v2628 = vunpack.c.l.b16 %v2116
  %v2629 = vunpack.c.l.b16 %v2117
  %v2630 = vunpack.c.l.b16 %v2118
  %v2631 = vunpack.c.l.b16 %v2119
  %v2632 = vunpack.c.l.b16 %v2120
  %v2633 = vunpack.c.l.b16 %v2121
  %v2634 = vunpack.c.l.b16 %v2122
  %v2635 = vunpack.c.l.b16 %v2123
  %v2636 = vunpack.c.l.b16 %v2124
  %v2637 = vunpack.c.l.b16 %v2125
  %v2638 = vunpack.c.l.b16 %v2126
  %v2639 = vunpack.c.l.b16 %v2127
  %v2640 = vunpack.c.l.b16 %v2128
  %v2641 = vunpack.c.l.b16 %v2129
  %v2642 = vunpack.c.l.b16 %v2130
  %v2643 = vunpack.c.l.b16 %v2131
  %v2644 = vunpack.c.l.b16 %v2132
  %v2645 = vunpack.c.l.b16 %v2133
  %v2646 = vunpack.c.l.b16 %v2134
  %v2647 = vunpack.c.l.b16 %v2135
  %v2648 = vunpack.c.l.b16 %v2136
  %v2649 = vunpack.c.l.b16 %v2137
  %v2650 = vunpack.c.l.b16 %v2138
  %v2651 = vunpack.c.l.b16 %v2139
  %v2652 = vunpack.c.l.b16 %v2140
  %v2653 = vunpack.c.l.b16 %v2141
  %v2654 = vunpack.c.l.b16 %v2142
  %v2655 = vunpack.c.l.b16 %v2143
  %v2656 = vunpack.c.l.b16 %v2144
  %v2657 = vunpack.c.l.b16 %v2145
  %v2658 = vunpack.c.l.b16 %v2146
  %v2659 = vunpack.c.l.b16 %v2147
  %v2660 = vunpack.c.l.b16 %v2148
  %v2661 = vunpack.c.l.b16 %v2149
  %v2662 = vunpack.c.l.b16 %v2150
  %v2663 = vunpack.c.l.b16 %v2151
  %v2664 = vunpack.c.l.b16 %v2152
  %v2665 = vunpack.c.l.b16 %v2153
  %v2666 = vunpack.c.l.b16 %v2154
  %v2667 = vunpack.c.l.b16 %v2155
  %v2668 = vunpack.c.l.b16 %v2156
  %v2669 = vunpack.c.l.b16 %v2157
  %v2670 = vunpack.c.l.b16 %v2158
  %v2671 = vunpack.c.l.b16 %v2159
  %v2672 = vunpack.c.l.b16 %v2160
  %v2673 = vunpack.c.l.b16 %v2161
  %v2674 = vunpack.c.l.b16 %v2162
  %v2675 = vunpack.c.l.b16 %v2163
  %v2676 = vunpack.c.l.b16 %v2164
  %v2677 = vunpack.c.l.b16 %v2165
  %v2678 = vunpack.c.l.b16 %v2166
  %v2679 = vunpack.c.l.b16 %v2167
  %v2680 = vunpack.c.l.b16 %v2168
  %v2681 = vunpack.c.l.b16 %v2169
  %v2682 = vunpack.c.l.b16 %v2170
  %v2683 = vunpack.c.l.b16 %v2171
  %v2684 = vunpack.c.l.b16 %v2172
  %v2685 = vunpack.c.l.b16 %v2173
  %v2686 = vpack.c.b16 %v2623, %v2622
  %v2687 = vpack.c.b16 %v2625, %v2624
  %v2688 = vpack.c.b16 %v2627, %v2626
  %v2689 = vpack.c.b16 %v2629, %v2628
  %v2690 = vpack.c.b16 %v2631, %v2630
  %v2691 = vpack.c.b16 %v2633, %v2632
  %v2692 = vpack.c.b16 %v2635, %v2634
  %v2693 = vpack.c.b16 %v2637, %v2636
  %v2694 = vpack.c.b16 %v2639, %v2638
  %v2695 = vpack.c.b16 %v2641, %v2640
  %v2696 = vpack.c.b16 %v2643, %v2642
  %v2697 = vpack.c.b16 %v2645, %v2644
  %v2698 = vpack.c.b16 %v2647, %v2646
  %v2699 = vpack.c.b16 %v2649, %v2648
  %v2700 = vpack.c.b16 %v2651, %v2650
  %v2701 = vpack.c.b16 %v2653, %v2652
  %v2702 = vpack.c.b16 %v2655, %v2654
  %v2703 = vpack.c.b16 %v2657, %v2656
  %v2704 = vpack.c.b16 %v2659, %v2658
  %v2705 = vpack.c.b16 %v2661, %v2660
  %v2706 = vpack.c.b16 %v2663, %v2662
  %v2707 = vpack.c.b16 %v2665, %v2664
  %v2708 = vpack.c.b16 %v2667, %v2666
  %v2709 = vpack.c.b16 %v2669, %v2668
  %v2710 = vpack.c.b16 %v2671, %v2670
  %v2711 = vpack.c.b16 %v2673, %v2672
  %v2712 = vpack.c.b16 %v2675, %v2674
  %v2713 = vpack.c.b16 %v2677, %v2676
  %v2714 = vpack.c.b16 %v2679, %v2678
  %v2715 = vpack.c.b16 %v2681, %v2680
  %v2716 = vpack.c.b16 %v2683, %v2682
  %v2717 = vpack.c.b16 %v2685, %v2684
  %v2719 = vsel %vm915, %v2686, 0
  %v2722 = vsel %vm915, %v2687, 0
  %v2725 = vsel %vm915, %v2688, 0
  %v2728 = vsel %vm915, %v2689, 0
  %v2731 = vsel %vm915, %v2690, 0
  %v2734 = vsel %vm915, %v2691, 0
  %v2737 = vsel %vm915, %v2692, 0
  %v2740 = vsel %vm915, %v2693, 0
  %v2743 = vsel %vm915, %v2694, 0
  %v2746 = vsel %vm915, %v2695, 0
  %v2749 = vsel %vm915, %v2696, 0
  %v2752 = vsel %vm915, %v2697, 0
  %v2755 = vsel %vm915, %v2698, 0
  %v2758 = vsel %vm915, %v2699, 0
  %v2761 = vsel %vm915, %v2700, 0
  %v2764 = vsel %vm915, %v2701, 0
  %v2767 = vsel %vm915, %v2702, 0
  %v2770 = vsel %vm915, %v2703, 0
  %v2773 = vsel %vm915, %v2704, 0
  %v2776 = vsel %vm915, %v2705, 0
  %v2779 = vsel %vm915, %v2706, 0
  %v2782 = vsel %vm915, %v2707, 0
  %v2785 = vsel %vm915, %v2708, 0
  %v2788 = vsel %vm915, %v2709, 0
  %v2791 = vsel %vm915, %v2710, 0
  %v2794 = vsel %vm915, %v2711, 0
  %v2797 = vsel %vm915, %v2712, 0
  %v2800 = vsel %vm915, %v2713, 0
  %v2803 = vsel %vm915, %v2714, 0
  %v2806 = vsel %vm915, %v2715, 0
  %v2809 = vsel %vm915, %v2716, 0
  %v2812 = vsel %vm915, %v2717, 0
  %2814 = vmatprep.subr.bf16.mxu0 0
  %2815 = vmatpush1.bf16.msra.mxu0 %v2106
  %2816 = vmatprep.subr.bf16.mxu0 0
  %2817 = vmatpush1.bf16.msra.mxu0 %v2107
  %2818 = vmatprep.subr.bf16.mxu0 0
  %2819 = vmatpush1.bf16.msra.mxu0 %v2108
  %2820 = vmatprep.subr.bf16.mxu0 0
  %2821 = vmatpush1.bf16.msra.mxu0 %v2109
  %2822 = vmatprep.subr.bf16.mxu0 0
  %2823 = vmatpush1.bf16.msra.mxu0 0
  %2824 = vmatprep.subr.bf16.mxu0 0
  %2825 = vmatpush1.bf16.msra.mxu0 0
  %2826 = vmatprep.subr.bf16.mxu0 0
  %2827 = vmatpush1.bf16.msra.mxu0 0
  %2828 = vmatprep.subr.bf16.mxu0 0
  %2829 = vmatpush1.bf16.msra.mxu0 0
  %2830 = vmatprep.subr.bf16.mxu0 0
  %2831 = vmatpush1.bf16.msra.mxu0 0
  %2832 = vmatprep.subr.bf16.mxu0 0
  %2833 = vmatpush1.bf16.msra.mxu0 0
  %2834 = vmatprep.subr.bf16.mxu0 0
  %2835 = vmatpush1.bf16.msra.mxu0 0
  %2836 = vmatprep.subr.bf16.mxu0 0
  %2837 = vmatpush1.bf16.msra.mxu0 0
  %2838 = vmatprep.subr.bf16.mxu0 0
  %2839 = vmatpush1.bf16.msra.mxu0 0
  %2840 = vmatprep.subr.bf16.mxu0 0
  %2841 = vmatpush1.bf16.msra.mxu0 0
  %2842 = vmatprep.subr.bf16.mxu0 0
  %2843 = vmatpush1.bf16.msra.mxu0 0
  %2844 = vmatprep.subr.bf16.mxu0 0
  %2845 = vmatpush1.bf16.msra.mxu0 0
  %2846 = vmatprep.mubr.bf16.mxu0 0
  %2847 = vmatmul.mubr.bf16.gmra.mrb[0].mxu0 %v2719
  %v2848 = vpop.f32.mrb[0].mxu0
  %v2849 = vadd.f32 %v2241, %v2848
  %v2850 = vpop.f32.mrb[0].mxu0
  %v2851 = vpop.f32.mrb[0].mxu0
  %v2852 = vadd.f32 %v2246, %v2851
  %v2853 = vpop.f32.mrb[0].mxu0
  %2854 = vmatprep.mubr.bf16.mxu0 0
  %2855 = vmatmul.mubr.bf16.gmra.mrb[0].mxu0 %v2722
  %v2856 = vpop.f32.mrb[0].mxu0
  %v2857 = vadd.f32 %v2251, %v2856
  %v2858 = vpop.f32.mrb[0].mxu0
  %v2859 = vpop.f32.mrb[0].mxu0
  %v2860 = vadd.f32 %v2256, %v2859
  %v2861 = vpop.f32.mrb[0].mxu0
  %2862 = vmatprep.mubr.bf16.mxu0 0
  %2863 = vmatmul.mubr.bf16.gmra.mrb[0].mxu0 %v2725
  %v2864 = vpop.f32.mrb[0].mxu0
  %v2865 = vadd.f32 %v2261, %v2864
  %v2866 = vpop.f32.mrb[0].mxu0
  %v2867 = vpop.f32.mrb[0].mxu0
  %v2868 = vadd.f32 %v2266, %v2867
  %v2869 = vpop.f32.mrb[0].mxu0
  %2870 = vmatprep.mubr.bf16.mxu0 0
  %2871 = vmatmul.mubr.bf16.gmra.mrb[0].mxu0 %v2728
  %v2872 = vpop.f32.mrb[0].mxu0
  %v2873 = vadd.f32 %v2271, %v2872
  %v2874 = vpop.f32.mrb[0].mxu0
  %v2875 = vpop.f32.mrb[0].mxu0
  %v2876 = vadd.f32 %v2276, %v2875
  %v2877 = vpop.f32.mrb[0].mxu0
  %2878 = vmatprep.mubr.bf16.mxu0 0
  %2879 = vmatmul.mubr.bf16.gmra.mrb[0].mxu0 %v2731
  %v2880 = vpop.f32.mrb[0].mxu0
  %v2881 = vadd.f32 %v2281, %v2880
  %v2882 = vpop.f32.mrb[0].mxu0
  %v2883 = vpop.f32.mrb[0].mxu0
  %v2884 = vadd.f32 %v2286, %v2883
  %v2885 = vpop.f32.mrb[0].mxu0
  %2886 = vmatprep.mubr.bf16.mxu0 0
  %2887 = vmatmul.mubr.bf16.gmra.mrb[0].mxu0 %v2734
  %v2888 = vpop.f32.mrb[0].mxu0
  %v2889 = vadd.f32 %v2291, %v2888
  %v2890 = vpop.f32.mrb[0].mxu0
  %v2891 = vpop.f32.mrb[0].mxu0
  %v2892 = vadd.f32 %v2296, %v2891
  %v2893 = vpop.f32.mrb[0].mxu0
  %2894 = vmatprep.mubr.bf16.mxu0 0
  %2895 = vmatmul.mubr.bf16.gmra.mrb[0].mxu0 %v2737
  %v2896 = vpop.f32.mrb[0].mxu0
  %v2897 = vadd.f32 %v2301, %v2896
  %v2898 = vpop.f32.mrb[0].mxu0
  %v2899 = vpop.f32.mrb[0].mxu0
  %v2900 = vadd.f32 %v2306, %v2899
  %v2901 = vpop.f32.mrb[0].mxu0
  %2902 = vmatprep.mubr.bf16.mxu0 0
  %2903 = vmatmul.mubr.bf16.gmra.mrb[0].mxu0 %v2740
  %v2904 = vpop.f32.mrb[0].mxu0
  %v2905 = vadd.f32 %v2311, %v2904
  %v2906 = vpop.f32.mrb[0].mxu0
  %v2907 = vpop.f32.mrb[0].mxu0
  %v2908 = vadd.f32 %v2316, %v2907
  %v2909 = vpop.f32.mrb[0].mxu0
  %2910 = vmatprep.mubr.bf16.mxu0 0
  %2911 = vmatmul.mubr.bf16.gmra.mrb[0].mxu0 %v2743
  %v2912 = vpop.f32.mrb[0].mxu0
  %v2913 = vadd.f32 %v2321, %v2912
  %v2914 = vpop.f32.mrb[0].mxu0
  %v2915 = vpop.f32.mrb[0].mxu0
  %v2916 = vadd.f32 %v2326, %v2915
  %v2917 = vpop.f32.mrb[0].mxu0
  %2918 = vmatprep.mubr.bf16.mxu0 0
  %2919 = vmatmul.mubr.bf16.gmra.mrb[0].mxu0 %v2746
  %v2920 = vpop.f32.mrb[0].mxu0
  %v2921 = vadd.f32 %v2331, %v2920
  %v2922 = vpop.f32.mrb[0].mxu0
  %v2923 = vpop.f32.mrb[0].mxu0
  %v2924 = vadd.f32 %v2336, %v2923
  %v2925 = vpop.f32.mrb[0].mxu0
  %2926 = vmatprep.mubr.bf16.mxu0 0
  %2927 = vmatmul.mubr.bf16.gmra.mrb[0].mxu0 %v2749
  %v2928 = vpop.f32.mrb[0].mxu0
  %v2929 = vadd.f32 %v2341, %v2928
  %v2930 = vpop.f32.mrb[0].mxu0
  %v2931 = vpop.f32.mrb[0].mxu0
  %v2932 = vadd.f32 %v2346, %v2931
  %v2933 = vpop.f32.mrb[0].mxu0
  %2934 = vmatprep.mubr.bf16.mxu0 0
  %2935 = vmatmul.mubr.bf16.gmra.mrb[0].mxu0 %v2752
  %v2936 = vpop.f32.mrb[0].mxu0
  %v2937 = vadd.f32 %v2351, %v2936
  %v2938 = vpop.f32.mrb[0].mxu0
  %v2939 = vpop.f32.mrb[0].mxu0
  %v2940 = vadd.f32 %v2356, %v2939
  %v2941 = vpop.f32.mrb[0].mxu0
  %2942 = vmatprep.mubr.bf16.mxu0 0
  %2943 = vmatmul.mubr.bf16.gmra.mrb[0].mxu0 %v2755
  %v2944 = vpop.f32.mrb[0].mxu0
  %v2945 = vadd.f32 %v2361, %v2944
  %v2946 = vpop.f32.mrb[0].mxu0
  %v2947 = vpop.f32.mrb[0].mxu0
  %v2948 = vadd.f32 %v2366, %v2947
  %v2949 = vpop.f32.mrb[0].mxu0
  %2950 = vmatprep.mubr.bf16.mxu0 0
  %2951 = vmatmul.mubr.bf16.gmra.mrb[0].mxu0 %v2758
  %v2952 = vpop.f32.mrb[0].mxu0
  %v2953 = vadd.f32 %v2371, %v2952
  %v2954 = vpop.f32.mrb[0].mxu0
  %v2955 = vpop.f32.mrb[0].mxu0
  %v2956 = vadd.f32 %v2376, %v2955
  %v2957 = vpop.f32.mrb[0].mxu0
  %2958 = vmatprep.mubr.bf16.mxu0 0
  %2959 = vmatmul.mubr.bf16.gmra.mrb[0].mxu0 %v2761
  %v2960 = vpop.f32.mrb[0].mxu0
  %v2961 = vadd.f32 %v2381, %v2960
  %v2962 = vpop.f32.mrb[0].mxu0
  %v2963 = vpop.f32.mrb[0].mxu0
  %v2964 = vadd.f32 %v2386, %v2963
  %v2965 = vpop.f32.mrb[0].mxu0
  %2966 = vmatprep.mubr.bf16.mxu0 0
  %2967 = vmatmul.mubr.bf16.gmra.mrb[0].mxu0 %v2764
  %v2968 = vpop.f32.mrb[0].mxu0
  %v2969 = vadd.f32 %v2391, %v2968
  %v2970 = vpop.f32.mrb[0].mxu0
  %v2971 = vpop.f32.mrb[0].mxu0
  %v2972 = vadd.f32 %v2396, %v2971
  %v2973 = vpop.f32.mrb[0].mxu0
  %2974 = vmatprep.mubr.bf16.mxu0 0
  %2975 = vmatmul.mubr.bf16.gmra.mrb[0].mxu0 %v2767
  %v2976 = vpop.f32.mrb[0].mxu0
  %v2977 = vadd.f32 %v2401, %v2976
  %v2978 = vpop.f32.mrb[0].mxu0
  %v2979 = vpop.f32.mrb[0].mxu0
  %v2980 = vadd.f32 %v2406, %v2979
  %v2981 = vpop.f32.mrb[0].mxu0
  %2982 = vmatprep.mubr.bf16.mxu0 0
  %2983 = vmatmul.mubr.bf16.gmra.mrb[0].mxu0 %v2770
  %v2984 = vpop.f32.mrb[0].mxu0
  %v2985 = vadd.f32 %v2411, %v2984
  %v2986 = vpop.f32.mrb[0].mxu0
  %v2987 = vpop.f32.mrb[0].mxu0
  %v2988 = vadd.f32 %v2416, %v2987
  %v2989 = vpop.f32.mrb[0].mxu0
  %2990 = vmatprep.mubr.bf16.mxu0 0
  %2991 = vmatmul.mubr.bf16.gmra.mrb[0].mxu0 %v2773
  %v2992 = vpop.f32.mrb[0].mxu0
  %v2993 = vadd.f32 %v2421, %v2992
  %v2994 = vpop.f32.mrb[0].mxu0
  %v2995 = vpop.f32.mrb[0].mxu0
  %v2996 = vadd.f32 %v2426, %v2995
  %v2997 = vpop.f32.mrb[0].mxu0
  %2998 = vmatprep.mubr.bf16.mxu0 0
  %2999 = vmatmul.mubr.bf16.gmra.mrb[0].mxu0 %v2776
  %v3000 = vpop.f32.mrb[0].mxu0
  %v3001 = vadd.f32 %v2431, %v3000
  %v3002 = vpop.f32.mrb[0].mxu0
  %v3003 = vpop.f32.mrb[0].mxu0
  %v3004 = vadd.f32 %v2436, %v3003
  %v3005 = vpop.f32.mrb[0].mxu0
  %3006 = vmatprep.mubr.bf16.mxu0 0
  %3007 = vmatmul.mubr.bf16.gmra.mrb[0].mxu0 %v2779
  %v3008 = vpop.f32.mrb[0].mxu0
  %v3009 = vadd.f32 %v2441, %v3008
  %v3010 = vpop.f32.mrb[0].mxu0
  %v3011 = vpop.f32.mrb[0].mxu0
  %v3012 = vadd.f32 %v2446, %v3011
  %v3013 = vpop.f32.mrb[0].mxu0
  %3014 = vmatprep.mubr.bf16.mxu0 0
  %3015 = vmatmul.mubr.bf16.gmra.mrb[0].mxu0 %v2782
  %v3016 = vpop.f32.mrb[0].mxu0
  %v3017 = vadd.f32 %v2451, %v3016
  %v3018 = vpop.f32.mrb[0].mxu0
  %v3019 = vpop.f32.mrb[0].mxu0
  %v3020 = vadd.f32 %v2456, %v3019
  %v3021 = vpop.f32.mrb[0].mxu0
  %3022 = vmatprep.mubr.bf16.mxu0 0
  %3023 = vmatmul.mubr.bf16.gmra.mrb[0].mxu0 %v2785
  %v3024 = vpop.f32.mrb[0].mxu0
  %v3025 = vadd.f32 %v2461, %v3024
  %v3026 = vpop.f32.mrb[0].mxu0
  %v3027 = vpop.f32.mrb[0].mxu0
  %v3028 = vadd.f32 %v2466, %v3027
  %v3029 = vpop.f32.mrb[0].mxu0
  %3030 = vmatprep.mubr.bf16.mxu0 0
  %3031 = vmatmul.mubr.bf16.gmra.mrb[0].mxu0 %v2788
  %v3032 = vpop.f32.mrb[0].mxu0
  %v3033 = vadd.f32 %v2471, %v3032
  %v3034 = vpop.f32.mrb[0].mxu0
  %v3035 = vpop.f32.mrb[0].mxu0
  %v3036 = vadd.f32 %v2476, %v3035
  %v3037 = vpop.f32.mrb[0].mxu0
  %3038 = vmatprep.mubr.bf16.mxu0 0
  %3039 = vmatmul.mubr.bf16.gmra.mrb[0].mxu0 %v2791
  %v3040 = vpop.f32.mrb[0].mxu0
  %v3041 = vadd.f32 %v2481, %v3040
  %v3042 = vpop.f32.mrb[0].mxu0
  %v3043 = vpop.f32.mrb[0].mxu0
  %v3044 = vadd.f32 %v2486, %v3043
  %v3045 = vpop.f32.mrb[0].mxu0
  %3046 = vmatprep.mubr.bf16.mxu0 0
  %3047 = vmatmul.mubr.bf16.gmra.mrb[0].mxu0 %v2794
  %v3048 = vpop.f32.mrb[0].mxu0
  %v3049 = vadd.f32 %v2491, %v3048
  %v3050 = vpop.f32.mrb[0].mxu0
  %v3051 = vpop.f32.mrb[0].mxu0
  %v3052 = vadd.f32 %v2496, %v3051
  %v3053 = vpop.f32.mrb[0].mxu0
  %3054 = vmatprep.mubr.bf16.mxu0 0
  %3055 = vmatmul.mubr.bf16.gmra.mrb[0].mxu0 %v2797
  %v3056 = vpop.f32.mrb[0].mxu0
  %v3057 = vadd.f32 %v2501, %v3056
  %v3058 = vpop.f32.mrb[0].mxu0
  %v3059 = vpop.f32.mrb[0].mxu0
  %v3060 = vadd.f32 %v2506, %v3059
  %v3061 = vpop.f32.mrb[0].mxu0
  %3062 = vmatprep.mubr.bf16.mxu0 0
  %3063 = vmatmul.mubr.bf16.gmra.mrb[0].mxu0 %v2800
  %v3064 = vpop.f32.mrb[0].mxu0
  %v3065 = vadd.f32 %v2511, %v3064
  %v3066 = vpop.f32.mrb[0].mxu0
  %v3067 = vpop.f32.mrb[0].mxu0
  %v3068 = vadd.f32 %v2516, %v3067
  %v3069 = vpop.f32.mrb[0].mxu0
  %3070 = vmatprep.mubr.bf16.mxu0 0
  %3071 = vmatmul.mubr.bf16.gmra.mrb[0].mxu0 %v2803
  %v3072 = vpop.f32.mrb[0].mxu0
  %v3073 = vadd.f32 %v2521, %v3072
  %v3074 = vpop.f32.mrb[0].mxu0
  %v3075 = vpop.f32.mrb[0].mxu0
  %v3076 = vadd.f32 %v2526, %v3075
  %v3077 = vpop.f32.mrb[0].mxu0
  %3078 = vmatprep.mubr.bf16.mxu0 0
  %3079 = vmatmul.mubr.bf16.gmra.mrb[0].mxu0 %v2806
  %v3080 = vpop.f32.mrb[0].mxu0
  %v3081 = vadd.f32 %v2531, %v3080
  %v3082 = vpop.f32.mrb[0].mxu0
  %v3083 = vpop.f32.mrb[0].mxu0
  %v3084 = vadd.f32 %v2536, %v3083
  %v3085 = vpop.f32.mrb[0].mxu0
  %3086 = vmatprep.mubr.bf16.mxu0 0
  %3087 = vmatmul.mubr.bf16.gmra.mrb[0].mxu0 %v2809
  %v3088 = vpop.f32.mrb[0].mxu0
  %v3089 = vadd.f32 %v2541, %v3088
  %v3090 = vpop.f32.mrb[0].mxu0
  %v3091 = vpop.f32.mrb[0].mxu0
  %v3092 = vadd.f32 %v2546, %v3091
  %v3093 = vpop.f32.mrb[0].mxu0
  %3094 = vmatprep.mubr.bf16.mxu0 0
  %3095 = vmatmul.mubr.bf16.gmra.mrb[0].mxu0 %v2812
  %v3096 = vpop.f32.mrb[0].mxu0
  %v3097 = vadd.f32 %v2551, %v3096
  %v3098 = vpop.f32.mrb[0].mxu0
  %v3099 = vpop.f32.mrb[0].mxu0
  %v3100 = vadd.f32 %v2556, %v3099
  %v3101 = vpop.f32.mrb[0].mxu0
  %3102 = vdwg.mxu0
  %v3103 = vmax.f32 %v2849, 0.0
  %v3104 = vmax.f32 %v2852, 0.0
  %v3105 = vmax.f32 %v2857, 0.0
  %v3106 = vmax.f32 %v2860, 0.0
  %v3107 = vmax.f32 %v2865, 0.0
  %v3108 = vmax.f32 %v2868, 0.0
  %v3109 = vmax.f32 %v2873, 0.0
  %v3110 = vmax.f32 %v2876, 0.0
  %v3111 = vmax.f32 %v2881, 0.0
  %v3112 = vmax.f32 %v2884, 0.0
  %v3113 = vmax.f32 %v2889, 0.0
  %v3114 = vmax.f32 %v2892, 0.0
  %v3115 = vmax.f32 %v2897, 0.0
  %v3116 = vmax.f32 %v2900, 0.0
  %v3117 = vmax.f32 %v2905, 0.0
  %v3118 = vmax.f32 %v2908, 0.0
  %v3119 = vmax.f32 %v2913, 0.0
  %v3120 = vmax.f32 %v2916, 0.0
  %v3121 = vmax.f32 %v2921, 0.0
  %v3122 = vmax.f32 %v2924, 0.0
  %v3123 = vmax.f32 %v2929, 0.0
  %v3124 = vmax.f32 %v2932, 0.0
  %v3125 = vmax.f32 %v2937, 0.0
  %v3126 = vmax.f32 %v2940, 0.0
  %v3127 = vmax.f32 %v2945, 0.0
  %v3128 = vmax.f32 %v2948, 0.0
  %v3129 = vmax.f32 %v2953, 0.0
  %v3130 = vmax.f32 %v2956, 0.0
  %v3131 = vmax.f32 %v2961, 0.0
  %v3132 = vmax.f32 %v2964, 0.0
  %v3133 = vmax.f32 %v2969, 0.0
  %v3134 = vmax.f32 %v2972, 0.0
  %v3135 = vmax.f32 %v2977, 0.0
  %v3136 = vmax.f32 %v2980, 0.0
  %v3137 = vmax.f32 %v2985, 0.0
  %v3138 = vmax.f32 %v2988, 0.0
  %v3139 = vmax.f32 %v2993, 0.0
  %v3140 = vmax.f32 %v2996, 0.0
  %v3141 = vmax.f32 %v3001, 0.0
  %v3142 = vmax.f32 %v3004, 0.0
  %v3143 = vmax.f32 %v3009, 0.0
  %v3144 = vmax.f32 %v3012, 0.0
  %v3145 = vmax.f32 %v3017, 0.0
  %v3146 = vmax.f32 %v3020, 0.0
  %v3147 = vmax.f32 %v3025, 0.0
  %v3148 = vmax.f32 %v3028, 0.0
  %v3149 = vmax.f32 %v3033, 0.0
  %v3150 = vmax.f32 %v3036, 0.0
  %v3151 = vmax.f32 %v3041, 0.0
  %v3152 = vmax.f32 %v3044, 0.0
  %v3153 = vmax.f32 %v3049, 0.0
  %v3154 = vmax.f32 %v3052, 0.0
  %v3155 = vmax.f32 %v3057, 0.0
  %v3156 = vmax.f32 %v3060, 0.0
  %v3157 = vmax.f32 %v3065, 0.0
  %v3158 = vmax.f32 %v3068, 0.0
  %v3159 = vmax.f32 %v3073, 0.0
  %v3160 = vmax.f32 %v3076, 0.0
  %v3161 = vmax.f32 %v3081, 0.0
  %v3162 = vmax.f32 %v3084, 0.0
  %v3163 = vmax.f32 %v3089, 0.0
  %v3164 = vmax.f32 %v3092, 0.0
  %v3165 = vmax.f32 %v3097, 0.0
  %v3166 = vmax.f32 %v3100, 0.0
  %v3167 = vpack.c.bf16 %v3104, %v3103
  %v3168 = vpack.c.bf16 %v3106, %v3105
  %v3169 = vpack.c.bf16 %v3108, %v3107
  %v3170 = vpack.c.bf16 %v3110, %v3109
  %v3171 = vpack.c.bf16 %v3112, %v3111
  %v3172 = vpack.c.bf16 %v3114, %v3113
  %v3173 = vpack.c.bf16 %v3116, %v3115
  %v3174 = vpack.c.bf16 %v3118, %v3117
  %v3175 = vpack.c.bf16 %v3120, %v3119
  %v3176 = vpack.c.bf16 %v3122, %v3121
  %v3177 = vpack.c.bf16 %v3124, %v3123
  %v3178 = vpack.c.bf16 %v3126, %v3125
  %v3179 = vpack.c.bf16 %v3128, %v3127
  %v3180 = vpack.c.bf16 %v3130, %v3129
  %v3181 = vpack.c.bf16 %v3132, %v3131
  %v3182 = vpack.c.bf16 %v3134, %v3133
  %v3183 = vpack.c.bf16 %v3136, %v3135
  %v3184 = vpack.c.bf16 %v3138, %v3137
  %v3185 = vpack.c.bf16 %v3140, %v3139
  %v3186 = vpack.c.bf16 %v3142, %v3141
  %v3187 = vpack.c.bf16 %v3144, %v3143
  %v3188 = vpack.c.bf16 %v3146, %v3145
  %v3189 = vpack.c.bf16 %v3148, %v3147
  %v3190 = vpack.c.bf16 %v3150, %v3149
  %v3191 = vpack.c.bf16 %v3152, %v3151
  %v3192 = vpack.c.bf16 %v3154, %v3153
  %v3193 = vpack.c.bf16 %v3156, %v3155
  %v3194 = vpack.c.bf16 %v3158, %v3157
  %v3195 = vpack.c.bf16 %v3160, %v3159
  %v3196 = vpack.c.bf16 %v3162, %v3161
  %v3197 = vpack.c.bf16 %v3164, %v3163
  %v3198 = vpack.c.bf16 %v3166, %v3165
  %v3199 = vld [vmem:[%s7] sm:$0x77]
  %v3200 = vld [vmem:[%s7 + $0x8] sm:$0x77]
  %v3201 = vld [vmem:[%s8] sm:$0x3f]
  %3203 = vset.pattern.permute.xlu0 0
  %3204 = vperm.xlu0 %3203, %v3201
  %v3205 = vpop.permute.xlu0 %3204
  %v3209 = vunpack.c.l.b16 %v3199
  %v3210 = vunpack.c.h.b16 %v3199
  %v3211 = vunpack.c.l.b16 %v3200
  %v3212 = vunpack.c.h.b16 %v3200
  %v3213 = vpack.c.b16 %v3209, %v3209
  %v3214 = vpack.c.b16 %v3210, %v3210
  %v3215 = vpack.c.b16 %v3211, %v3211
  %v3216 = vpack.c.b16 %v3212, %v3212
  %3221 = vmatprep.subr.bf16.mxu0 0
  %3222 = vmatpush1.bf16.msra.mxu0 %v3167
  %3223 = vmatprep.subr.bf16.mxu0 0
  %3224 = vmatpush1.bf16.msra.mxu0 %v3168
  %3225 = vmatprep.subr.bf16.mxu0 0
  %3226 = vmatpush1.bf16.msra.mxu0 %v3169
  %3227 = vmatprep.subr.bf16.mxu0 0
  %3228 = vmatpush1.bf16.msra.mxu0 %v3170
  %3229 = vmatprep.subr.bf16.mxu0 0
  %3230 = vmatpush1.bf16.msra.mxu0 %v3171
  %3231 = vmatprep.subr.bf16.mxu0 0
  %3232 = vmatpush1.bf16.msra.mxu0 %v3172
  %3233 = vmatprep.subr.bf16.mxu0 0
  %3234 = vmatpush1.bf16.msra.mxu0 %v3173
  %3235 = vmatprep.subr.bf16.mxu0 0
  %3236 = vmatpush1.bf16.msra.mxu0 %v3174
  %3237 = vmatprep.subr.bf16.mxu0 0
  %3238 = vmatpush1.bf16.msra.mxu0 %v3175
  %3239 = vmatprep.subr.bf16.mxu0 0
  %3240 = vmatpush1.bf16.msra.mxu0 %v3176
  %3241 = vmatprep.subr.bf16.mxu0 0
  %3242 = vmatpush1.bf16.msra.mxu0 %v3177
  %3243 = vmatprep.subr.bf16.mxu0 0
  %3244 = vmatpush1.bf16.msra.mxu0 %v3178
  %3245 = vmatprep.subr.bf16.mxu0 0
  %3246 = vmatpush1.bf16.msra.mxu0 %v3179
  %3247 = vmatprep.subr.bf16.mxu0 0
  %3248 = vmatpush1.bf16.msra.mxu0 %v3180
  %3249 = vmatprep.subr.bf16.mxu0 0
  %3250 = vmatpush1.bf16.msra.mxu0 %v3181
  %3251 = vmatprep.subr.bf16.mxu0 0
  %3252 = vmatpush1.bf16.msra.mxu0 %v3182
  %3253 = vmatprep.mubr.bf16.mxu0 %v3214
  %3254 = vmatmul.mubr.bf16.gmra.mrb[0].mxu0 %v3213
  %v3255 = vpop.f32.mrb[0].mxu0
  %v3256 = vadd.f32 %v3205, %v3255
  %v3257 = vpop.f32.mrb[0].mxu0
  %v3258 = vpop.f32.mrb[0].mxu0
  %v3259 = vpop.f32.mrb[0].mxu0
  %3260 = vdwg.mxu0
  %3261 = vmatprep.subr.bf16.mxu0 0
  %3262 = vmatpush1.bf16.msra.mxu0 %v3183
  %3263 = vmatprep.subr.bf16.mxu0 0
  %3264 = vmatpush1.bf16.msra.mxu0 %v3184
  %3265 = vmatprep.subr.bf16.mxu0 0
  %3266 = vmatpush1.bf16.msra.mxu0 %v3185
  %3267 = vmatprep.subr.bf16.mxu0 0
  %3268 = vmatpush1.bf16.msra.mxu0 %v3186
  %3269 = vmatprep.subr.bf16.mxu0 0
  %3270 = vmatpush1.bf16.msra.mxu0 %v3187
  %3271 = vmatprep.subr.bf16.mxu0 0
  %3272 = vmatpush1.bf16.msra.mxu0 %v3188
  %3273 = vmatprep.subr.bf16.mxu0 0
  %3274 = vmatpush1.bf16.msra.mxu0 %v3189
  %3275 = vmatprep.subr.bf16.mxu0 0
  %3276 = vmatpush1.bf16.msra.mxu0 %v3190
  %3277 = vmatprep.subr.bf16.mxu0 0
  %3278 = vmatpush1.bf16.msra.mxu0 %v3191
  %3279 = vmatprep.subr.bf16.mxu0 0
  %3280 = vmatpush1.bf16.msra.mxu0 %v3192
  %3281 = vmatprep.subr.bf16.mxu0 0
  %3282 = vmatpush1.bf16.msra.mxu0 %v3193
  %3283 = vmatprep.subr.bf16.mxu0 0
  %3284 = vmatpush1.bf16.msra.mxu0 %v3194
  %3285 = vmatprep.subr.bf16.mxu0 0
  %3286 = vmatpush1.bf16.msra.mxu0 %v3195
  %3287 = vmatprep.subr.bf16.mxu0 0
  %3288 = vmatpush1.bf16.msra.mxu0 %v3196
  %3289 = vmatprep.subr.bf16.mxu0 0
  %3290 = vmatpush1.bf16.msra.mxu0 %v3197
  %3291 = vmatprep.subr.bf16.mxu0 0
  %3292 = vmatpush1.bf16.msra.mxu0 %v3198
  %3293 = vmatprep.mubr.bf16.mxu0 %v3216
  %3294 = vmatmul.mubr.bf16.gmra.mrb[0].mxu0 %v3215
  %v3295 = vpop.f32.mrb[0].mxu0
  %v3296 = vadd.f32 %v3256, %v3295
  %v3297 = vpop.f32.mrb[0].mxu0
  %v3298 = vpop.f32.mrb[0].mxu0
  %v3299 = vpop.f32.mrb[0].mxu0
  %3300 = vdwg.mxu0
  %v3301 = vlaneseq
  %v3302 = vshrl.u32 %v3301, 7
  %v3303 = vsub.s32 0, %v3302
  %v3304 = vrot.slane %v3296, %v3303
  %v3305 = vadd.f32 %v3304, %v3296
  %v3307 = vrot.slane %v3296, 1
  %vm3309 = vcmask 12288
  %v3310 = vsel %vm3309, %v3307, 0.0
  %v3311 = vrot.slane %v3310, 4
  %v3312 = vadd.f32 %v3310, %v3311
  %v3313 = vrot.slane %v3312, 2
  %v3314 = vadd.f32 %v3312, %v3313
  %v3315 = vrot.slane %v3314, 1
  %v3316 = vadd.f32 %v3314, %v3315
  %v3317 = vrcp.pop 5.0
  %v3318 = vmul.f32 %v3316, %v3317
  %v3319 = vsub.f32 %v3305, %v3318
  %vm3320 = vcmask 13313
  %3321 = vst.msk [vmem:[%s9 - $0x1] sm:$0x3e] %vm3320, %v3319
  // Predicated region
  $region38: #{dueling_ddqn_forward.3} parent=0 // pred_check
    _
  $region39: #{dueling_ddqn_forward.3} parent=0 // pred_check_branch
    %3323 = sbr.rel (0) target = $region41
  $region40: #{dueling_ddqn_forward.3} parent=0 // pred_region
    _
  $region41: #{dueling_ddqn_forward.3} parent=0 // pred_fallthru
    _
  // Predicated region
  $region42: #{dueling_ddqn_forward.3} parent=0 // pred_check
    _
  $region43: #{dueling_ddqn_forward.3} parent=0 // pred_check_branch
    %3325 = sbr.rel (0) target = $region45
  $region44: #{dueling_ddqn_forward.3} parent=0 // pred_region
    _
  $region45: #{dueling_ddqn_forward.3} parent=0 // pred_fallthru
    _

</llo_original>
